<compile_context>
chip_gen: v7x
topology: tpu7x:2x2x1
jax: 0.10.0
libtpu: 0.0.40
codegen_flags: <defaults>
</compile_context>

<pallas_src>
import functools

import jax
import jax.numpy as jnp
from jax.experimental import pallas as pl
from jax.experimental.pallas import tpu as pltpu

_KPAD = 8  # input / output feature rows padded 3 -> 8 (one sublane tile)


def _round_up(n, m):
    return -(-n // m) * m


def _mlp_kernel(xt_ref,
                w1_ref, b1_ref,
                w2_ref, b2_ref,
                w3_ref, b3_ref,
                w4_ref, b4_ref,
                o_ref,
                *, mxu_dtype, approx_sigmoid):
    # All operands are (features, batch_tile) slabs: batch on the lane axis.
    xt = xt_ref[...]                                        # (8, TB) f32

    # layer 1: (256, 8) @ (8, TB) on the MXU; K is tiny, keep f32 operands so
    # the input colors are not rounded to bf16 before the first layer.
    h = jnp.dot(w1_ref[...], xt,
                preferred_element_type=jnp.float32)         # (256, TB)
    h = jnp.maximum(h + b1_ref[...], 0.0)

    # layer 2: (128, 256) @ (256, TB), bf16 operands / f32 accumulate.
    h = jnp.dot(w2_ref[...], h.astype(mxu_dtype),
                preferred_element_type=jnp.float32)         # (128, TB)
    h = jnp.maximum(h + b2_ref[...], 0.0)

    # layer 3 (out 64 zero-padded to 128; padding is free on the MXU).
    h = jnp.dot(w3_ref[...], h.astype(mxu_dtype),
                preferred_element_type=jnp.float32)         # (128, TB)
    h = jnp.maximum(h + b3_ref[...], 0.0)

    # layer 4 (out 3 zero-padded to 8 rows).
    y = jnp.dot(w4_ref[...], h.astype(mxu_dtype),
                preferred_element_type=jnp.float32)         # (8, TB)
    y = y + b4_ref[...]

    # sigmoid: exp on the EUP + (approx) reciprocal; lane-dense (8, TB) store.
    o_ref[...] = pl.reciprocal(1.0 + jnp.exp(-y), approx=approx_sigmoid)


def _prepare_params(params, use_bf16):
    """Transpose weights to (out, in), zero-pad 3->8 / 64->128, cast MXU dtypes."""
    mxu_dtype = jnp.bfloat16 if use_bf16 else jnp.float32
    f32 = jnp.float32
    w1 = jnp.pad(params["w1"].astype(f32).T, ((0, 0), (0, _KPAD - 3)))        # (256, 8)
    b1 = params["b1"].astype(f32).T                                           # (256, 1)
    w2 = params["w2"].T.astype(mxu_dtype)                                     # (128, 256)
    b2 = params["b2"].astype(f32).T                                           # (128, 1)
    w3 = jnp.pad(params["w3"].T, ((0, 64), (0, 0))).astype(mxu_dtype)         # (128, 128)
    b3 = jnp.pad(params["b3"].astype(f32).T, ((0, 64), (0, 0)))               # (128, 1)
    w4 = jnp.pad(params["w4"].T, ((0, _KPAD - 3), (0, 64))).astype(mxu_dtype)  # (8, 128)
    b4 = jnp.pad(params["b4"].astype(f32).T, ((0, _KPAD - 3), (0, 0)))        # (8, 1)
    return (w1, b1, w2, b2, w3, b3, w4, b4), mxu_dtype


def color_generator_forward(x, params, *, batch_tile=2048, use_bf16=True,
                            approx_sigmoid=True,
                            vmem_limit_bytes=32 * 1024 * 1024):
    """x: (B, 3) float32. params: dict of w1..w4 (in,out) and b1..b4 (1,out)."""
    B, F = x.shape
    assert F == 3
    (w1, b1, w2, b2, w3, b3, w4, b4), mxu_dtype = _prepare_params(params, use_bf16)

    # Generation-aware tiling: no forced minimum tile count (only v7x has two
    # TensorCores; there, prefer an even num_tiles at large B).  For small
    # batches shrink the tile to a 128-lane multiple so padded work stays small.
    eff_tile = max(128, min(batch_tile, _round_up(B, 128)))
    num_tiles = -(-B // eff_tile)
    B_pad = num_tiles * eff_tile

    # Transposed, K-padded input: (8, B_pad); rows 3..7 and cols B.. are zero.
    xt = jnp.pad(x.astype(jnp.float32).T, ((0, _KPAD - 3), (0, B_pad - B)))

    def full_spec(a):
        # Whole-array block, constant index map (weights/biases stay resident).
        return pl.BlockSpec(a.shape, lambda i, _nd=a.ndim: (0,) * _nd)

    kernel = functools.partial(_mlp_kernel,
                               mxu_dtype=mxu_dtype,
                               approx_sigmoid=approx_sigmoid)

    out_t = pl.pallas_call(
        kernel,
        out_shape=jax.ShapeDtypeStruct((_KPAD, B_pad), jnp.float32),
        grid_spec=pltpu.PrefetchScalarGridSpec(
            num_scalar_prefetch=0,
            grid=(num_tiles,),
            in_specs=[
                pl.BlockSpec((_KPAD, eff_tile), lambda i: (0, i)),  # x^T tile
                full_spec(w1), full_spec(b1),
                full_spec(w2), full_spec(b2),
                full_spec(w3), full_spec(b3),
                full_spec(w4), full_spec(b4),
            ],
            out_specs=pl.BlockSpec((_KPAD, eff_tile), lambda i: (0, i)),
        ),
        compiler_params=pltpu.CompilerParams(
            dimension_semantics=("parallel",),
            vmem_limit_bytes=vmem_limit_bytes),
    )(xt, w1, b1, w2, b2, w3, b3, w4, b4)

    return out_t[:3, :B].T


def init_params(key):
    """Deterministic init matching nn.Linear shapes (weights stored (in,out))."""
    sizes = [(3, 256), (256, 128), (128, 64), (64, 3)]
    params = {}
    for idx, (fan_in, fan_out) in enumerate(sizes, start=1):
        key, kw, kb = jax.random.split(key, 3)
        bound = 1.0 / jnp.sqrt(fan_in)  # PyTorch default U(-1/sqrt(in), 1/sqrt(in))
        params[f"w{idx}"] = jax.random.uniform(
            kw, (fan_in, fan_out), jnp.float32, -bound, bound)
        params[f"b{idx}"] = jax.random.uniform(
            kb, (1, fan_out), jnp.float32, -bound, bound)
    return params


def _reference_forward(x, params):
    hp = jax.lax.Precision.HIGHEST
    h = jnp.maximum(jnp.dot(x, params["w1"], precision=hp) + params["b1"], 0.0)
    h = jnp.maximum(jnp.dot(h, params["w2"], precision=hp) + params["b2"], 0.0)
    h = jnp.maximum(jnp.dot(h, params["w3"], precision=hp) + params["b3"], 0.0)
    return jax.nn.sigmoid(jnp.dot(h, params["w4"], precision=hp) + params["b4"])


if __name__ == "__main__":
    key = jax.random.PRNGKey(0)
    k_params, k_x = jax.random.split(key)

    params = init_params(k_params)
    B = 777  # non-multiple batch; wrapper pads/slices internally
    x = jax.random.uniform(k_x, (B, 3), jnp.float32)  # RGB-like inputs in [0,1)

    ref = _reference_forward(x, params)

    # f32-operand path (accuracy config).
    out_f32 = color_generator_forward(x, params, use_bf16=False)
    out_f32 = jax.block_until_ready(out_f32)
    assert out_f32.shape == (B, 3)
    assert jnp.allclose(out_f32, ref, atol=1e-2, rtol=0.0), \
        float(jnp.max(jnp.abs(out_f32 - ref)))

    # bf16-operand path (default perf config on v5e/v6e/v7x).
    out_bf16 = color_generator_forward(x, params, use_bf16=True)
    out_bf16 = jax.block_until_ready(out_bf16)
    assert out_bf16.shape == (B, 3)
    assert jnp.allclose(out_bf16, ref, atol=3e-2, rtol=0.0), \
        float(jnp.max(jnp.abs(out_bf16 - ref)))

    # Tiny batch exercises the shrink-to-128-lane tile path (no forced 2 tiles).
    out_small = jax.block_until_ready(color_generator_forward(x[:5], params))
    assert out_small.shape == (5, 3)
    assert jnp.allclose(out_small, ref[:5], atol=3e-2, rtol=0.0)

    print("KERNEL_OK")
</pallas_src>

<mosaic_0001>
module attributes {stable_mosaic.version = 11 : i64} {
  func.func @_mlp_kernel(%arg0: i32, %arg1: memref<8x896xf32, #tpu.memory_space<vmem>>, %arg2: memref<256x8xf32, #tpu.memory_space<vmem>>, %arg3: memref<256x1xf32, #tpu.memory_space<vmem>>, %arg4: memref<128x256xf32, #tpu.memory_space<vmem>>, %arg5: memref<128x1xf32, #tpu.memory_space<vmem>>, %arg6: memref<128x128xf32, #tpu.memory_space<vmem>>, %arg7: memref<128x1xf32, #tpu.memory_space<vmem>>, %arg8: memref<8x128xf32, #tpu.memory_space<vmem>>, %arg9: memref<8x1xf32, #tpu.memory_space<vmem>>, %arg10: memref<8x896xf32, #tpu.memory_space<vmem>>) attributes {dimension_semantics = [#tpu.dimension_semantics<parallel>], iteration_bounds = array<i64: 1>, scalar_prefetch = 0 : i64, scratch_operands = 0 : i64, tpu.core_type = #tpu.core_type<tc>, window_params = [{transform_indices = @transform_0, window_bounds = array<i64: 8, 896>}, {pipeline_mode = #tpu.pipeline_mode<synchronous>, transform_indices = @transform_1, window_bounds = array<i64: 256, 8>}, {pipeline_mode = #tpu.pipeline_mode<synchronous>, transform_indices = @transform_2, window_bounds = array<i64: 256, 1>}, {pipeline_mode = #tpu.pipeline_mode<synchronous>, transform_indices = @transform_3, window_bounds = array<i64: 128, 256>}, {pipeline_mode = #tpu.pipeline_mode<synchronous>, transform_indices = @transform_4, window_bounds = array<i64: 128, 1>}, {pipeline_mode = #tpu.pipeline_mode<synchronous>, transform_indices = @transform_5, window_bounds = array<i64: 128, 128>}, {pipeline_mode = #tpu.pipeline_mode<synchronous>, transform_indices = @transform_6, window_bounds = array<i64: 128, 1>}, {pipeline_mode = #tpu.pipeline_mode<synchronous>, transform_indices = @transform_7, window_bounds = array<i64: 8, 128>}, {pipeline_mode = #tpu.pipeline_mode<synchronous>, transform_indices = @transform_8, window_bounds = array<i64: 8, 1>}, {transform_indices = @transform_9, window_bounds = array<i64: 8, 896>}]} {
    %c0 = arith.constant 0 : index
    %c0_0 = arith.constant 0 : index
    %0 = vector.load %arg1[%c0, %c0_0] : memref<8x896xf32, #tpu.memory_space<vmem>>, vector<8x896xf32>
    %c0_1 = arith.constant 0 : index
    %c0_2 = arith.constant 0 : index
    %1 = vector.load %arg2[%c0_1, %c0_2] : memref<256x8xf32, #tpu.memory_space<vmem>>, vector<256x8xf32>
    %cst = arith.constant dense<0.000000e+00> : vector<256x896xf32>
    %2 = tpu.matmul %1, %0, %cst {dimension_numbers = #tpu.dot_dimension_numbers<[1], [0], [0], [1], [0, 0, 1, 1], [], []>} : vector<256x8xf32>, vector<8x896xf32>, vector<256x896xf32> -> vector<256x896xf32>
    %c0_3 = arith.constant 0 : index
    %c0_4 = arith.constant 0 : index
    %3 = vector.load %arg3[%c0_3, %c0_4] : memref<256x1xf32, #tpu.memory_space<vmem>>, vector<256x1xf32>
    %4 = vector.broadcast %3 : vector<256x1xf32> to vector<256x896xf32>
    %5 = arith.addf %2, %4 : vector<256x896xf32>
    %cst_5 = arith.constant 0.000000e+00 : f32
    %6 = vector.broadcast %cst_5 : f32 to vector<256x896xf32>
    %7 = arith.maximumf %5, %6 : vector<256x896xf32>
    %c0_6 = arith.constant 0 : index
    %c0_7 = arith.constant 0 : index
    %8 = vector.load %arg4[%c0_6, %c0_7] : memref<128x256xf32, #tpu.memory_space<vmem>>, vector<128x256xf32>
    %cst_8 = arith.constant dense<0.000000e+00> : vector<128x896xf32>
    %9 = tpu.matmul %8, %7, %cst_8 {dimension_numbers = #tpu.dot_dimension_numbers<[1], [0], [0], [1], [0, 0, 1, 1], [], []>} : vector<128x256xf32>, vector<256x896xf32>, vector<128x896xf32> -> vector<128x896xf32>
    %c0_9 = arith.constant 0 : index
    %c0_10 = arith.constant 0 : index
    %10 = vector.load %arg5[%c0_9, %c0_10] : memref<128x1xf32, #tpu.memory_space<vmem>>, vector<128x1xf32>
    %11 = vector.broadcast %10 : vector<128x1xf32> to vector<128x896xf32>
    %12 = arith.addf %9, %11 : vector<128x896xf32>
    %cst_11 = arith.constant 0.000000e+00 : f32
    %13 = vector.broadcast %cst_11 : f32 to vector<128x896xf32>
    %14 = arith.maximumf %12, %13 : vector<128x896xf32>
    %c0_12 = arith.constant 0 : index
    %c0_13 = arith.constant 0 : index
    %15 = vector.load %arg6[%c0_12, %c0_13] : memref<128x128xf32, #tpu.memory_space<vmem>>, vector<128x128xf32>
    %cst_14 = arith.constant dense<0.000000e+00> : vector<128x896xf32>
    %16 = tpu.matmul %15, %14, %cst_14 {dimension_numbers = #tpu.dot_dimension_numbers<[1], [0], [0], [1], [0, 0, 1, 1], [], []>} : vector<128x128xf32>, vector<128x896xf32>, vector<128x896xf32> -> vector<128x896xf32>
    %c0_15 = arith.constant 0 : index
    %c0_16 = arith.constant 0 : index
    %17 = vector.load %arg7[%c0_15, %c0_16] : memref<128x1xf32, #tpu.memory_space<vmem>>, vector<128x1xf32>
    %18 = vector.broadcast %17 : vector<128x1xf32> to vector<128x896xf32>
    %19 = arith.addf %16, %18 : vector<128x896xf32>
    %cst_17 = arith.constant 0.000000e+00 : f32
    %20 = vector.broadcast %cst_17 : f32 to vector<128x896xf32>
    %21 = arith.maximumf %19, %20 : vector<128x896xf32>
    %c0_18 = arith.constant 0 : index
    %c0_19 = arith.constant 0 : index
    %22 = vector.load %arg8[%c0_18, %c0_19] : memref<8x128xf32, #tpu.memory_space<vmem>>, vector<8x128xf32>
    %cst_20 = arith.constant dense<0.000000e+00> : vector<8x896xf32>
    %23 = tpu.matmul %22, %21, %cst_20 {dimension_numbers = #tpu.dot_dimension_numbers<[1], [0], [0], [1], [0, 0, 1, 1], [], []>} : vector<8x128xf32>, vector<128x896xf32>, vector<8x896xf32> -> vector<8x896xf32>
    %c0_21 = arith.constant 0 : index
    %c0_22 = arith.constant 0 : index
    %24 = vector.load %arg9[%c0_21, %c0_22] : memref<8x1xf32, #tpu.memory_space<vmem>>, vector<8x1xf32>
    %25 = vector.broadcast %24 : vector<8x1xf32> to vector<8x896xf32>
    %26 = arith.addf %23, %25 : vector<8x896xf32>
    %cst_23 = arith.constant 0.000000e+00 : f32
    %27 = vector.broadcast %cst_23 : f32 to vector<8x896xf32>
    %28 = arith.subf %27, %26 : vector<8x896xf32>
    %29 = math.exp %28 : vector<8x896xf32>
    %cst_24 = arith.constant 1.000000e+00 : f32
    %30 = vector.broadcast %cst_24 : f32 to vector<8x896xf32>
    %31 = arith.addf %30, %29 : vector<8x896xf32>
    %32 = tpu.reciprocal %31 {approx = true} : vector<8x896xf32> -> vector<8x896xf32>
    %c0_25 = arith.constant 0 : index
    %c0_26 = arith.constant 0 : index
    %33 = vector.load %arg10[%c0_25, %c0_26] : memref<8x896xf32, #tpu.memory_space<vmem>>, vector<8x896xf32>
    tpu.vector_store %arg10[%c0_25, %c0_26], %32 {strides = array<i32>} : memref<8x896xf32, #tpu.memory_space<vmem>>, vector<8x896xf32>,
    return
  }
  func.func @transform_0(%arg0: i32) -> (i32, i32) {
    %c0_i32 = arith.constant 0 : i32
    %c0_i32_0 = arith.constant 0 : i32
    return %c0_i32, %arg0 : i32, i32
  }
  func.func @transform_1(%arg0: i32) -> (i32, i32) {
    %c0_i32 = arith.constant 0 : i32
    %c0_i32_0 = arith.constant 0 : i32
    %c0_i32_1 = arith.constant 0 : i32
    return %c0_i32, %c0_i32_0 : i32, i32
  }
  func.func @transform_2(%arg0: i32) -> (i32, i32) {
    %c0_i32 = arith.constant 0 : i32
    %c0_i32_0 = arith.constant 0 : i32
    %c0_i32_1 = arith.constant 0 : i32
    return %c0_i32, %c0_i32_0 : i32, i32
  }
  func.func @transform_3(%arg0: i32) -> (i32, i32) {
    %c0_i32 = arith.constant 0 : i32
    %c0_i32_0 = arith.constant 0 : i32
    %c0_i32_1 = arith.constant 0 : i32
    return %c0_i32, %c0_i32_0 : i32, i32
  }
  func.func @transform_4(%arg0: i32) -> (i32, i32) {
    %c0_i32 = arith.constant 0 : i32
    %c0_i32_0 = arith.constant 0 : i32
    %c0_i32_1 = arith.constant 0 : i32
    return %c0_i32, %c0_i32_0 : i32, i32
  }
  func.func @transform_5(%arg0: i32) -> (i32, i32) {
    %c0_i32 = arith.constant 0 : i32
    %c0_i32_0 = arith.constant 0 : i32
    %c0_i32_1 = arith.constant 0 : i32
    return %c0_i32, %c0_i32_0 : i32, i32
  }
  func.func @transform_6(%arg0: i32) -> (i32, i32) {
    %c0_i32 = arith.constant 0 : i32
    %c0_i32_0 = arith.constant 0 : i32
    %c0_i32_1 = arith.constant 0 : i32
    return %c0_i32, %c0_i32_0 : i32, i32
  }
  func.func @transform_7(%arg0: i32) -> (i32, i32) {
    %c0_i32 = arith.constant 0 : i32
    %c0_i32_0 = arith.constant 0 : i32
    %c0_i32_1 = arith.constant 0 : i32
    return %c0_i32, %c0_i32_0 : i32, i32
  }
  func.func @transform_8(%arg0: i32) -> (i32, i32) {
    %c0_i32 = arith.constant 0 : i32
    %c0_i32_0 = arith.constant 0 : i32
    %c0_i32_1 = arith.constant 0 : i32
    return %c0_i32, %c0_i32_0 : i32, i32
  }
  func.func @transform_9(%arg0: i32) -> (i32, i32) {
    %c0_i32 = arith.constant 0 : i32
    %c0_i32_0 = arith.constant 0 : i32
    return %c0_i32, %arg0 : i32, i32
  }
}

</mosaic_0001>

<llo_original>
// kernel: tpu_custom_call.1
$region0: #{tpu_custom_call.1}
  #allocation0 [shape = 'u32[]', space=smem, size = 0x4, offset = 0x4, fixed_abs, tag = 'smem constant byte address 0x4 - core index']
  #allocation1 [shape = 'u32[144,128]{1,0:T(1,128)}', space=vmem, size = 0x12000, scoped, tag = 'internal scratch']
  %s0 = inlined_call_operand.vmem [shape: f32[8,896], index: 0, kind: input, shape index: {}]
  %s1 = inlined_call_operand.vmem [shape: f32[256,8], index: 1, kind: input, shape index: {}]
  %s2 = inlined_call_operand.vmem [shape: f32[256,1], index: 2, kind: input, shape index: {}]
  %s3 = inlined_call_operand.vmem [shape: f32[128,256], index: 3, kind: input, shape index: {}]
  %s4 = inlined_call_operand.vmem [shape: f32[128,1], index: 4, kind: input, shape index: {}]
  %s5 = inlined_call_operand.vmem [shape: f32[128,128], index: 5, kind: input, shape index: {}]
  %s6 = inlined_call_operand.vmem [shape: f32[128,1], index: 6, kind: input, shape index: {}]
  %s7 = inlined_call_operand.vmem [shape: f32[8,128], index: 7, kind: input, shape index: {}]
  %s8 = inlined_call_operand.vmem [shape: f32[8,1], index: 8, kind: input, shape index: {}]
  %s9 = inlined_call_operand.hbm [shape: f32[8,896], index: 9, kind: output, shape index: {}]
  %s10 = sld [smem:[#allocation0]]
  $region46: #{tpu_custom_call.1} parent=0
    _
  %s12 = ssub.s32 1, %s10
  %s13 = scalar_select 0, %s12, %s10
  $region1: #{tpu_custom_call.1} parent=0
    #allocation2 [shape = 'u8[28672]{0}', space=vmem, size = 0x7000, scoped, tag = 'output window, operand 0, single buffered']
    #allocation3 [shape = 's32[1]{0}', space=sflag, size = 0x4, scoped, tag = 'scoped memory for tpu_custom_call.1']
    %14 = vsyncpa [#allocation3], 0
    // Predicated region
    $region2: #{tpu_custom_call.1} parent=1 // pred_check
      _
    $region3: #{tpu_custom_call.1} parent=1 // pred_check_branch
      %16 = sbr.rel (0) target = $region5
    $region4: #{tpu_custom_call.1} parent=1 // pred_region
      _
    $region5: #{tpu_custom_call.1} parent=1 // pred_fallthru
      _
    // Predicated region
    $region6: #{tpu_custom_call.1} parent=1 // pred_check
      _
    $region7: #{tpu_custom_call.1} parent=1 // pred_check_branch
      %18 = sbr.rel (0) target = $region9
    $region8: #{tpu_custom_call.1} parent=1 // pred_region
      _
    $region9: #{tpu_custom_call.1} parent=1 // pred_fallthru
      _
    // Predicated region
    $region10: #{tpu_custom_call.1} parent=1 // pred_check
      _
    $region11: #{tpu_custom_call.1} parent=1 // pred_check_branch
      %20 = sbr.rel (0) target = $region13
    $region12: #{tpu_custom_call.1} parent=1 // pred_region
      _
    $region13: #{tpu_custom_call.1} parent=1 // pred_fallthru
      _
    // Predicated region
    $region14: #{tpu_custom_call.1} parent=1 // pred_check
      _
    $region15: #{tpu_custom_call.1} parent=1 // pred_check_branch
      %22 = sbr.rel (0) target = $region17
    $region16: #{tpu_custom_call.1} parent=1 // pred_region
      _
    $region17: #{tpu_custom_call.1} parent=1 // pred_fallthru
      _
    // Predicated region
    $region18: #{tpu_custom_call.1} parent=1 // pred_check
      _
    $region19: #{tpu_custom_call.1} parent=1 // pred_check_branch
      %24 = sbr.rel (0) target = $region21
    $region20: #{tpu_custom_call.1} parent=1 // pred_region
      _
    $region21: #{tpu_custom_call.1} parent=1 // pred_fallthru
      _
    // Predicated region
    $region22: #{tpu_custom_call.1} parent=1 // pred_check
      _
    $region23: #{tpu_custom_call.1} parent=1 // pred_check_branch
      %26 = sbr.rel (0) target = $region25
    $region24: #{tpu_custom_call.1} parent=1 // pred_region
      _
    $region25: #{tpu_custom_call.1} parent=1 // pred_fallthru
      _
    // Predicated region
    $region26: #{tpu_custom_call.1} parent=1 // pred_check
      _
    $region27: #{tpu_custom_call.1} parent=1 // pred_check_branch
      %28 = sbr.rel (0) target = $region29
    $region28: #{tpu_custom_call.1} parent=1 // pred_region
      _
    $region29: #{tpu_custom_call.1} parent=1 // pred_fallthru
      _
    // Predicated region
    $region30: #{tpu_custom_call.1} parent=1 // pred_check
      _
    $region31: #{tpu_custom_call.1} parent=1 // pred_check_branch
      %30 = sbr.rel (0) target = $region33
    $region32: #{tpu_custom_call.1} parent=1 // pred_region
      _
    $region33: #{tpu_custom_call.1} parent=1 // pred_fallthru
      _
    // Predicated region
    $region34: #{tpu_custom_call.1} parent=1 // pred_check
      _
    $region35: #{tpu_custom_call.1} parent=1 // pred_check_branch
      %32 = sbr.rel (0) target = $region37
    $region36: #{tpu_custom_call.1} parent=1 // pred_region
      _
    $region37: #{tpu_custom_call.1} parent=1 // pred_fallthru
      _
    %v33 = vld [vmem:[%s0] sm:$0xff]
    %v34 = vld [vmem:[%s0 + $0x8] sm:$0xff]
    %v35 = vld [vmem:[%s0 + $0x10] sm:$0xff]
    %v36 = vld [vmem:[%s0 + $0x18] sm:$0xff]
    %v37 = vld [vmem:[%s0 + $0x20] sm:$0xff]
    %v38 = vld [vmem:[%s0 + $0x28] sm:$0xff]
    %v39 = vld [vmem:[%s0 + $0x30] sm:$0xff]
    %v40 = vld [vmem:[%s1] sm:$0xff]
    %v41 = vld [vmem:[%s1 + $0x8] sm:$0xff]
    %v42 = vld [vmem:[%s1 + $0x10] sm:$0xff]
    %v43 = vld [vmem:[%s1 + $0x18] sm:$0xff]
    %v44 = vld [vmem:[%s1 + $0x20] sm:$0xff]
    %v45 = vld [vmem:[%s1 + $0x28] sm:$0xff]
    %v46 = vld [vmem:[%s1 + $0x30] sm:$0xff]
    %v47 = vld [vmem:[%s1 + $0x38] sm:$0xff]
    %v48 = vld [vmem:[%s1 + $0x40] sm:$0xff]
    %v49 = vld [vmem:[%s1 + $0x48] sm:$0xff]
    %v50 = vld [vmem:[%s1 + $0x50] sm:$0xff]
    %v51 = vld [vmem:[%s1 + $0x58] sm:$0xff]
    %v52 = vld [vmem:[%s1 + $0x60] sm:$0xff]
    %v53 = vld [vmem:[%s1 + $0x68] sm:$0xff]
    %v54 = vld [vmem:[%s1 + $0x70] sm:$0xff]
    %v55 = vld [vmem:[%s1 + $0x78] sm:$0xff]
    %v56 = vld [vmem:[%s1 + $0x80] sm:$0xff]
    %v57 = vld [vmem:[%s1 + $0x88] sm:$0xff]
    %v58 = vld [vmem:[%s1 + $0x90] sm:$0xff]
    %v59 = vld [vmem:[%s1 + $0x98] sm:$0xff]
    %v60 = vld [vmem:[%s1 + $0xa0] sm:$0xff]
    %v61 = vld [vmem:[%s1 + $0xa8] sm:$0xff]
    %v62 = vld [vmem:[%s1 + $0xb0] sm:$0xff]
    %v63 = vld [vmem:[%s1 + $0xb8] sm:$0xff]
    %v64 = vld [vmem:[%s1 + $0xc0] sm:$0xff]
    %v65 = vld [vmem:[%s1 + $0xc8] sm:$0xff]
    %v66 = vld [vmem:[%s1 + $0xd0] sm:$0xff]
    %v67 = vld [vmem:[%s1 + $0xd8] sm:$0xff]
    %v68 = vld [vmem:[%s1 + $0xe0] sm:$0xff]
    %v69 = vld [vmem:[%s1 + $0xe8] sm:$0xff]
    %v70 = vld [vmem:[%s1 + $0xf0] sm:$0xff]
    %v71 = vld [vmem:[%s1 + $0xf8] sm:$0xff]
    %v72 = vld [vmem:[%s2] sm:$0xff]
    %v73 = vld [vmem:[%s2 + $0x8] sm:$0xff]
    %v74 = vld [vmem:[%s2 + $0x10] sm:$0xff]
    %v75 = vld [vmem:[%s2 + $0x18] sm:$0xff]
    %v76 = vld [vmem:[%s2 + $0x20] sm:$0xff]
    %v77 = vld [vmem:[%s2 + $0x28] sm:$0xff]
    %v78 = vld [vmem:[%s2 + $0x30] sm:$0xff]
    %v79 = vld [vmem:[%s2 + $0x38] sm:$0xff]
    %v80 = vld [vmem:[%s2 + $0x40] sm:$0xff]
    %v81 = vld [vmem:[%s2 + $0x48] sm:$0xff]
    %v82 = vld [vmem:[%s2 + $0x50] sm:$0xff]
    %v83 = vld [vmem:[%s2 + $0x58] sm:$0xff]
    %v84 = vld [vmem:[%s2 + $0x60] sm:$0xff]
    %v85 = vld [vmem:[%s2 + $0x68] sm:$0xff]
    %v86 = vld [vmem:[%s2 + $0x70] sm:$0xff]
    %v87 = vld [vmem:[%s2 + $0x78] sm:$0xff]
    %v88 = vld [vmem:[%s2 + $0x80] sm:$0xff]
    %v89 = vld [vmem:[%s2 + $0x88] sm:$0xff]
    %v90 = vld [vmem:[%s2 + $0x90] sm:$0xff]
    %v91 = vld [vmem:[%s2 + $0x98] sm:$0xff]
    %v92 = vld [vmem:[%s2 + $0xa0] sm:$0xff]
    %v93 = vld [vmem:[%s2 + $0xa8] sm:$0xff]
    %v94 = vld [vmem:[%s2 + $0xb0] sm:$0xff]
    %v95 = vld [vmem:[%s2 + $0xb8] sm:$0xff]
    %v96 = vld [vmem:[%s2 + $0xc0] sm:$0xff]
    %v97 = vld [vmem:[%s2 + $0xc8] sm:$0xff]
    %v98 = vld [vmem:[%s2 + $0xd0] sm:$0xff]
    %v99 = vld [vmem:[%s2 + $0xd8] sm:$0xff]
    %v100 = vld [vmem:[%s2 + $0xe0] sm:$0xff]
    %v101 = vld [vmem:[%s2 + $0xe8] sm:$0xff]
    %v102 = vld [vmem:[%s2 + $0xf0] sm:$0xff]
    %v103 = vld [vmem:[%s2 + $0xf8] sm:$0xff]
    %105 = vset.pattern.permute.xlu0 0
    %106 = vperm.xlu0 %105, %v72
    %v107 = vpop.permute.xlu0 %106
    %110 = vset.pattern.permute.xlu0 0
    %111 = vperm.xlu0 %110, %v73
    %v112 = vpop.permute.xlu0 %111
    %115 = vset.pattern.permute.xlu0 0
    %116 = vperm.xlu0 %115, %v74
    %v117 = vpop.permute.xlu0 %116
    %120 = vset.pattern.permute.xlu0 0
    %121 = vperm.xlu0 %120, %v75
    %v122 = vpop.permute.xlu0 %121
    %125 = vset.pattern.permute.xlu0 0
    %126 = vperm.xlu0 %125, %v76
    %v127 = vpop.permute.xlu0 %126
    %130 = vset.pattern.permute.xlu0 0
    %131 = vperm.xlu0 %130, %v77
    %v132 = vpop.permute.xlu0 %131
    %135 = vset.pattern.permute.xlu0 0
    %136 = vperm.xlu0 %135, %v78
    %v137 = vpop.permute.xlu0 %136
    %140 = vset.pattern.permute.xlu0 0
    %141 = vperm.xlu0 %140, %v79
    %v142 = vpop.permute.xlu0 %141
    %145 = vset.pattern.permute.xlu0 0
    %146 = vperm.xlu0 %145, %v80
    %v147 = vpop.permute.xlu0 %146
    %150 = vset.pattern.permute.xlu0 0
    %151 = vperm.xlu0 %150, %v81
    %v152 = vpop.permute.xlu0 %151
    %155 = vset.pattern.permute.xlu0 0
    %156 = vperm.xlu0 %155, %v82
    %v157 = vpop.permute.xlu0 %156
    %160 = vset.pattern.permute.xlu0 0
    %161 = vperm.xlu0 %160, %v83
    %v162 = vpop.permute.xlu0 %161
    %165 = vset.pattern.permute.xlu0 0
    %166 = vperm.xlu0 %165, %v84
    %v167 = vpop.permute.xlu0 %166
    %170 = vset.pattern.permute.xlu0 0
    %171 = vperm.xlu0 %170, %v85
    %v172 = vpop.permute.xlu0 %171
    %175 = vset.pattern.permute.xlu0 0
    %176 = vperm.xlu0 %175, %v86
    %v177 = vpop.permute.xlu0 %176
    %180 = vset.pattern.permute.xlu0 0
    %181 = vperm.xlu0 %180, %v87
    %v182 = vpop.permute.xlu0 %181
    %185 = vset.pattern.permute.xlu0 0
    %186 = vperm.xlu0 %185, %v88
    %v187 = vpop.permute.xlu0 %186
    %190 = vset.pattern.permute.xlu0 0
    %191 = vperm.xlu0 %190, %v89
    %v192 = vpop.permute.xlu0 %191
    %195 = vset.pattern.permute.xlu0 0
    %196 = vperm.xlu0 %195, %v90
    %v197 = vpop.permute.xlu0 %196
    %200 = vset.pattern.permute.xlu0 0
    %201 = vperm.xlu0 %200, %v91
    %v202 = vpop.permute.xlu0 %201
    %205 = vset.pattern.permute.xlu0 0
    %206 = vperm.xlu0 %205, %v92
    %v207 = vpop.permute.xlu0 %206
    %210 = vset.pattern.permute.xlu0 0
    %211 = vperm.xlu0 %210, %v93
    %v212 = vpop.permute.xlu0 %211
    %215 = vset.pattern.permute.xlu0 0
    %216 = vperm.xlu0 %215, %v94
    %v217 = vpop.permute.xlu0 %216
    %220 = vset.pattern.permute.xlu0 0
    %221 = vperm.xlu0 %220, %v95
    %v222 = vpop.permute.xlu0 %221
    %225 = vset.pattern.permute.xlu0 0
    %226 = vperm.xlu0 %225, %v96
    %v227 = vpop.permute.xlu0 %226
    %230 = vset.pattern.permute.xlu0 0
    %231 = vperm.xlu0 %230, %v97
    %v232 = vpop.permute.xlu0 %231
    %235 = vset.pattern.permute.xlu0 0
    %236 = vperm.xlu0 %235, %v98
    %v237 = vpop.permute.xlu0 %236
    %240 = vset.pattern.permute.xlu0 0
    %241 = vperm.xlu0 %240, %v99
    %v242 = vpop.permute.xlu0 %241
    %245 = vset.pattern.permute.xlu0 0
    %246 = vperm.xlu0 %245, %v100
    %v247 = vpop.permute.xlu0 %246
    %250 = vset.pattern.permute.xlu0 0
    %251 = vperm.xlu0 %250, %v101
    %v252 = vpop.permute.xlu0 %251
    %255 = vset.pattern.permute.xlu0 0
    %256 = vperm.xlu0 %255, %v102
    %v257 = vpop.permute.xlu0 %256
    %260 = vset.pattern.permute.xlu0 0
    %261 = vperm.xlu0 %260, %v103
    %v262 = vpop.permute.xlu0 %261
    %vm264 = vcmask 64512
    %v266 = vsel %vm264, %v40, 0
    %v269 = vsel %vm264, %v41, 0
    %v272 = vsel %vm264, %v42, 0
    %v275 = vsel %vm264, %v43, 0
    %v278 = vsel %vm264, %v44, 0
    %v281 = vsel %vm264, %v45, 0
    %v284 = vsel %vm264, %v46, 0
    %v287 = vsel %vm264, %v47, 0
    %v290 = vsel %vm264, %v48, 0
    %v293 = vsel %vm264, %v49, 0
    %v296 = vsel %vm264, %v50, 0
    %v299 = vsel %vm264, %v51, 0
    %v302 = vsel %vm264, %v52, 0
    %v305 = vsel %vm264, %v53, 0
    %v308 = vsel %vm264, %v54, 0
    %v311 = vsel %vm264, %v55, 0
    %v314 = vsel %vm264, %v56, 0
    %v317 = vsel %vm264, %v57, 0
    %v320 = vsel %vm264, %v58, 0
    %v323 = vsel %vm264, %v59, 0
    %v326 = vsel %vm264, %v60, 0
    %v329 = vsel %vm264, %v61, 0
    %v332 = vsel %vm264, %v62, 0
    %v335 = vsel %vm264, %v63, 0
    %v338 = vsel %vm264, %v64, 0
    %v341 = vsel %vm264, %v65, 0
    %v344 = vsel %vm264, %v66, 0
    %v347 = vsel %vm264, %v67, 0
    %v350 = vsel %vm264, %v68, 0
    %v353 = vsel %vm264, %v69, 0
    %v356 = vsel %vm264, %v70, 0
    %v359 = vsel %vm264, %v71, 0
    %361 = vmatprep.subr.mxu0 %v34
    %362 = vmatpush1.msra.mxu0 %v33
    %363 = vmatprep.subr.mxu0 0.0
    %364 = vmatpush1.msra.mxu0 0.0
    %365 = vmatprep.subr.mxu0 0.0
    %366 = vmatpush1.msra.mxu0 0.0
    %367 = vmatprep.subr.mxu0 0.0
    %368 = vmatpush1.msra.mxu0 0.0
    %369 = vmatprep.subr.mxu0 0.0
    %370 = vmatpush1.msra.mxu0 0.0
    %371 = vmatprep.subr.mxu0 0.0
    %372 = vmatpush1.msra.mxu0 0.0
    %373 = vmatprep.subr.mxu0 0.0
    %374 = vmatpush1.msra.mxu0 0.0
    %375 = vmatprep.subr.mxu0 0.0
    %376 = vmatpush1.msra.mxu0 0.0
    %377 = vmatprep.subr.mxu0 0.0
    %378 = vmatpush1.msra.mxu0 0.0
    %379 = vmatprep.subr.mxu0 0.0
    %380 = vmatpush1.msra.mxu0 0.0
    %381 = vmatprep.subr.mxu0 0.0
    %382 = vmatpush1.msra.mxu0 0.0
    %383 = vmatprep.subr.mxu0 0.0
    %384 = vmatpush1.msra.mxu0 0.0
    %385 = vmatprep.subr.mxu0 0.0
    %386 = vmatpush1.msra.mxu0 0.0
    %387 = vmatprep.subr.mxu0 0.0
    %388 = vmatpush1.msra.mxu0 0.0
    %389 = vmatprep.subr.mxu0 0.0
    %390 = vmatpush1.msra.mxu0 0.0
    %391 = vmatprep.subr.mxu0 0.0
    %392 = vmatpush1.msra.mxu0 0.0
    %393 = vmatprep.subr.mxu0 0.0
    %394 = vmatpush1.msra.mxu0 0.0
    %395 = vmatprep.subr.mxu0 0.0
    %396 = vmatpush1.msra.mxu0 0.0
    %397 = vmatprep.subr.mxu0 0.0
    %398 = vmatpush1.msra.mxu0 0.0
    %399 = vmatprep.subr.mxu0 0.0
    %400 = vmatpush1.msra.mxu0 0.0
    %401 = vmatprep.subr.mxu0 0.0
    %402 = vmatpush1.msra.mxu0 0.0
    %403 = vmatprep.subr.mxu0 0.0
    %404 = vmatpush1.msra.mxu0 0.0
    %405 = vmatprep.subr.mxu0 0.0
    %406 = vmatpush1.msra.mxu0 0.0
    %407 = vmatprep.subr.mxu0 0.0
    %408 = vmatpush1.msra.mxu0 0.0
    %409 = vmatprep.subr.mxu0 0.0
    %410 = vmatpush1.msra.mxu0 0.0
    %411 = vmatprep.subr.mxu0 0.0
    %412 = vmatpush1.msra.mxu0 0.0
    %413 = vmatprep.subr.mxu0 0.0
    %414 = vmatpush1.msra.mxu0 0.0
    %415 = vmatprep.subr.mxu0 0.0
    %416 = vmatpush1.msra.mxu0 0.0
    %417 = vmatprep.subr.mxu0 0.0
    %418 = vmatpush1.msra.mxu0 0.0
    %419 = vmatprep.subr.mxu0 0.0
    %420 = vmatpush1.msra.mxu0 0.0
    %421 = vmatprep.subr.mxu0 0.0
    %422 = vmatpush1.msra.mxu0 0.0
    %423 = vmatprep.subr.mxu0 0.0
    %424 = vmatpush1.msra.mxu0 0.0
    %425 = vmatprep.mubr.f32.mxu0 0.0
    %426 = vmatmul.mubr.f32.gmra.mrb[0].mxu0 %v266
    %v427 = vpop.f32.mrb[0].mxu0
    %v428 = vadd.f32 %v107, %v427
    %v429 = vpop.f32.mrb[0].mxu0
    %v430 = vadd.f32 %v107, %v429
    %431 = vmatprep.mubr.f32.mxu0 0.0
    %432 = vmatmul.mubr.f32.gmra.mrb[0].mxu0 %v269
    %v433 = vpop.f32.mrb[0].mxu0
    %v434 = vadd.f32 %v112, %v433
    %v435 = vpop.f32.mrb[0].mxu0
    %v436 = vadd.f32 %v112, %v435
    %437 = vmatprep.mubr.f32.mxu0 0.0
    %438 = vmatmul.mubr.f32.gmra.mrb[0].mxu0 %v272
    %v439 = vpop.f32.mrb[0].mxu0
    %v440 = vadd.f32 %v117, %v439
    %v441 = vpop.f32.mrb[0].mxu0
    %v442 = vadd.f32 %v117, %v441
    %443 = vmatprep.mubr.f32.mxu0 0.0
    %444 = vmatmul.mubr.f32.gmra.mrb[0].mxu0 %v275
    %v445 = vpop.f32.mrb[0].mxu0
    %v446 = vadd.f32 %v122, %v445
    %v447 = vpop.f32.mrb[0].mxu0
    %v448 = vadd.f32 %v122, %v447
    %449 = vmatprep.mubr.f32.mxu0 0.0
    %450 = vmatmul.mubr.f32.gmra.mrb[0].mxu0 %v278
    %v451 = vpop.f32.mrb[0].mxu0
    %v452 = vadd.f32 %v127, %v451
    %v453 = vpop.f32.mrb[0].mxu0
    %v454 = vadd.f32 %v127, %v453
    %455 = vmatprep.mubr.f32.mxu0 0.0
    %456 = vmatmul.mubr.f32.gmra.mrb[0].mxu0 %v281
    %v457 = vpop.f32.mrb[0].mxu0
    %v458 = vadd.f32 %v132, %v457
    %v459 = vpop.f32.mrb[0].mxu0
    %v460 = vadd.f32 %v132, %v459
    %461 = vmatprep.mubr.f32.mxu0 0.0
    %462 = vmatmul.mubr.f32.gmra.mrb[0].mxu0 %v284
    %v463 = vpop.f32.mrb[0].mxu0
    %v464 = vadd.f32 %v137, %v463
    %v465 = vpop.f32.mrb[0].mxu0
    %v466 = vadd.f32 %v137, %v465
    %467 = vmatprep.mubr.f32.mxu0 0.0
    %468 = vmatmul.mubr.f32.gmra.mrb[0].mxu0 %v287
    %v469 = vpop.f32.mrb[0].mxu0
    %v470 = vadd.f32 %v142, %v469
    %v471 = vpop.f32.mrb[0].mxu0
    %v472 = vadd.f32 %v142, %v471
    %473 = vmatprep.mubr.f32.mxu0 0.0
    %474 = vmatmul.mubr.f32.gmra.mrb[0].mxu0 %v290
    %v475 = vpop.f32.mrb[0].mxu0
    %v476 = vadd.f32 %v147, %v475
    %v477 = vpop.f32.mrb[0].mxu0
    %v478 = vadd.f32 %v147, %v477
    %479 = vmatprep.mubr.f32.mxu0 0.0
    %480 = vmatmul.mubr.f32.gmra.mrb[0].mxu0 %v293
    %v481 = vpop.f32.mrb[0].mxu0
    %v482 = vadd.f32 %v152, %v481
    %v483 = vpop.f32.mrb[0].mxu0
    %v484 = vadd.f32 %v152, %v483
    %485 = vmatprep.mubr.f32.mxu0 0.0
    %486 = vmatmul.mubr.f32.gmra.mrb[0].mxu0 %v296
    %v487 = vpop.f32.mrb[0].mxu0
    %v488 = vadd.f32 %v157, %v487
    %v489 = vpop.f32.mrb[0].mxu0
    %v490 = vadd.f32 %v157, %v489
    %491 = vmatprep.mubr.f32.mxu0 0.0
    %492 = vmatmul.mubr.f32.gmra.mrb[0].mxu0 %v299
    %v493 = vpop.f32.mrb[0].mxu0
    %v494 = vadd.f32 %v162, %v493
    %v495 = vpop.f32.mrb[0].mxu0
    %v496 = vadd.f32 %v162, %v495
    %497 = vmatprep.mubr.f32.mxu0 0.0
    %498 = vmatmul.mubr.f32.gmra.mrb[0].mxu0 %v302
    %v499 = vpop.f32.mrb[0].mxu0
    %v500 = vadd.f32 %v167, %v499
    %v501 = vpop.f32.mrb[0].mxu0
    %v502 = vadd.f32 %v167, %v501
    %503 = vmatprep.mubr.f32.mxu0 0.0
    %504 = vmatmul.mubr.f32.gmra.mrb[0].mxu0 %v305
    %v505 = vpop.f32.mrb[0].mxu0
    %v506 = vadd.f32 %v172, %v505
    %v507 = vpop.f32.mrb[0].mxu0
    %v508 = vadd.f32 %v172, %v507
    %509 = vmatprep.mubr.f32.mxu0 0.0
    %510 = vmatmul.mubr.f32.gmra.mrb[0].mxu0 %v308
    %v511 = vpop.f32.mrb[0].mxu0
    %v512 = vadd.f32 %v177, %v511
    %v513 = vpop.f32.mrb[0].mxu0
    %v514 = vadd.f32 %v177, %v513
    %515 = vmatprep.mubr.f32.mxu0 0.0
    %516 = vmatmul.mubr.f32.gmra.mrb[0].mxu0 %v311
    %v517 = vpop.f32.mrb[0].mxu0
    %v518 = vadd.f32 %v182, %v517
    %v519 = vpop.f32.mrb[0].mxu0
    %v520 = vadd.f32 %v182, %v519
    %521 = vmatprep.mubr.f32.mxu0 0.0
    %522 = vmatmul.mubr.f32.gmra.mrb[0].mxu0 %v314
    %v523 = vpop.f32.mrb[0].mxu0
    %v524 = vadd.f32 %v187, %v523
    %v525 = vpop.f32.mrb[0].mxu0
    %v526 = vadd.f32 %v187, %v525
    %527 = vmatprep.mubr.f32.mxu0 0.0
    %528 = vmatmul.mubr.f32.gmra.mrb[0].mxu0 %v317
    %v529 = vpop.f32.mrb[0].mxu0
    %v530 = vadd.f32 %v192, %v529
    %v531 = vpop.f32.mrb[0].mxu0
    %v532 = vadd.f32 %v192, %v531
    %533 = vmatprep.mubr.f32.mxu0 0.0
    %534 = vmatmul.mubr.f32.gmra.mrb[0].mxu0 %v320
    %v535 = vpop.f32.mrb[0].mxu0
    %v536 = vadd.f32 %v197, %v535
    %v537 = vpop.f32.mrb[0].mxu0
    %v538 = vadd.f32 %v197, %v537
    %539 = vmatprep.mubr.f32.mxu0 0.0
    %540 = vmatmul.mubr.f32.gmra.mrb[0].mxu0 %v323
    %v541 = vpop.f32.mrb[0].mxu0
    %v542 = vadd.f32 %v202, %v541
    %v543 = vpop.f32.mrb[0].mxu0
    %v544 = vadd.f32 %v202, %v543
    %545 = vmatprep.mubr.f32.mxu0 0.0
    %546 = vmatmul.mubr.f32.gmra.mrb[0].mxu0 %v326
    %v547 = vpop.f32.mrb[0].mxu0
    %v548 = vadd.f32 %v207, %v547
    %v549 = vpop.f32.mrb[0].mxu0
    %v550 = vadd.f32 %v207, %v549
    %551 = vmatprep.mubr.f32.mxu0 0.0
    %552 = vmatmul.mubr.f32.gmra.mrb[0].mxu0 %v329
    %v553 = vpop.f32.mrb[0].mxu0
    %v554 = vadd.f32 %v212, %v553
    %v555 = vpop.f32.mrb[0].mxu0
    %v556 = vadd.f32 %v212, %v555
    %557 = vmatprep.mubr.f32.mxu0 0.0
    %558 = vmatmul.mubr.f32.gmra.mrb[0].mxu0 %v332
    %v559 = vpop.f32.mrb[0].mxu0
    %v560 = vadd.f32 %v217, %v559
    %v561 = vpop.f32.mrb[0].mxu0
    %v562 = vadd.f32 %v217, %v561
    %563 = vmatprep.mubr.f32.mxu0 0.0
    %564 = vmatmul.mubr.f32.gmra.mrb[0].mxu0 %v335
    %v565 = vpop.f32.mrb[0].mxu0
    %v566 = vadd.f32 %v222, %v565
    %v567 = vpop.f32.mrb[0].mxu0
    %v568 = vadd.f32 %v222, %v567
    %569 = vmatprep.mubr.f32.mxu0 0.0
    %570 = vmatmul.mubr.f32.gmra.mrb[0].mxu0 %v338
    %v571 = vpop.f32.mrb[0].mxu0
    %v572 = vadd.f32 %v227, %v571
    %v573 = vpop.f32.mrb[0].mxu0
    %v574 = vadd.f32 %v227, %v573
    %575 = vmatprep.mubr.f32.mxu0 0.0
    %576 = vmatmul.mubr.f32.gmra.mrb[0].mxu0 %v341
    %v577 = vpop.f32.mrb[0].mxu0
    %v578 = vadd.f32 %v232, %v577
    %v579 = vpop.f32.mrb[0].mxu0
    %v580 = vadd.f32 %v232, %v579
    %581 = vmatprep.mubr.f32.mxu0 0.0
    %582 = vmatmul.mubr.f32.gmra.mrb[0].mxu0 %v344
    %v583 = vpop.f32.mrb[0].mxu0
    %v584 = vadd.f32 %v237, %v583
    %v585 = vpop.f32.mrb[0].mxu0
    %v586 = vadd.f32 %v237, %v585
    %587 = vmatprep.mubr.f32.mxu0 0.0
    %588 = vmatmul.mubr.f32.gmra.mrb[0].mxu0 %v347
    %v589 = vpop.f32.mrb[0].mxu0
    %v590 = vadd.f32 %v242, %v589
    %v591 = vpop.f32.mrb[0].mxu0
    %v592 = vadd.f32 %v242, %v591
    %593 = vmatprep.mubr.f32.mxu0 0.0
    %594 = vmatmul.mubr.f32.gmra.mrb[0].mxu0 %v350
    %v595 = vpop.f32.mrb[0].mxu0
    %v596 = vadd.f32 %v247, %v595
    %v597 = vpop.f32.mrb[0].mxu0
    %v598 = vadd.f32 %v247, %v597
    %599 = vmatprep.mubr.f32.mxu0 0.0
    %600 = vmatmul.mubr.f32.gmra.mrb[0].mxu0 %v353
    %v601 = vpop.f32.mrb[0].mxu0
    %v602 = vadd.f32 %v252, %v601
    %v603 = vpop.f32.mrb[0].mxu0
    %v604 = vadd.f32 %v252, %v603
    %605 = vmatprep.mubr.f32.mxu0 0.0
    %606 = vmatmul.mubr.f32.gmra.mrb[0].mxu0 %v356
    %v607 = vpop.f32.mrb[0].mxu0
    %v608 = vadd.f32 %v257, %v607
    %v609 = vpop.f32.mrb[0].mxu0
    %v610 = vadd.f32 %v257, %v609
    %611 = vmatprep.mubr.f32.mxu0 0.0
    %612 = vmatmul.mubr.f32.gmra.mrb[0].mxu0 %v359
    %v613 = vpop.f32.mrb[0].mxu0
    %v614 = vadd.f32 %v262, %v613
    %v615 = vpop.f32.mrb[0].mxu0
    %v616 = vadd.f32 %v262, %v615
    %617 = vdwg.mxu0
    %618 = vmatprep.subr.mxu0 %v36
    %619 = vmatpush1.msra.mxu0 %v35
    %620 = vmatprep.subr.mxu0 0.0
    %621 = vmatpush1.msra.mxu0 0.0
    %622 = vmatprep.subr.mxu0 0.0
    %623 = vmatpush1.msra.mxu0 0.0
    %624 = vmatprep.subr.mxu0 0.0
    %625 = vmatpush1.msra.mxu0 0.0
    %626 = vmatprep.subr.mxu0 0.0
    %627 = vmatpush1.msra.mxu0 0.0
    %628 = vmatprep.subr.mxu0 0.0
    %629 = vmatpush1.msra.mxu0 0.0
    %630 = vmatprep.subr.mxu0 0.0
    %631 = vmatpush1.msra.mxu0 0.0
    %632 = vmatprep.subr.mxu0 0.0
    %633 = vmatpush1.msra.mxu0 0.0
    %634 = vmatprep.subr.mxu0 0.0
    %635 = vmatpush1.msra.mxu0 0.0
    %636 = vmatprep.subr.mxu0 0.0
    %637 = vmatpush1.msra.mxu0 0.0
    %638 = vmatprep.subr.mxu0 0.0
    %639 = vmatpush1.msra.mxu0 0.0
    %640 = vmatprep.subr.mxu0 0.0
    %641 = vmatpush1.msra.mxu0 0.0
    %642 = vmatprep.subr.mxu0 0.0
    %643 = vmatpush1.msra.mxu0 0.0
    %644 = vmatprep.subr.mxu0 0.0
    %645 = vmatpush1.msra.mxu0 0.0
    %646 = vmatprep.subr.mxu0 0.0
    %647 = vmatpush1.msra.mxu0 0.0
    %648 = vmatprep.subr.mxu0 0.0
    %649 = vmatpush1.msra.mxu0 0.0
    %650 = vmatprep.subr.mxu0 0.0
    %651 = vmatpush1.msra.mxu0 0.0
    %652 = vmatprep.subr.mxu0 0.0
    %653 = vmatpush1.msra.mxu0 0.0
    %654 = vmatprep.subr.mxu0 0.0
    %655 = vmatpush1.msra.mxu0 0.0
    %656 = vmatprep.subr.mxu0 0.0
    %657 = vmatpush1.msra.mxu0 0.0
    %658 = vmatprep.subr.mxu0 0.0
    %659 = vmatpush1.msra.mxu0 0.0
    %660 = vmatprep.subr.mxu0 0.0
    %661 = vmatpush1.msra.mxu0 0.0
    %662 = vmatprep.subr.mxu0 0.0
    %663 = vmatpush1.msra.mxu0 0.0
    %664 = vmatprep.subr.mxu0 0.0
    %665 = vmatpush1.msra.mxu0 0.0
    %666 = vmatprep.subr.mxu0 0.0
    %667 = vmatpush1.msra.mxu0 0.0
    %668 = vmatprep.subr.mxu0 0.0
    %669 = vmatpush1.msra.mxu0 0.0
    %670 = vmatprep.subr.mxu0 0.0
    %671 = vmatpush1.msra.mxu0 0.0
    %672 = vmatprep.subr.mxu0 0.0
    %673 = vmatpush1.msra.mxu0 0.0
    %674 = vmatprep.subr.mxu0 0.0
    %675 = vmatpush1.msra.mxu0 0.0
    %676 = vmatprep.subr.mxu0 0.0
    %677 = vmatpush1.msra.mxu0 0.0
    %678 = vmatprep.subr.mxu0 0.0
    %679 = vmatpush1.msra.mxu0 0.0
    %680 = vmatprep.subr.mxu0 0.0
    %681 = vmatpush1.msra.mxu0 0.0
    %682 = vmatprep.mubr.f32.mxu0 0.0
    %683 = vmatmul.mubr.f32.gmra.mrb[0].mxu0 %v266
    %v684 = vpop.f32.mrb[0].mxu0
    %v685 = vadd.f32 %v107, %v684
    %v686 = vpop.f32.mrb[0].mxu0
    %v687 = vadd.f32 %v107, %v686
    %688 = vmatprep.mubr.f32.mxu0 0.0
    %689 = vmatmul.mubr.f32.gmra.mrb[0].mxu0 %v269
    %v690 = vpop.f32.mrb[0].mxu0
    %v691 = vadd.f32 %v112, %v690
    %v692 = vpop.f32.mrb[0].mxu0
    %v693 = vadd.f32 %v112, %v692
    %694 = vmatprep.mubr.f32.mxu0 0.0
    %695 = vmatmul.mubr.f32.gmra.mrb[0].mxu0 %v272
    %v696 = vpop.f32.mrb[0].mxu0
    %v697 = vadd.f32 %v117, %v696
    %v698 = vpop.f32.mrb[0].mxu0
    %v699 = vadd.f32 %v117, %v698
    %700 = vmatprep.mubr.f32.mxu0 0.0
    %701 = vmatmul.mubr.f32.gmra.mrb[0].mxu0 %v275
    %v702 = vpop.f32.mrb[0].mxu0
    %v703 = vadd.f32 %v122, %v702
    %v704 = vpop.f32.mrb[0].mxu0
    %v705 = vadd.f32 %v122, %v704
    %706 = vmatprep.mubr.f32.mxu0 0.0
    %707 = vmatmul.mubr.f32.gmra.mrb[0].mxu0 %v278
    %v708 = vpop.f32.mrb[0].mxu0
    %v709 = vadd.f32 %v127, %v708
    %v710 = vpop.f32.mrb[0].mxu0
    %v711 = vadd.f32 %v127, %v710
    %712 = vmatprep.mubr.f32.mxu0 0.0
    %713 = vmatmul.mubr.f32.gmra.mrb[0].mxu0 %v281
    %v714 = vpop.f32.mrb[0].mxu0
    %v715 = vadd.f32 %v132, %v714
    %v716 = vpop.f32.mrb[0].mxu0
    %v717 = vadd.f32 %v132, %v716
    %718 = vmatprep.mubr.f32.mxu0 0.0
    %719 = vmatmul.mubr.f32.gmra.mrb[0].mxu0 %v284
    %v720 = vpop.f32.mrb[0].mxu0
    %v721 = vadd.f32 %v137, %v720
    %v722 = vpop.f32.mrb[0].mxu0
    %v723 = vadd.f32 %v137, %v722
    %724 = vmatprep.mubr.f32.mxu0 0.0
    %725 = vmatmul.mubr.f32.gmra.mrb[0].mxu0 %v287
    %v726 = vpop.f32.mrb[0].mxu0
    %v727 = vadd.f32 %v142, %v726
    %v728 = vpop.f32.mrb[0].mxu0
    %v729 = vadd.f32 %v142, %v728
    %730 = vmatprep.mubr.f32.mxu0 0.0
    %731 = vmatmul.mubr.f32.gmra.mrb[0].mxu0 %v290
    %v732 = vpop.f32.mrb[0].mxu0
    %v733 = vadd.f32 %v147, %v732
    %v734 = vpop.f32.mrb[0].mxu0
    %v735 = vadd.f32 %v147, %v734
    %736 = vmatprep.mubr.f32.mxu0 0.0
    %737 = vmatmul.mubr.f32.gmra.mrb[0].mxu0 %v293
    %v738 = vpop.f32.mrb[0].mxu0
    %v739 = vadd.f32 %v152, %v738
    %v740 = vpop.f32.mrb[0].mxu0
    %v741 = vadd.f32 %v152, %v740
    %742 = vmatprep.mubr.f32.mxu0 0.0
    %743 = vmatmul.mubr.f32.gmra.mrb[0].mxu0 %v296
    %v744 = vpop.f32.mrb[0].mxu0
    %v745 = vadd.f32 %v157, %v744
    %v746 = vpop.f32.mrb[0].mxu0
    %v747 = vadd.f32 %v157, %v746
    %748 = vmatprep.mubr.f32.mxu0 0.0
    %749 = vmatmul.mubr.f32.gmra.mrb[0].mxu0 %v299
    %v750 = vpop.f32.mrb[0].mxu0
    %v751 = vadd.f32 %v162, %v750
    %v752 = vpop.f32.mrb[0].mxu0
    %v753 = vadd.f32 %v162, %v752
    %754 = vmatprep.mubr.f32.mxu0 0.0
    %755 = vmatmul.mubr.f32.gmra.mrb[0].mxu0 %v302
    %v756 = vpop.f32.mrb[0].mxu0
    %v757 = vadd.f32 %v167, %v756
    %v758 = vpop.f32.mrb[0].mxu0
    %v759 = vadd.f32 %v167, %v758
    %760 = vmatprep.mubr.f32.mxu0 0.0
    %761 = vmatmul.mubr.f32.gmra.mrb[0].mxu0 %v305
    %v762 = vpop.f32.mrb[0].mxu0
    %v763 = vadd.f32 %v172, %v762
    %v764 = vpop.f32.mrb[0].mxu0
    %v765 = vadd.f32 %v172, %v764
    %766 = vmatprep.mubr.f32.mxu0 0.0
    %767 = vmatmul.mubr.f32.gmra.mrb[0].mxu0 %v308
    %v768 = vpop.f32.mrb[0].mxu0
    %v769 = vadd.f32 %v177, %v768
    %v770 = vpop.f32.mrb[0].mxu0
    %v771 = vadd.f32 %v177, %v770
    %772 = vmatprep.mubr.f32.mxu0 0.0
    %773 = vmatmul.mubr.f32.gmra.mrb[0].mxu0 %v311
    %v774 = vpop.f32.mrb[0].mxu0
    %v775 = vadd.f32 %v182, %v774
    %v776 = vpop.f32.mrb[0].mxu0
    %v777 = vadd.f32 %v182, %v776
    %778 = vmatprep.mubr.f32.mxu0 0.0
    %779 = vmatmul.mubr.f32.gmra.mrb[0].mxu0 %v314
    %v780 = vpop.f32.mrb[0].mxu0
    %v781 = vadd.f32 %v187, %v780
    %v782 = vpop.f32.mrb[0].mxu0
    %v783 = vadd.f32 %v187, %v782
    %784 = vmatprep.mubr.f32.mxu0 0.0
    %785 = vmatmul.mubr.f32.gmra.mrb[0].mxu0 %v317
    %v786 = vpop.f32.mrb[0].mxu0
    %v787 = vadd.f32 %v192, %v786
    %v788 = vpop.f32.mrb[0].mxu0
    %v789 = vadd.f32 %v192, %v788
    %790 = vmatprep.mubr.f32.mxu0 0.0
    %791 = vmatmul.mubr.f32.gmra.mrb[0].mxu0 %v320
    %v792 = vpop.f32.mrb[0].mxu0
    %v793 = vadd.f32 %v197, %v792
    %v794 = vpop.f32.mrb[0].mxu0
    %v795 = vadd.f32 %v197, %v794
    %796 = vmatprep.mubr.f32.mxu0 0.0
    %797 = vmatmul.mubr.f32.gmra.mrb[0].mxu0 %v323
    %v798 = vpop.f32.mrb[0].mxu0
    %v799 = vadd.f32 %v202, %v798
    %v800 = vpop.f32.mrb[0].mxu0
    %v801 = vadd.f32 %v202, %v800
    %802 = vmatprep.mubr.f32.mxu0 0.0
    %803 = vmatmul.mubr.f32.gmra.mrb[0].mxu0 %v326
    %v804 = vpop.f32.mrb[0].mxu0
    %v805 = vadd.f32 %v207, %v804
    %v806 = vpop.f32.mrb[0].mxu0
    %v807 = vadd.f32 %v207, %v806
    %808 = vmatprep.mubr.f32.mxu0 0.0
    %809 = vmatmul.mubr.f32.gmra.mrb[0].mxu0 %v329
    %v810 = vpop.f32.mrb[0].mxu0
    %v811 = vadd.f32 %v212, %v810
    %v812 = vpop.f32.mrb[0].mxu0
    %v813 = vadd.f32 %v212, %v812
    %814 = vmatprep.mubr.f32.mxu0 0.0
    %815 = vmatmul.mubr.f32.gmra.mrb[0].mxu0 %v332
    %v816 = vpop.f32.mrb[0].mxu0
    %v817 = vadd.f32 %v217, %v816
    %v818 = vpop.f32.mrb[0].mxu0
    %v819 = vadd.f32 %v217, %v818
    %820 = vmatprep.mubr.f32.mxu0 0.0
    %821 = vmatmul.mubr.f32.gmra.mrb[0].mxu0 %v335
    %v822 = vpop.f32.mrb[0].mxu0
    %v823 = vadd.f32 %v222, %v822
    %v824 = vpop.f32.mrb[0].mxu0
    %v825 = vadd.f32 %v222, %v824
    %826 = vmatprep.mubr.f32.mxu0 0.0
    %827 = vmatmul.mubr.f32.gmra.mrb[0].mxu0 %v338
    %v828 = vpop.f32.mrb[0].mxu0
    %v829 = vadd.f32 %v227, %v828
    %v830 = vpop.f32.mrb[0].mxu0
    %v831 = vadd.f32 %v227, %v830
    %832 = vmatprep.mubr.f32.mxu0 0.0
    %833 = vmatmul.mubr.f32.gmra.mrb[0].mxu0 %v341
    %v834 = vpop.f32.mrb[0].mxu0
    %v835 = vadd.f32 %v232, %v834
    %v836 = vpop.f32.mrb[0].mxu0
    %v837 = vadd.f32 %v232, %v836
    %838 = vmatprep.mubr.f32.mxu0 0.0
    %839 = vmatmul.mubr.f32.gmra.mrb[0].mxu0 %v344
    %v840 = vpop.f32.mrb[0].mxu0
    %v841 = vadd.f32 %v237, %v840
    %v842 = vpop.f32.mrb[0].mxu0
    %v843 = vadd.f32 %v237, %v842
    %844 = vmatprep.mubr.f32.mxu0 0.0
    %845 = vmatmul.mubr.f32.gmra.mrb[0].mxu0 %v347
    %v846 = vpop.f32.mrb[0].mxu0
    %v847 = vadd.f32 %v242, %v846
    %v848 = vpop.f32.mrb[0].mxu0
    %v849 = vadd.f32 %v242, %v848
    %850 = vmatprep.mubr.f32.mxu0 0.0
    %851 = vmatmul.mubr.f32.gmra.mrb[0].mxu0 %v350
    %v852 = vpop.f32.mrb[0].mxu0
    %v853 = vadd.f32 %v247, %v852
    %v854 = vpop.f32.mrb[0].mxu0
    %v855 = vadd.f32 %v247, %v854
    %856 = vmatprep.mubr.f32.mxu0 0.0
    %857 = vmatmul.mubr.f32.gmra.mrb[0].mxu0 %v353
    %v858 = vpop.f32.mrb[0].mxu0
    %v859 = vadd.f32 %v252, %v858
    %v860 = vpop.f32.mrb[0].mxu0
    %v861 = vadd.f32 %v252, %v860
    %862 = vmatprep.mubr.f32.mxu0 0.0
    %863 = vmatmul.mubr.f32.gmra.mrb[0].mxu0 %v356
    %v864 = vpop.f32.mrb[0].mxu0
    %v865 = vadd.f32 %v257, %v864
    %v866 = vpop.f32.mrb[0].mxu0
    %v867 = vadd.f32 %v257, %v866
    %868 = vmatprep.mubr.f32.mxu0 0.0
    %869 = vmatmul.mubr.f32.gmra.mrb[0].mxu0 %v359
    %v870 = vpop.f32.mrb[0].mxu0
    %v871 = vadd.f32 %v262, %v870
    %v872 = vpop.f32.mrb[0].mxu0
    %v873 = vadd.f32 %v262, %v872
    %874 = vdwg.mxu0
    %875 = vmatprep.subr.mxu0 %v38
    %876 = vmatpush1.msra.mxu0 %v37
    %877 = vmatprep.subr.mxu0 0.0
    %878 = vmatpush1.msra.mxu0 0.0
    %879 = vmatprep.subr.mxu0 0.0
    %880 = vmatpush1.msra.mxu0 0.0
    %881 = vmatprep.subr.mxu0 0.0
    %882 = vmatpush1.msra.mxu0 0.0
    %883 = vmatprep.subr.mxu0 0.0
    %884 = vmatpush1.msra.mxu0 0.0
    %885 = vmatprep.subr.mxu0 0.0
    %886 = vmatpush1.msra.mxu0 0.0
    %887 = vmatprep.subr.mxu0 0.0
    %888 = vmatpush1.msra.mxu0 0.0
    %889 = vmatprep.subr.mxu0 0.0
    %890 = vmatpush1.msra.mxu0 0.0
    %891 = vmatprep.subr.mxu0 0.0
    %892 = vmatpush1.msra.mxu0 0.0
    %893 = vmatprep.subr.mxu0 0.0
    %894 = vmatpush1.msra.mxu0 0.0
    %895 = vmatprep.subr.mxu0 0.0
    %896 = vmatpush1.msra.mxu0 0.0
    %897 = vmatprep.subr.mxu0 0.0
    %898 = vmatpush1.msra.mxu0 0.0
    %899 = vmatprep.subr.mxu0 0.0
    %900 = vmatpush1.msra.mxu0 0.0
    %901 = vmatprep.subr.mxu0 0.0
    %902 = vmatpush1.msra.mxu0 0.0
    %903 = vmatprep.subr.mxu0 0.0
    %904 = vmatpush1.msra.mxu0 0.0
    %905 = vmatprep.subr.mxu0 0.0
    %906 = vmatpush1.msra.mxu0 0.0
    %907 = vmatprep.subr.mxu0 0.0
    %908 = vmatpush1.msra.mxu0 0.0
    %909 = vmatprep.subr.mxu0 0.0
    %910 = vmatpush1.msra.mxu0 0.0
    %911 = vmatprep.subr.mxu0 0.0
    %912 = vmatpush1.msra.mxu0 0.0
    %913 = vmatprep.subr.mxu0 0.0
    %914 = vmatpush1.msra.mxu0 0.0
    %915 = vmatprep.subr.mxu0 0.0
    %916 = vmatpush1.msra.mxu0 0.0
    %917 = vmatprep.subr.mxu0 0.0
    %918 = vmatpush1.msra.mxu0 0.0
    %919 = vmatprep.subr.mxu0 0.0
    %920 = vmatpush1.msra.mxu0 0.0
    %921 = vmatprep.subr.mxu0 0.0
    %922 = vmatpush1.msra.mxu0 0.0
    %923 = vmatprep.subr.mxu0 0.0
    %924 = vmatpush1.msra.mxu0 0.0
    %925 = vmatprep.subr.mxu0 0.0
    %926 = vmatpush1.msra.mxu0 0.0
    %927 = vmatprep.subr.mxu0 0.0
    %928 = vmatpush1.msra.mxu0 0.0
    %929 = vmatprep.subr.mxu0 0.0
    %930 = vmatpush1.msra.mxu0 0.0
    %931 = vmatprep.subr.mxu0 0.0
    %932 = vmatpush1.msra.mxu0 0.0
    %933 = vmatprep.subr.mxu0 0.0
    %934 = vmatpush1.msra.mxu0 0.0
    %935 = vmatprep.subr.mxu0 0.0
    %936 = vmatpush1.msra.mxu0 0.0
    %937 = vmatprep.subr.mxu0 0.0
    %938 = vmatpush1.msra.mxu0 0.0
    %939 = vmatprep.mubr.f32.mxu0 0.0
    %940 = vmatmul.mubr.f32.gmra.mrb[0].mxu0 %v266
    %v941 = vpop.f32.mrb[0].mxu0
    %v942 = vadd.f32 %v107, %v941
    %v943 = vpop.f32.mrb[0].mxu0
    %v944 = vadd.f32 %v107, %v943
    %945 = vmatprep.mubr.f32.mxu0 0.0
    %946 = vmatmul.mubr.f32.gmra.mrb[0].mxu0 %v269
    %v947 = vpop.f32.mrb[0].mxu0
    %v948 = vadd.f32 %v112, %v947
    %v949 = vpop.f32.mrb[0].mxu0
    %v950 = vadd.f32 %v112, %v949
    %951 = vmatprep.mubr.f32.mxu0 0.0
    %952 = vmatmul.mubr.f32.gmra.mrb[0].mxu0 %v272
    %v953 = vpop.f32.mrb[0].mxu0
    %v954 = vadd.f32 %v117, %v953
    %v955 = vpop.f32.mrb[0].mxu0
    %v956 = vadd.f32 %v117, %v955
    %957 = vmatprep.mubr.f32.mxu0 0.0
    %958 = vmatmul.mubr.f32.gmra.mrb[0].mxu0 %v275
    %v959 = vpop.f32.mrb[0].mxu0
    %v960 = vadd.f32 %v122, %v959
    %v961 = vpop.f32.mrb[0].mxu0
    %v962 = vadd.f32 %v122, %v961
    %963 = vmatprep.mubr.f32.mxu0 0.0
    %964 = vmatmul.mubr.f32.gmra.mrb[0].mxu0 %v278
    %v965 = vpop.f32.mrb[0].mxu0
    %v966 = vadd.f32 %v127, %v965
    %v967 = vpop.f32.mrb[0].mxu0
    %v968 = vadd.f32 %v127, %v967
    %969 = vmatprep.mubr.f32.mxu0 0.0
    %970 = vmatmul.mubr.f32.gmra.mrb[0].mxu0 %v281
    %v971 = vpop.f32.mrb[0].mxu0
    %v972 = vadd.f32 %v132, %v971
    %v973 = vpop.f32.mrb[0].mxu0
    %v974 = vadd.f32 %v132, %v973
    %975 = vmatprep.mubr.f32.mxu0 0.0
    %976 = vmatmul.mubr.f32.gmra.mrb[0].mxu0 %v284
    %v977 = vpop.f32.mrb[0].mxu0
    %v978 = vadd.f32 %v137, %v977
    %v979 = vpop.f32.mrb[0].mxu0
    %v980 = vadd.f32 %v137, %v979
    %981 = vmatprep.mubr.f32.mxu0 0.0
    %982 = vmatmul.mubr.f32.gmra.mrb[0].mxu0 %v287
    %v983 = vpop.f32.mrb[0].mxu0
    %v984 = vadd.f32 %v142, %v983
    %v985 = vpop.f32.mrb[0].mxu0
    %v986 = vadd.f32 %v142, %v985
    %987 = vmatprep.mubr.f32.mxu0 0.0
    %988 = vmatmul.mubr.f32.gmra.mrb[0].mxu0 %v290
    %v989 = vpop.f32.mrb[0].mxu0
    %v990 = vadd.f32 %v147, %v989
    %v991 = vpop.f32.mrb[0].mxu0
    %v992 = vadd.f32 %v147, %v991
    %993 = vmatprep.mubr.f32.mxu0 0.0
    %994 = vmatmul.mubr.f32.gmra.mrb[0].mxu0 %v293
    %v995 = vpop.f32.mrb[0].mxu0
    %v996 = vadd.f32 %v152, %v995
    %v997 = vpop.f32.mrb[0].mxu0
    %v998 = vadd.f32 %v152, %v997
    %999 = vmatprep.mubr.f32.mxu0 0.0
    %1000 = vmatmul.mubr.f32.gmra.mrb[0].mxu0 %v296
    %v1001 = vpop.f32.mrb[0].mxu0
    %v1002 = vadd.f32 %v157, %v1001
    %v1003 = vpop.f32.mrb[0].mxu0
    %v1004 = vadd.f32 %v157, %v1003
    %1005 = vmatprep.mubr.f32.mxu0 0.0
    %1006 = vmatmul.mubr.f32.gmra.mrb[0].mxu0 %v299
    %v1007 = vpop.f32.mrb[0].mxu0
    %v1008 = vadd.f32 %v162, %v1007
    %v1009 = vpop.f32.mrb[0].mxu0
    %v1010 = vadd.f32 %v162, %v1009
    %1011 = vmatprep.mubr.f32.mxu0 0.0
    %1012 = vmatmul.mubr.f32.gmra.mrb[0].mxu0 %v302
    %v1013 = vpop.f32.mrb[0].mxu0
    %v1014 = vadd.f32 %v167, %v1013
    %v1015 = vpop.f32.mrb[0].mxu0
    %v1016 = vadd.f32 %v167, %v1015
    %1017 = vmatprep.mubr.f32.mxu0 0.0
    %1018 = vmatmul.mubr.f32.gmra.mrb[0].mxu0 %v305
    %v1019 = vpop.f32.mrb[0].mxu0
    %v1020 = vadd.f32 %v172, %v1019
    %v1021 = vpop.f32.mrb[0].mxu0
    %v1022 = vadd.f32 %v172, %v1021
    %1023 = vmatprep.mubr.f32.mxu0 0.0
    %1024 = vmatmul.mubr.f32.gmra.mrb[0].mxu0 %v308
    %v1025 = vpop.f32.mrb[0].mxu0
    %v1026 = vadd.f32 %v177, %v1025
    %v1027 = vpop.f32.mrb[0].mxu0
    %v1028 = vadd.f32 %v177, %v1027
    %1029 = vmatprep.mubr.f32.mxu0 0.0
    %1030 = vmatmul.mubr.f32.gmra.mrb[0].mxu0 %v311
    %v1031 = vpop.f32.mrb[0].mxu0
    %v1032 = vadd.f32 %v182, %v1031
    %v1033 = vpop.f32.mrb[0].mxu0
    %v1034 = vadd.f32 %v182, %v1033
    %1035 = vmatprep.mubr.f32.mxu0 0.0
    %1036 = vmatmul.mubr.f32.gmra.mrb[0].mxu0 %v314
    %v1037 = vpop.f32.mrb[0].mxu0
    %v1038 = vadd.f32 %v187, %v1037
    %v1039 = vpop.f32.mrb[0].mxu0
    %v1040 = vadd.f32 %v187, %v1039
    %1041 = vmatprep.mubr.f32.mxu0 0.0
    %1042 = vmatmul.mubr.f32.gmra.mrb[0].mxu0 %v317
    %v1043 = vpop.f32.mrb[0].mxu0
    %v1044 = vadd.f32 %v192, %v1043
    %v1045 = vpop.f32.mrb[0].mxu0
    %v1046 = vadd.f32 %v192, %v1045
    %1047 = vmatprep.mubr.f32.mxu0 0.0
    %1048 = vmatmul.mubr.f32.gmra.mrb[0].mxu0 %v320
    %v1049 = vpop.f32.mrb[0].mxu0
    %v1050 = vadd.f32 %v197, %v1049
    %v1051 = vpop.f32.mrb[0].mxu0
    %v1052 = vadd.f32 %v197, %v1051
    %1053 = vmatprep.mubr.f32.mxu0 0.0
    %1054 = vmatmul.mubr.f32.gmra.mrb[0].mxu0 %v323
    %v1055 = vpop.f32.mrb[0].mxu0
    %v1056 = vadd.f32 %v202, %v1055
    %v1057 = vpop.f32.mrb[0].mxu0
    %v1058 = vadd.f32 %v202, %v1057
    %1059 = vmatprep.mubr.f32.mxu0 0.0
    %1060 = vmatmul.mubr.f32.gmra.mrb[0].mxu0 %v326
    %v1061 = vpop.f32.mrb[0].mxu0
    %v1062 = vadd.f32 %v207, %v1061
    %v1063 = vpop.f32.mrb[0].mxu0
    %v1064 = vadd.f32 %v207, %v1063
    %1065 = vmatprep.mubr.f32.mxu0 0.0
    %1066 = vmatmul.mubr.f32.gmra.mrb[0].mxu0 %v329
    %v1067 = vpop.f32.mrb[0].mxu0
    %v1068 = vadd.f32 %v212, %v1067
    %v1069 = vpop.f32.mrb[0].mxu0
    %v1070 = vadd.f32 %v212, %v1069
    %1071 = vmatprep.mubr.f32.mxu0 0.0
    %1072 = vmatmul.mubr.f32.gmra.mrb[0].mxu0 %v332
    %v1073 = vpop.f32.mrb[0].mxu0
    %v1074 = vadd.f32 %v217, %v1073
    %v1075 = vpop.f32.mrb[0].mxu0
    %v1076 = vadd.f32 %v217, %v1075
    %1077 = vmatprep.mubr.f32.mxu0 0.0
    %1078 = vmatmul.mubr.f32.gmra.mrb[0].mxu0 %v335
    %v1079 = vpop.f32.mrb[0].mxu0
    %v1080 = vadd.f32 %v222, %v1079
    %v1081 = vpop.f32.mrb[0].mxu0
    %v1082 = vadd.f32 %v222, %v1081
    %1083 = vmatprep.mubr.f32.mxu0 0.0
    %1084 = vmatmul.mubr.f32.gmra.mrb[0].mxu0 %v338
    %v1085 = vpop.f32.mrb[0].mxu0
    %v1086 = vadd.f32 %v227, %v1085
    %v1087 = vpop.f32.mrb[0].mxu0
    %v1088 = vadd.f32 %v227, %v1087
    %1089 = vmatprep.mubr.f32.mxu0 0.0
    %1090 = vmatmul.mubr.f32.gmra.mrb[0].mxu0 %v341
    %v1091 = vpop.f32.mrb[0].mxu0
    %v1092 = vadd.f32 %v232, %v1091
    %v1093 = vpop.f32.mrb[0].mxu0
    %v1094 = vadd.f32 %v232, %v1093
    %1095 = vmatprep.mubr.f32.mxu0 0.0
    %1096 = vmatmul.mubr.f32.gmra.mrb[0].mxu0 %v344
    %v1097 = vpop.f32.mrb[0].mxu0
    %v1098 = vadd.f32 %v237, %v1097
    %v1099 = vpop.f32.mrb[0].mxu0
    %v1100 = vadd.f32 %v237, %v1099
    %1101 = vmatprep.mubr.f32.mxu0 0.0
    %1102 = vmatmul.mubr.f32.gmra.mrb[0].mxu0 %v347
    %v1103 = vpop.f32.mrb[0].mxu0
    %v1104 = vadd.f32 %v242, %v1103
    %v1105 = vpop.f32.mrb[0].mxu0
    %v1106 = vadd.f32 %v242, %v1105
    %1107 = vmatprep.mubr.f32.mxu0 0.0
    %1108 = vmatmul.mubr.f32.gmra.mrb[0].mxu0 %v350
    %v1109 = vpop.f32.mrb[0].mxu0
    %v1110 = vadd.f32 %v247, %v1109
    %v1111 = vpop.f32.mrb[0].mxu0
    %v1112 = vadd.f32 %v247, %v1111
    %1113 = vmatprep.mubr.f32.mxu0 0.0
    %1114 = vmatmul.mubr.f32.gmra.mrb[0].mxu0 %v353
    %v1115 = vpop.f32.mrb[0].mxu0
    %v1116 = vadd.f32 %v252, %v1115
    %v1117 = vpop.f32.mrb[0].mxu0
    %v1118 = vadd.f32 %v252, %v1117
    %1119 = vmatprep.mubr.f32.mxu0 0.0
    %1120 = vmatmul.mubr.f32.gmra.mrb[0].mxu0 %v356
    %v1121 = vpop.f32.mrb[0].mxu0
    %v1122 = vadd.f32 %v257, %v1121
    %v1123 = vpop.f32.mrb[0].mxu0
    %v1124 = vadd.f32 %v257, %v1123
    %1125 = vmatprep.mubr.f32.mxu0 0.0
    %1126 = vmatmul.mubr.f32.gmra.mrb[0].mxu0 %v359
    %v1127 = vpop.f32.mrb[0].mxu0
    %v1128 = vadd.f32 %v262, %v1127
    %v1129 = vpop.f32.mrb[0].mxu0
    %v1130 = vadd.f32 %v262, %v1129
    %1131 = vdwg.mxu0
    %1132 = vmatprep.subr.mxu0 0.0
    %1133 = vmatpush1.msra.mxu0 %v39
    %1134 = vmatprep.subr.mxu0 0.0
    %1135 = vmatpush1.msra.mxu0 0.0
    %1136 = vmatprep.subr.mxu0 0.0
    %1137 = vmatpush1.msra.mxu0 0.0
    %1138 = vmatprep.subr.mxu0 0.0
    %1139 = vmatpush1.msra.mxu0 0.0
    %1140 = vmatprep.subr.mxu0 0.0
    %1141 = vmatpush1.msra.mxu0 0.0
    %1142 = vmatprep.subr.mxu0 0.0
    %1143 = vmatpush1.msra.mxu0 0.0
    %1144 = vmatprep.subr.mxu0 0.0
    %1145 = vmatpush1.msra.mxu0 0.0
    %1146 = vmatprep.subr.mxu0 0.0
    %1147 = vmatpush1.msra.mxu0 0.0
    %1148 = vmatprep.subr.mxu0 0.0
    %1149 = vmatpush1.msra.mxu0 0.0
    %1150 = vmatprep.subr.mxu0 0.0
    %1151 = vmatpush1.msra.mxu0 0.0
    %1152 = vmatprep.subr.mxu0 0.0
    %1153 = vmatpush1.msra.mxu0 0.0
    %1154 = vmatprep.subr.mxu0 0.0
    %1155 = vmatpush1.msra.mxu0 0.0
    %1156 = vmatprep.subr.mxu0 0.0
    %1157 = vmatpush1.msra.mxu0 0.0
    %1158 = vmatprep.subr.mxu0 0.0
    %1159 = vmatpush1.msra.mxu0 0.0
    %1160 = vmatprep.subr.mxu0 0.0
    %1161 = vmatpush1.msra.mxu0 0.0
    %1162 = vmatprep.subr.mxu0 0.0
    %1163 = vmatpush1.msra.mxu0 0.0
    %1164 = vmatprep.subr.mxu0 0.0
    %1165 = vmatpush1.msra.mxu0 0.0
    %1166 = vmatprep.subr.mxu0 0.0
    %1167 = vmatpush1.msra.mxu0 0.0
    %1168 = vmatprep.subr.mxu0 0.0
    %1169 = vmatpush1.msra.mxu0 0.0
    %1170 = vmatprep.subr.mxu0 0.0
    %1171 = vmatpush1.msra.mxu0 0.0
    %1172 = vmatprep.subr.mxu0 0.0
    %1173 = vmatpush1.msra.mxu0 0.0
    %1174 = vmatprep.subr.mxu0 0.0
    %1175 = vmatpush1.msra.mxu0 0.0
    %1176 = vmatprep.subr.mxu0 0.0
    %1177 = vmatpush1.msra.mxu0 0.0
    %1178 = vmatprep.subr.mxu0 0.0
    %1179 = vmatpush1.msra.mxu0 0.0
    %1180 = vmatprep.subr.mxu0 0.0
    %1181 = vmatpush1.msra.mxu0 0.0
    %1182 = vmatprep.subr.mxu0 0.0
    %1183 = vmatpush1.msra.mxu0 0.0
    %1184 = vmatprep.subr.mxu0 0.0
    %1185 = vmatpush1.msra.mxu0 0.0
    %1186 = vmatprep.subr.mxu0 0.0
    %1187 = vmatpush1.msra.mxu0 0.0
    %1188 = vmatprep.subr.mxu0 0.0
    %1189 = vmatpush1.msra.mxu0 0.0
    %1190 = vmatprep.subr.mxu0 0.0
    %1191 = vmatpush1.msra.mxu0 0.0
    %1192 = vmatprep.subr.mxu0 0.0
    %1193 = vmatpush1.msra.mxu0 0.0
    %1194 = vmatprep.subr.mxu0 0.0
    %1195 = vmatpush1.msra.mxu0 0.0
    %1196 = vmatprep.mubr.f32.mxu0 0.0
    %1197 = vmatmul.mubr.f32.gmra.mrb[0].mxu0 %v266
    %v1198 = vpop.f32.mrb[0].mxu0
    %v1199 = vadd.f32 %v107, %v1198
    %v1200 = vpop.f32.mrb[0].mxu0
    %1201 = vmatprep.mubr.f32.mxu0 0.0
    %1202 = vmatmul.mubr.f32.gmra.mrb[0].mxu0 %v269
    %v1203 = vpop.f32.mrb[0].mxu0
    %v1204 = vadd.f32 %v112, %v1203
    %v1205 = vpop.f32.mrb[0].mxu0
    %1206 = vmatprep.mubr.f32.mxu0 0.0
    %1207 = vmatmul.mubr.f32.gmra.mrb[0].mxu0 %v272
    %v1208 = vpop.f32.mrb[0].mxu0
    %v1209 = vadd.f32 %v117, %v1208
    %v1210 = vpop.f32.mrb[0].mxu0
    %1211 = vmatprep.mubr.f32.mxu0 0.0
    %1212 = vmatmul.mubr.f32.gmra.mrb[0].mxu0 %v275
    %v1213 = vpop.f32.mrb[0].mxu0
    %v1214 = vadd.f32 %v122, %v1213
    %v1215 = vpop.f32.mrb[0].mxu0
    %1216 = vmatprep.mubr.f32.mxu0 0.0
    %1217 = vmatmul.mubr.f32.gmra.mrb[0].mxu0 %v278
    %v1218 = vpop.f32.mrb[0].mxu0
    %v1219 = vadd.f32 %v127, %v1218
    %v1220 = vpop.f32.mrb[0].mxu0
    %1221 = vmatprep.mubr.f32.mxu0 0.0
    %1222 = vmatmul.mubr.f32.gmra.mrb[0].mxu0 %v281
    %v1223 = vpop.f32.mrb[0].mxu0
    %v1224 = vadd.f32 %v132, %v1223
    %v1225 = vpop.f32.mrb[0].mxu0
    %1226 = vmatprep.mubr.f32.mxu0 0.0
    %1227 = vmatmul.mubr.f32.gmra.mrb[0].mxu0 %v284
    %v1228 = vpop.f32.mrb[0].mxu0
    %v1229 = vadd.f32 %v137, %v1228
    %v1230 = vpop.f32.mrb[0].mxu0
    %1231 = vmatprep.mubr.f32.mxu0 0.0
    %1232 = vmatmul.mubr.f32.gmra.mrb[0].mxu0 %v287
    %v1233 = vpop.f32.mrb[0].mxu0
    %v1234 = vadd.f32 %v142, %v1233
    %v1235 = vpop.f32.mrb[0].mxu0
    %1236 = vmatprep.mubr.f32.mxu0 0.0
    %1237 = vmatmul.mubr.f32.gmra.mrb[0].mxu0 %v290
    %v1238 = vpop.f32.mrb[0].mxu0
    %v1239 = vadd.f32 %v147, %v1238
    %v1240 = vpop.f32.mrb[0].mxu0
    %1241 = vmatprep.mubr.f32.mxu0 0.0
    %1242 = vmatmul.mubr.f32.gmra.mrb[0].mxu0 %v293
    %v1243 = vpop.f32.mrb[0].mxu0
    %v1244 = vadd.f32 %v152, %v1243
    %v1245 = vpop.f32.mrb[0].mxu0
    %1246 = vmatprep.mubr.f32.mxu0 0.0
    %1247 = vmatmul.mubr.f32.gmra.mrb[0].mxu0 %v296
    %v1248 = vpop.f32.mrb[0].mxu0
    %v1249 = vadd.f32 %v157, %v1248
    %v1250 = vpop.f32.mrb[0].mxu0
    %1251 = vmatprep.mubr.f32.mxu0 0.0
    %1252 = vmatmul.mubr.f32.gmra.mrb[0].mxu0 %v299
    %v1253 = vpop.f32.mrb[0].mxu0
    %v1254 = vadd.f32 %v162, %v1253
    %v1255 = vpop.f32.mrb[0].mxu0
    %1256 = vmatprep.mubr.f32.mxu0 0.0
    %1257 = vmatmul.mubr.f32.gmra.mrb[0].mxu0 %v302
    %v1258 = vpop.f32.mrb[0].mxu0
    %v1259 = vadd.f32 %v167, %v1258
    %v1260 = vpop.f32.mrb[0].mxu0
    %1261 = vmatprep.mubr.f32.mxu0 0.0
    %1262 = vmatmul.mubr.f32.gmra.mrb[0].mxu0 %v305
    %v1263 = vpop.f32.mrb[0].mxu0
    %v1264 = vadd.f32 %v172, %v1263
    %v1265 = vpop.f32.mrb[0].mxu0
    %1266 = vmatprep.mubr.f32.mxu0 0.0
    %1267 = vmatmul.mubr.f32.gmra.mrb[0].mxu0 %v308
    %v1268 = vpop.f32.mrb[0].mxu0
    %v1269 = vadd.f32 %v177, %v1268
    %v1270 = vpop.f32.mrb[0].mxu0
    %1271 = vmatprep.mubr.f32.mxu0 0.0
    %1272 = vmatmul.mubr.f32.gmra.mrb[0].mxu0 %v311
    %v1273 = vpop.f32.mrb[0].mxu0
    %v1274 = vadd.f32 %v182, %v1273
    %v1275 = vpop.f32.mrb[0].mxu0
    %1276 = vmatprep.mubr.f32.mxu0 0.0
    %1277 = vmatmul.mubr.f32.gmra.mrb[0].mxu0 %v314
    %v1278 = vpop.f32.mrb[0].mxu0
    %v1279 = vadd.f32 %v187, %v1278
    %v1280 = vpop.f32.mrb[0].mxu0
    %1281 = vmatprep.mubr.f32.mxu0 0.0
    %1282 = vmatmul.mubr.f32.gmra.mrb[0].mxu0 %v317
    %v1283 = vpop.f32.mrb[0].mxu0
    %v1284 = vadd.f32 %v192, %v1283
    %v1285 = vpop.f32.mrb[0].mxu0
    %1286 = vmatprep.mubr.f32.mxu0 0.0
    %1287 = vmatmul.mubr.f32.gmra.mrb[0].mxu0 %v320
    %v1288 = vpop.f32.mrb[0].mxu0
    %v1289 = vadd.f32 %v197, %v1288
    %v1290 = vpop.f32.mrb[0].mxu0
    %1291 = vmatprep.mubr.f32.mxu0 0.0
    %1292 = vmatmul.mubr.f32.gmra.mrb[0].mxu0 %v323
    %v1293 = vpop.f32.mrb[0].mxu0
    %v1294 = vadd.f32 %v202, %v1293
    %v1295 = vpop.f32.mrb[0].mxu0
    %1296 = vmatprep.mubr.f32.mxu0 0.0
    %1297 = vmatmul.mubr.f32.gmra.mrb[0].mxu0 %v326
    %v1298 = vpop.f32.mrb[0].mxu0
    %v1299 = vadd.f32 %v207, %v1298
    %v1300 = vpop.f32.mrb[0].mxu0
    %1301 = vmatprep.mubr.f32.mxu0 0.0
    %1302 = vmatmul.mubr.f32.gmra.mrb[0].mxu0 %v329
    %v1303 = vpop.f32.mrb[0].mxu0
    %v1304 = vadd.f32 %v212, %v1303
    %v1305 = vpop.f32.mrb[0].mxu0
    %1306 = vmatprep.mubr.f32.mxu0 0.0
    %1307 = vmatmul.mubr.f32.gmra.mrb[0].mxu0 %v332
    %v1308 = vpop.f32.mrb[0].mxu0
    %v1309 = vadd.f32 %v217, %v1308
    %v1310 = vpop.f32.mrb[0].mxu0
    %1311 = vmatprep.mubr.f32.mxu0 0.0
    %1312 = vmatmul.mubr.f32.gmra.mrb[0].mxu0 %v335
    %v1313 = vpop.f32.mrb[0].mxu0
    %v1314 = vadd.f32 %v222, %v1313
    %v1315 = vpop.f32.mrb[0].mxu0
    %1316 = vmatprep.mubr.f32.mxu0 0.0
    %1317 = vmatmul.mubr.f32.gmra.mrb[0].mxu0 %v338
    %v1318 = vpop.f32.mrb[0].mxu0
    %v1319 = vadd.f32 %v227, %v1318
    %v1320 = vpop.f32.mrb[0].mxu0
    %1321 = vmatprep.mubr.f32.mxu0 0.0
    %1322 = vmatmul.mubr.f32.gmra.mrb[0].mxu0 %v341
    %v1323 = vpop.f32.mrb[0].mxu0
    %v1324 = vadd.f32 %v232, %v1323
    %v1325 = vpop.f32.mrb[0].mxu0
    %1326 = vmatprep.mubr.f32.mxu0 0.0
    %1327 = vmatmul.mubr.f32.gmra.mrb[0].mxu0 %v344
    %v1328 = vpop.f32.mrb[0].mxu0
    %v1329 = vadd.f32 %v237, %v1328
    %v1330 = vpop.f32.mrb[0].mxu0
    %1331 = vmatprep.mubr.f32.mxu0 0.0
    %1332 = vmatmul.mubr.f32.gmra.mrb[0].mxu0 %v347
    %v1333 = vpop.f32.mrb[0].mxu0
    %v1334 = vadd.f32 %v242, %v1333
    %v1335 = vpop.f32.mrb[0].mxu0
    %1336 = vmatprep.mubr.f32.mxu0 0.0
    %1337 = vmatmul.mubr.f32.gmra.mrb[0].mxu0 %v350
    %v1338 = vpop.f32.mrb[0].mxu0
    %v1339 = vadd.f32 %v247, %v1338
    %v1340 = vpop.f32.mrb[0].mxu0
    %1341 = vmatprep.mubr.f32.mxu0 0.0
    %1342 = vmatmul.mubr.f32.gmra.mrb[0].mxu0 %v353
    %v1343 = vpop.f32.mrb[0].mxu0
    %v1344 = vadd.f32 %v252, %v1343
    %v1345 = vpop.f32.mrb[0].mxu0
    %1346 = vmatprep.mubr.f32.mxu0 0.0
    %1347 = vmatmul.mubr.f32.gmra.mrb[0].mxu0 %v356
    %v1348 = vpop.f32.mrb[0].mxu0
    %v1349 = vadd.f32 %v257, %v1348
    %v1350 = vpop.f32.mrb[0].mxu0
    %1351 = vmatprep.mubr.f32.mxu0 0.0
    %1352 = vmatmul.mubr.f32.gmra.mrb[0].mxu0 %v359
    %v1353 = vpop.f32.mrb[0].mxu0
    %v1354 = vadd.f32 %v262, %v1353
    %v1355 = vpop.f32.mrb[0].mxu0
    %1356 = vdwg.mxu0
    %v1357 = vmax.f32 %v428, 0.0
    %v1358 = vmax.f32 %v430, 0.0
    %v1359 = vmax.f32 %v685, 0.0
    %v1360 = vmax.f32 %v687, 0.0
    %v1361 = vmax.f32 %v942, 0.0
    %v1362 = vmax.f32 %v944, 0.0
    %v1363 = vmax.f32 %v1199, 0.0
    %v1364 = vmax.f32 %v434, 0.0
    %v1365 = vmax.f32 %v436, 0.0
    %v1366 = vmax.f32 %v691, 0.0
    %v1367 = vmax.f32 %v693, 0.0
    %v1368 = vmax.f32 %v948, 0.0
    %v1369 = vmax.f32 %v950, 0.0
    %v1370 = vmax.f32 %v1204, 0.0
    %v1371 = vmax.f32 %v440, 0.0
    %v1372 = vmax.f32 %v442, 0.0
    %v1373 = vmax.f32 %v697, 0.0
    %v1374 = vmax.f32 %v699, 0.0
    %v1375 = vmax.f32 %v954, 0.0
    %v1376 = vmax.f32 %v956, 0.0
    %v1377 = vmax.f32 %v1209, 0.0
    %v1378 = vmax.f32 %v446, 0.0
    %v1379 = vmax.f32 %v448, 0.0
    %v1380 = vmax.f32 %v703, 0.0
    %v1381 = vmax.f32 %v705, 0.0
    %v1382 = vmax.f32 %v960, 0.0
    %v1383 = vmax.f32 %v962, 0.0
    %v1384 = vmax.f32 %v1214, 0.0
    %v1385 = vmax.f32 %v452, 0.0
    %v1386 = vmax.f32 %v454, 0.0
    %v1387 = vmax.f32 %v709, 0.0
    %v1388 = vmax.f32 %v711, 0.0
    %v1389 = vmax.f32 %v966, 0.0
    %v1390 = vmax.f32 %v968, 0.0
    %v1391 = vmax.f32 %v1219, 0.0
    %v1392 = vmax.f32 %v458, 0.0
    %v1393 = vmax.f32 %v460, 0.0
    %v1394 = vmax.f32 %v715, 0.0
    %v1395 = vmax.f32 %v717, 0.0
    %v1396 = vmax.f32 %v972, 0.0
    %v1397 = vmax.f32 %v974, 0.0
    %v1398 = vmax.f32 %v1224, 0.0
    %v1399 = vmax.f32 %v464, 0.0
    %v1400 = vmax.f32 %v466, 0.0
    %v1401 = vmax.f32 %v721, 0.0
    %v1402 = vmax.f32 %v723, 0.0
    %v1403 = vmax.f32 %v978, 0.0
    %v1404 = vmax.f32 %v980, 0.0
    %v1405 = vmax.f32 %v1229, 0.0
    %v1406 = vmax.f32 %v470, 0.0
    %v1407 = vmax.f32 %v472, 0.0
    %v1408 = vmax.f32 %v727, 0.0
    %v1409 = vmax.f32 %v729, 0.0
    %v1410 = vmax.f32 %v984, 0.0
    %v1411 = vmax.f32 %v986, 0.0
    %v1412 = vmax.f32 %v1234, 0.0
    %v1413 = vmax.f32 %v476, 0.0
    %v1414 = vmax.f32 %v478, 0.0
    %v1415 = vmax.f32 %v733, 0.0
    %v1416 = vmax.f32 %v735, 0.0
    %v1417 = vmax.f32 %v990, 0.0
    %v1418 = vmax.f32 %v992, 0.0
    %v1419 = vmax.f32 %v1239, 0.0
    %v1420 = vmax.f32 %v482, 0.0
    %v1421 = vmax.f32 %v484, 0.0
    %v1422 = vmax.f32 %v739, 0.0
    %v1423 = vmax.f32 %v741, 0.0
    %v1424 = vmax.f32 %v996, 0.0
    %v1425 = vmax.f32 %v998, 0.0
    %v1426 = vmax.f32 %v1244, 0.0
    %v1427 = vmax.f32 %v488, 0.0
    %v1428 = vmax.f32 %v490, 0.0
    %v1429 = vmax.f32 %v745, 0.0
    %v1430 = vmax.f32 %v747, 0.0
    %v1431 = vmax.f32 %v1002, 0.0
    %v1432 = vmax.f32 %v1004, 0.0
    %v1433 = vmax.f32 %v1249, 0.0
    %v1434 = vmax.f32 %v494, 0.0
    %v1435 = vmax.f32 %v496, 0.0
    %v1436 = vmax.f32 %v751, 0.0
    %v1437 = vmax.f32 %v753, 0.0
    %v1438 = vmax.f32 %v1008, 0.0
    %v1439 = vmax.f32 %v1010, 0.0
    %v1440 = vmax.f32 %v1254, 0.0
    %v1441 = vmax.f32 %v500, 0.0
    %v1442 = vmax.f32 %v502, 0.0
    %v1443 = vmax.f32 %v757, 0.0
    %v1444 = vmax.f32 %v759, 0.0
    %v1445 = vmax.f32 %v1014, 0.0
    %v1446 = vmax.f32 %v1016, 0.0
    %v1447 = vmax.f32 %v1259, 0.0
    %v1448 = vmax.f32 %v506, 0.0
    %v1449 = vmax.f32 %v508, 0.0
    %v1450 = vmax.f32 %v763, 0.0
    %v1451 = vmax.f32 %v765, 0.0
    %v1452 = vmax.f32 %v1020, 0.0
    %v1453 = vmax.f32 %v1022, 0.0
    %v1454 = vmax.f32 %v1264, 0.0
    %v1455 = vmax.f32 %v512, 0.0
    %v1456 = vmax.f32 %v514, 0.0
    %v1457 = vmax.f32 %v769, 0.0
    %v1458 = vmax.f32 %v771, 0.0
    %v1459 = vmax.f32 %v1026, 0.0
    %v1460 = vmax.f32 %v1028, 0.0
    %v1461 = vmax.f32 %v1269, 0.0
    %v1462 = vmax.f32 %v518, 0.0
    %v1463 = vmax.f32 %v520, 0.0
    %v1464 = vmax.f32 %v775, 0.0
    %v1465 = vmax.f32 %v777, 0.0
    %v1466 = vmax.f32 %v1032, 0.0
    %v1467 = vmax.f32 %v1034, 0.0
    %v1468 = vmax.f32 %v1274, 0.0
    %v1469 = vmax.f32 %v524, 0.0
    %v1470 = vmax.f32 %v526, 0.0
    %v1471 = vmax.f32 %v781, 0.0
    %v1472 = vmax.f32 %v783, 0.0
    %v1473 = vmax.f32 %v1038, 0.0
    %v1474 = vmax.f32 %v1040, 0.0
    %v1475 = vmax.f32 %v1279, 0.0
    %v1476 = vmax.f32 %v530, 0.0
    %v1477 = vmax.f32 %v532, 0.0
    %v1478 = vmax.f32 %v787, 0.0
    %v1479 = vmax.f32 %v789, 0.0
    %v1480 = vmax.f32 %v1044, 0.0
    %v1481 = vmax.f32 %v1046, 0.0
    %v1482 = vmax.f32 %v1284, 0.0
    %v1483 = vmax.f32 %v536, 0.0
    %v1484 = vmax.f32 %v538, 0.0
    %v1485 = vmax.f32 %v793, 0.0
    %v1486 = vmax.f32 %v795, 0.0
    %v1487 = vmax.f32 %v1050, 0.0
    %v1488 = vmax.f32 %v1052, 0.0
    %v1489 = vmax.f32 %v1289, 0.0
    %v1490 = vmax.f32 %v542, 0.0
    %v1491 = vmax.f32 %v544, 0.0
    %v1492 = vmax.f32 %v799, 0.0
    %v1493 = vmax.f32 %v801, 0.0
    %v1494 = vmax.f32 %v1056, 0.0
    %v1495 = vmax.f32 %v1058, 0.0
    %v1496 = vmax.f32 %v1294, 0.0
    %v1497 = vmax.f32 %v548, 0.0
    %v1498 = vmax.f32 %v550, 0.0
    %v1499 = vmax.f32 %v805, 0.0
    %v1500 = vmax.f32 %v807, 0.0
    %v1501 = vmax.f32 %v1062, 0.0
    %v1502 = vmax.f32 %v1064, 0.0
    %v1503 = vmax.f32 %v1299, 0.0
    %v1504 = vmax.f32 %v554, 0.0
    %v1505 = vmax.f32 %v556, 0.0
    %v1506 = vmax.f32 %v811, 0.0
    %v1507 = vmax.f32 %v813, 0.0
    %v1508 = vmax.f32 %v1068, 0.0
    %v1509 = vmax.f32 %v1070, 0.0
    %v1510 = vmax.f32 %v1304, 0.0
    %v1511 = vmax.f32 %v560, 0.0
    %v1512 = vmax.f32 %v562, 0.0
    %v1513 = vmax.f32 %v817, 0.0
    %v1514 = vmax.f32 %v819, 0.0
    %v1515 = vmax.f32 %v1074, 0.0
    %v1516 = vmax.f32 %v1076, 0.0
    %v1517 = vmax.f32 %v1309, 0.0
    %v1518 = vmax.f32 %v566, 0.0
    %v1519 = vmax.f32 %v568, 0.0
    %v1520 = vmax.f32 %v823, 0.0
    %v1521 = vmax.f32 %v825, 0.0
    %v1522 = vmax.f32 %v1080, 0.0
    %v1523 = vmax.f32 %v1082, 0.0
    %v1524 = vmax.f32 %v1314, 0.0
    %v1525 = vmax.f32 %v572, 0.0
    %v1526 = vmax.f32 %v574, 0.0
    %v1527 = vmax.f32 %v829, 0.0
    %v1528 = vmax.f32 %v831, 0.0
    %v1529 = vmax.f32 %v1086, 0.0
    %v1530 = vmax.f32 %v1088, 0.0
    %v1531 = vmax.f32 %v1319, 0.0
    %v1532 = vmax.f32 %v578, 0.0
    %v1533 = vmax.f32 %v580, 0.0
    %v1534 = vmax.f32 %v835, 0.0
    %v1535 = vmax.f32 %v837, 0.0
    %v1536 = vmax.f32 %v1092, 0.0
    %v1537 = vmax.f32 %v1094, 0.0
    %v1538 = vmax.f32 %v1324, 0.0
    %v1539 = vmax.f32 %v584, 0.0
    %v1540 = vmax.f32 %v586, 0.0
    %v1541 = vmax.f32 %v841, 0.0
    %v1542 = vmax.f32 %v843, 0.0
    %v1543 = vmax.f32 %v1098, 0.0
    %v1544 = vmax.f32 %v1100, 0.0
    %v1545 = vmax.f32 %v1329, 0.0
    %v1546 = vmax.f32 %v590, 0.0
    %v1547 = vmax.f32 %v592, 0.0
    %v1548 = vmax.f32 %v847, 0.0
    %v1549 = vmax.f32 %v849, 0.0
    %v1550 = vmax.f32 %v1104, 0.0
    %v1551 = vmax.f32 %v1106, 0.0
    %v1552 = vmax.f32 %v1334, 0.0
    %v1553 = vmax.f32 %v596, 0.0
    %v1554 = vmax.f32 %v598, 0.0
    %v1555 = vmax.f32 %v853, 0.0
    %v1556 = vmax.f32 %v855, 0.0
    %v1557 = vmax.f32 %v1110, 0.0
    %v1558 = vmax.f32 %v1112, 0.0
    %v1559 = vmax.f32 %v1339, 0.0
    %v1560 = vmax.f32 %v602, 0.0
    %v1561 = vmax.f32 %v604, 0.0
    %v1562 = vmax.f32 %v859, 0.0
    %v1563 = vmax.f32 %v861, 0.0
    %v1564 = vmax.f32 %v1116, 0.0
    %v1565 = vmax.f32 %v1118, 0.0
    %v1566 = vmax.f32 %v1344, 0.0
    %v1567 = vmax.f32 %v608, 0.0
    %v1568 = vmax.f32 %v610, 0.0
    %v1569 = vmax.f32 %v865, 0.0
    %v1570 = vmax.f32 %v867, 0.0
    %v1571 = vmax.f32 %v1122, 0.0
    %v1572 = vmax.f32 %v1124, 0.0
    %v1573 = vmax.f32 %v1349, 0.0
    %v1574 = vmax.f32 %v614, 0.0
    %v1575 = vmax.f32 %v616, 0.0
    %v1576 = vmax.f32 %v871, 0.0
    %v1577 = vmax.f32 %v873, 0.0
    %v1578 = vmax.f32 %v1128, 0.0
    %v1579 = vmax.f32 %v1130, 0.0
    %v1580 = vmax.f32 %v1354, 0.0
    %v1581 = vld [vmem:[%s3] sm:$0xff]
    %v1582 = vld [vmem:[%s3 + $0x8] sm:$0xff]
    %v1583 = vld [vmem:[%s3 + $0x10] sm:$0xff]
    %v1584 = vld [vmem:[%s3 + $0x18] sm:$0xff]
    %v1585 = vld [vmem:[%s3 + $0x20] sm:$0xff]
    %v1586 = vld [vmem:[%s3 + $0x28] sm:$0xff]
    %v1587 = vld [vmem:[%s3 + $0x30] sm:$0xff]
    %v1588 = vld [vmem:[%s3 + $0x38] sm:$0xff]
    %v1589 = vld [vmem:[%s3 + $0x40] sm:$0xff]
    %v1590 = vld [vmem:[%s3 + $0x48] sm:$0xff]
    %v1591 = vld [vmem:[%s3 + $0x50] sm:$0xff]
    %v1592 = vld [vmem:[%s3 + $0x58] sm:$0xff]
    %v1593 = vld [vmem:[%s3 + $0x60] sm:$0xff]
    %v1594 = vld [vmem:[%s3 + $0x68] sm:$0xff]
    %v1595 = vld [vmem:[%s3 + $0x70] sm:$0xff]
    %v1596 = vld [vmem:[%s3 + $0x78] sm:$0xff]
    %v1597 = vld [vmem:[%s3 + $0x80] sm:$0xff]
    %v1598 = vld [vmem:[%s3 + $0x88] sm:$0xff]
    %v1599 = vld [vmem:[%s3 + $0x90] sm:$0xff]
    %v1600 = vld [vmem:[%s3 + $0x98] sm:$0xff]
    %v1601 = vld [vmem:[%s3 + $0xa0] sm:$0xff]
    %v1602 = vld [vmem:[%s3 + $0xa8] sm:$0xff]
    %v1603 = vld [vmem:[%s3 + $0xb0] sm:$0xff]
    %v1604 = vld [vmem:[%s3 + $0xb8] sm:$0xff]
    %v1605 = vld [vmem:[%s3 + $0xc0] sm:$0xff]
    %v1606 = vld [vmem:[%s3 + $0xc8] sm:$0xff]
    %v1607 = vld [vmem:[%s3 + $0xd0] sm:$0xff]
    %v1608 = vld [vmem:[%s3 + $0xd8] sm:$0xff]
    %v1609 = vld [vmem:[%s3 + $0xe0] sm:$0xff]
    %v1610 = vld [vmem:[%s3 + $0xe8] sm:$0xff]
    %v1611 = vld [vmem:[%s3 + $0xf0] sm:$0xff]
    %v1612 = vld [vmem:[%s3 + $0xf8] sm:$0xff]
    %v1613 = vld [vmem:[%s4] sm:$0xff]
    %v1614 = vld [vmem:[%s4 + $0x8] sm:$0xff]
    %v1615 = vld [vmem:[%s4 + $0x10] sm:$0xff]
    %v1616 = vld [vmem:[%s4 + $0x18] sm:$0xff]
    %v1617 = vld [vmem:[%s4 + $0x20] sm:$0xff]
    %v1618 = vld [vmem:[%s4 + $0x28] sm:$0xff]
    %v1619 = vld [vmem:[%s4 + $0x30] sm:$0xff]
    %v1620 = vld [vmem:[%s4 + $0x38] sm:$0xff]
    %v1621 = vld [vmem:[%s4 + $0x40] sm:$0xff]
    %v1622 = vld [vmem:[%s4 + $0x48] sm:$0xff]
    %v1623 = vld [vmem:[%s4 + $0x50] sm:$0xff]
    %v1624 = vld [vmem:[%s4 + $0x58] sm:$0xff]
    %v1625 = vld [vmem:[%s4 + $0x60] sm:$0xff]
    %v1626 = vld [vmem:[%s4 + $0x68] sm:$0xff]
    %v1627 = vld [vmem:[%s4 + $0x70] sm:$0xff]
    %v1628 = vld [vmem:[%s4 + $0x78] sm:$0xff]
    %1630 = vset.pattern.permute.xlu0 0
    %1631 = vperm.xlu0 %1630, %v1613
    %v1632 = vpop.permute.xlu0 %1631
    %1635 = vset.pattern.permute.xlu0 0
    %1636 = vperm.xlu0 %1635, %v1614
    %v1637 = vpop.permute.xlu0 %1636
    %1640 = vset.pattern.permute.xlu0 0
    %1641 = vperm.xlu0 %1640, %v1615
    %v1642 = vpop.permute.xlu0 %1641
    %1645 = vset.pattern.permute.xlu0 0
    %1646 = vperm.xlu0 %1645, %v1616
    %v1647 = vpop.permute.xlu0 %1646
    %1650 = vset.pattern.permute.xlu0 0
    %1651 = vperm.xlu0 %1650, %v1617
    %v1652 = vpop.permute.xlu0 %1651
    %1655 = vset.pattern.permute.xlu0 0
    %1656 = vperm.xlu0 %1655, %v1618
    %v1657 = vpop.permute.xlu0 %1656
    %1660 = vset.pattern.permute.xlu0 0
    %1661 = vperm.xlu0 %1660, %v1619
    %v1662 = vpop.permute.xlu0 %1661
    %1665 = vset.pattern.permute.xlu0 0
    %1666 = vperm.xlu0 %1665, %v1620
    %v1667 = vpop.permute.xlu0 %1666
    %1670 = vset.pattern.permute.xlu0 0
    %1671 = vperm.xlu0 %1670, %v1621
    %v1672 = vpop.permute.xlu0 %1671
    %1675 = vset.pattern.permute.xlu0 0
    %1676 = vperm.xlu0 %1675, %v1622
    %v1677 = vpop.permute.xlu0 %1676
    %1680 = vset.pattern.permute.xlu0 0
    %1681 = vperm.xlu0 %1680, %v1623
    %v1682 = vpop.permute.xlu0 %1681
    %1685 = vset.pattern.permute.xlu0 0
    %1686 = vperm.xlu0 %1685, %v1624
    %v1687 = vpop.permute.xlu0 %1686
    %1690 = vset.pattern.permute.xlu0 0
    %1691 = vperm.xlu0 %1690, %v1625
    %v1692 = vpop.permute.xlu0 %1691
    %1695 = vset.pattern.permute.xlu0 0
    %1696 = vperm.xlu0 %1695, %v1626
    %v1697 = vpop.permute.xlu0 %1696
    %1700 = vset.pattern.permute.xlu0 0
    %1701 = vperm.xlu0 %1700, %v1627
    %v1702 = vpop.permute.xlu0 %1701
    %1705 = vset.pattern.permute.xlu0 0
    %1706 = vperm.xlu0 %1705, %v1628
    %v1707 = vpop.permute.xlu0 %1706
    %1709 = vmatprep.subr.mxu0 %v1358
    %1710 = vmatpush1.msra.mxu0 %v1357
    %1711 = vmatprep.subr.mxu0 %v1365
    %1712 = vmatpush1.msra.mxu0 %v1364
    %1713 = vmatprep.subr.mxu0 %v1372
    %1714 = vmatpush1.msra.mxu0 %v1371
    %1715 = vmatprep.subr.mxu0 %v1379
    %1716 = vmatpush1.msra.mxu0 %v1378
    %1717 = vmatprep.subr.mxu0 %v1386
    %1718 = vmatpush1.msra.mxu0 %v1385
    %1719 = vmatprep.subr.mxu0 %v1393
    %1720 = vmatpush1.msra.mxu0 %v1392
    %1721 = vmatprep.subr.mxu0 %v1400
    %1722 = vmatpush1.msra.mxu0 %v1399
    %1723 = vmatprep.subr.mxu0 %v1407
    %1724 = vmatpush1.msra.mxu0 %v1406
    %1725 = vmatprep.subr.mxu0 %v1414
    %1726 = vmatpush1.msra.mxu0 %v1413
    %1727 = vmatprep.subr.mxu0 %v1421
    %1728 = vmatpush1.msra.mxu0 %v1420
    %1729 = vmatprep.subr.mxu0 %v1428
    %1730 = vmatpush1.msra.mxu0 %v1427
    %1731 = vmatprep.subr.mxu0 %v1435
    %1732 = vmatpush1.msra.mxu0 %v1434
    %1733 = vmatprep.subr.mxu0 %v1442
    %1734 = vmatpush1.msra.mxu0 %v1441
    %1735 = vmatprep.subr.mxu0 %v1449
    %1736 = vmatpush1.msra.mxu0 %v1448
    %1737 = vmatprep.subr.mxu0 %v1456
    %1738 = vmatpush1.msra.mxu0 %v1455
    %1739 = vmatprep.subr.mxu0 %v1463
    %1740 = vmatpush1.msra.mxu0 %v1462
    %1741 = vmatprep.subr.mxu0 %v1470
    %1742 = vmatpush1.msra.mxu0 %v1469
    %1743 = vmatprep.subr.mxu0 %v1477
    %1744 = vmatpush1.msra.mxu0 %v1476
    %1745 = vmatprep.subr.mxu0 %v1484
    %1746 = vmatpush1.msra.mxu0 %v1483
    %1747 = vmatprep.subr.mxu0 %v1491
    %1748 = vmatpush1.msra.mxu0 %v1490
    %1749 = vmatprep.subr.mxu0 %v1498
    %1750 = vmatpush1.msra.mxu0 %v1497
    %1751 = vmatprep.subr.mxu0 %v1505
    %1752 = vmatpush1.msra.mxu0 %v1504
    %1753 = vmatprep.subr.mxu0 %v1512
    %1754 = vmatpush1.msra.mxu0 %v1511
    %1755 = vmatprep.subr.mxu0 %v1519
    %1756 = vmatpush1.msra.mxu0 %v1518
    %1757 = vmatprep.subr.mxu0 %v1526
    %1758 = vmatpush1.msra.mxu0 %v1525
    %1759 = vmatprep.subr.mxu0 %v1533
    %1760 = vmatpush1.msra.mxu0 %v1532
    %1761 = vmatprep.subr.mxu0 %v1540
    %1762 = vmatpush1.msra.mxu0 %v1539
    %1763 = vmatprep.subr.mxu0 %v1547
    %1764 = vmatpush1.msra.mxu0 %v1546
    %1765 = vmatprep.subr.mxu0 %v1554
    %1766 = vmatpush1.msra.mxu0 %v1553
    %1767 = vmatprep.subr.mxu0 %v1561
    %1768 = vmatpush1.msra.mxu0 %v1560
    %1769 = vmatprep.subr.mxu0 %v1568
    %1770 = vmatpush1.msra.mxu0 %v1567
    %1771 = vmatprep.subr.mxu0 %v1575
    %1772 = vmatpush1.msra.mxu0 %v1574
    %1773 = vmatprep.mubr.f32.mxu0 %v1582
    %1774 = vmatmul.mubr.f32.gmra.mrb[0].mxu0 %v1581
    %v1775 = vpop.f32.mrb[0].mxu0
    %v1776 = vadd.f32 %v1632, %v1775
    %v1777 = vpop.f32.mrb[0].mxu0
    %v1778 = vadd.f32 %v1632, %v1777
    %1779 = vmatprep.mubr.f32.mxu0 %v1584
    %1780 = vmatmul.mubr.f32.gmra.mrb[0].mxu0 %v1583
    %v1781 = vpop.f32.mrb[0].mxu0
    %v1782 = vadd.f32 %v1637, %v1781
    %v1783 = vpop.f32.mrb[0].mxu0
    %v1784 = vadd.f32 %v1637, %v1783
    %1785 = vmatprep.mubr.f32.mxu0 %v1586
    %1786 = vmatmul.mubr.f32.gmra.mrb[0].mxu0 %v1585
    %v1787 = vpop.f32.mrb[0].mxu0
    %v1788 = vadd.f32 %v1642, %v1787
    %v1789 = vpop.f32.mrb[0].mxu0
    %v1790 = vadd.f32 %v1642, %v1789
    %1791 = vmatprep.mubr.f32.mxu0 %v1588
    %1792 = vmatmul.mubr.f32.gmra.mrb[0].mxu0 %v1587
    %v1793 = vpop.f32.mrb[0].mxu0
    %v1794 = vadd.f32 %v1647, %v1793
    %v1795 = vpop.f32.mrb[0].mxu0
    %v1796 = vadd.f32 %v1647, %v1795
    %1797 = vmatprep.mubr.f32.mxu0 %v1590
    %1798 = vmatmul.mubr.f32.gmra.mrb[0].mxu0 %v1589
    %v1799 = vpop.f32.mrb[0].mxu0
    %v1800 = vadd.f32 %v1652, %v1799
    %v1801 = vpop.f32.mrb[0].mxu0
    %v1802 = vadd.f32 %v1652, %v1801
    %1803 = vmatprep.mubr.f32.mxu0 %v1592
    %1804 = vmatmul.mubr.f32.gmra.mrb[0].mxu0 %v1591
    %v1805 = vpop.f32.mrb[0].mxu0
    %v1806 = vadd.f32 %v1657, %v1805
    %v1807 = vpop.f32.mrb[0].mxu0
    %v1808 = vadd.f32 %v1657, %v1807
    %1809 = vmatprep.mubr.f32.mxu0 %v1594
    %1810 = vmatmul.mubr.f32.gmra.mrb[0].mxu0 %v1593
    %v1811 = vpop.f32.mrb[0].mxu0
    %v1812 = vadd.f32 %v1662, %v1811
    %v1813 = vpop.f32.mrb[0].mxu0
    %v1814 = vadd.f32 %v1662, %v1813
    %1815 = vmatprep.mubr.f32.mxu0 %v1596
    %1816 = vmatmul.mubr.f32.gmra.mrb[0].mxu0 %v1595
    %v1817 = vpop.f32.mrb[0].mxu0
    %v1818 = vadd.f32 %v1667, %v1817
    %v1819 = vpop.f32.mrb[0].mxu0
    %v1820 = vadd.f32 %v1667, %v1819
    %1821 = vmatprep.mubr.f32.mxu0 %v1598
    %1822 = vmatmul.mubr.f32.gmra.mrb[0].mxu0 %v1597
    %v1823 = vpop.f32.mrb[0].mxu0
    %v1824 = vadd.f32 %v1672, %v1823
    %v1825 = vpop.f32.mrb[0].mxu0
    %v1826 = vadd.f32 %v1672, %v1825
    %1827 = vmatprep.mubr.f32.mxu0 %v1600
    %1828 = vmatmul.mubr.f32.gmra.mrb[0].mxu0 %v1599
    %v1829 = vpop.f32.mrb[0].mxu0
    %v1830 = vadd.f32 %v1677, %v1829
    %v1831 = vpop.f32.mrb[0].mxu0
    %v1832 = vadd.f32 %v1677, %v1831
    %1833 = vmatprep.mubr.f32.mxu0 %v1602
    %1834 = vmatmul.mubr.f32.gmra.mrb[0].mxu0 %v1601
    %v1835 = vpop.f32.mrb[0].mxu0
    %v1836 = vadd.f32 %v1682, %v1835
    %v1837 = vpop.f32.mrb[0].mxu0
    %v1838 = vadd.f32 %v1682, %v1837
    %1839 = vmatprep.mubr.f32.mxu0 %v1604
    %1840 = vmatmul.mubr.f32.gmra.mrb[0].mxu0 %v1603
    %v1841 = vpop.f32.mrb[0].mxu0
    %v1842 = vadd.f32 %v1687, %v1841
    %v1843 = vpop.f32.mrb[0].mxu0
    %v1844 = vadd.f32 %v1687, %v1843
    %1845 = vmatprep.mubr.f32.mxu0 %v1606
    %1846 = vmatmul.mubr.f32.gmra.mrb[0].mxu0 %v1605
    %v1847 = vpop.f32.mrb[0].mxu0
    %v1848 = vadd.f32 %v1692, %v1847
    %v1849 = vpop.f32.mrb[0].mxu0
    %v1850 = vadd.f32 %v1692, %v1849
    %1851 = vmatprep.mubr.f32.mxu0 %v1608
    %1852 = vmatmul.mubr.f32.gmra.mrb[0].mxu0 %v1607
    %v1853 = vpop.f32.mrb[0].mxu0
    %v1854 = vadd.f32 %v1697, %v1853
    %v1855 = vpop.f32.mrb[0].mxu0
    %v1856 = vadd.f32 %v1697, %v1855
    %1857 = vmatprep.mubr.f32.mxu0 %v1610
    %1858 = vmatmul.mubr.f32.gmra.mrb[0].mxu0 %v1609
    %v1859 = vpop.f32.mrb[0].mxu0
    %v1860 = vadd.f32 %v1702, %v1859
    %v1861 = vpop.f32.mrb[0].mxu0
    %v1862 = vadd.f32 %v1702, %v1861
    %1863 = vmatprep.mubr.f32.mxu0 %v1612
    %1864 = vmatmul.mubr.f32.gmra.mrb[0].mxu0 %v1611
    %v1865 = vpop.f32.mrb[0].mxu0
    %v1866 = vadd.f32 %v1707, %v1865
    %v1867 = vpop.f32.mrb[0].mxu0
    %v1868 = vadd.f32 %v1707, %v1867
    %1869 = vdwg.mxu0
    %1870 = vmatprep.subr.mxu0 %v1360
    %1871 = vmatpush1.msra.mxu0 %v1359
    %1872 = vmatprep.subr.mxu0 %v1367
    %1873 = vmatpush1.msra.mxu0 %v1366
    %1874 = vmatprep.subr.mxu0 %v1374
    %1875 = vmatpush1.msra.mxu0 %v1373
    %1876 = vmatprep.subr.mxu0 %v1381
    %1877 = vmatpush1.msra.mxu0 %v1380
    %1878 = vmatprep.subr.mxu0 %v1388
    %1879 = vmatpush1.msra.mxu0 %v1387
    %1880 = vmatprep.subr.mxu0 %v1395
    %1881 = vmatpush1.msra.mxu0 %v1394
    %1882 = vmatprep.subr.mxu0 %v1402
    %1883 = vmatpush1.msra.mxu0 %v1401
    %1884 = vmatprep.subr.mxu0 %v1409
    %1885 = vmatpush1.msra.mxu0 %v1408
    %1886 = vmatprep.subr.mxu0 %v1416
    %1887 = vmatpush1.msra.mxu0 %v1415
    %1888 = vmatprep.subr.mxu0 %v1423
    %1889 = vmatpush1.msra.mxu0 %v1422
    %1890 = vmatprep.subr.mxu0 %v1430
    %1891 = vmatpush1.msra.mxu0 %v1429
    %1892 = vmatprep.subr.mxu0 %v1437
    %1893 = vmatpush1.msra.mxu0 %v1436
    %1894 = vmatprep.subr.mxu0 %v1444
    %1895 = vmatpush1.msra.mxu0 %v1443
    %1896 = vmatprep.subr.mxu0 %v1451
    %1897 = vmatpush1.msra.mxu0 %v1450
    %1898 = vmatprep.subr.mxu0 %v1458
    %1899 = vmatpush1.msra.mxu0 %v1457
    %1900 = vmatprep.subr.mxu0 %v1465
    %1901 = vmatpush1.msra.mxu0 %v1464
    %1902 = vmatprep.subr.mxu0 %v1472
    %1903 = vmatpush1.msra.mxu0 %v1471
    %1904 = vmatprep.subr.mxu0 %v1479
    %1905 = vmatpush1.msra.mxu0 %v1478
    %1906 = vmatprep.subr.mxu0 %v1486
    %1907 = vmatpush1.msra.mxu0 %v1485
    %1908 = vmatprep.subr.mxu0 %v1493
    %1909 = vmatpush1.msra.mxu0 %v1492
    %1910 = vmatprep.subr.mxu0 %v1500
    %1911 = vmatpush1.msra.mxu0 %v1499
    %1912 = vmatprep.subr.mxu0 %v1507
    %1913 = vmatpush1.msra.mxu0 %v1506
    %1914 = vmatprep.subr.mxu0 %v1514
    %1915 = vmatpush1.msra.mxu0 %v1513
    %1916 = vmatprep.subr.mxu0 %v1521
    %1917 = vmatpush1.msra.mxu0 %v1520
    %1918 = vmatprep.subr.mxu0 %v1528
    %1919 = vmatpush1.msra.mxu0 %v1527
    %1920 = vmatprep.subr.mxu0 %v1535
    %1921 = vmatpush1.msra.mxu0 %v1534
    %1922 = vmatprep.subr.mxu0 %v1542
    %1923 = vmatpush1.msra.mxu0 %v1541
    %1924 = vmatprep.subr.mxu0 %v1549
    %1925 = vmatpush1.msra.mxu0 %v1548
    %1926 = vmatprep.subr.mxu0 %v1556
    %1927 = vmatpush1.msra.mxu0 %v1555
    %1928 = vmatprep.subr.mxu0 %v1563
    %1929 = vmatpush1.msra.mxu0 %v1562
    %1930 = vmatprep.subr.mxu0 %v1570
    %1931 = vmatpush1.msra.mxu0 %v1569
    %1932 = vmatprep.subr.mxu0 %v1577
    %1933 = vmatpush1.msra.mxu0 %v1576
    %1934 = vmatprep.mubr.f32.mxu0 %v1582
    %1935 = vmatmul.mubr.f32.gmra.mrb[0].mxu0 %v1581
    %v1936 = vpop.f32.mrb[0].mxu0
    %v1937 = vadd.f32 %v1632, %v1936
    %v1938 = vpop.f32.mrb[0].mxu0
    %v1939 = vadd.f32 %v1632, %v1938
    %1940 = vmatprep.mubr.f32.mxu0 %v1584
    %1941 = vmatmul.mubr.f32.gmra.mrb[0].mxu0 %v1583
    %v1942 = vpop.f32.mrb[0].mxu0
    %v1943 = vadd.f32 %v1637, %v1942
    %v1944 = vpop.f32.mrb[0].mxu0
    %v1945 = vadd.f32 %v1637, %v1944
    %1946 = vmatprep.mubr.f32.mxu0 %v1586
    %1947 = vmatmul.mubr.f32.gmra.mrb[0].mxu0 %v1585
    %v1948 = vpop.f32.mrb[0].mxu0
    %v1949 = vadd.f32 %v1642, %v1948
    %v1950 = vpop.f32.mrb[0].mxu0
    %v1951 = vadd.f32 %v1642, %v1950
    %1952 = vmatprep.mubr.f32.mxu0 %v1588
    %1953 = vmatmul.mubr.f32.gmra.mrb[0].mxu0 %v1587
    %v1954 = vpop.f32.mrb[0].mxu0
    %v1955 = vadd.f32 %v1647, %v1954
    %v1956 = vpop.f32.mrb[0].mxu0
    %v1957 = vadd.f32 %v1647, %v1956
    %1958 = vmatprep.mubr.f32.mxu0 %v1590
    %1959 = vmatmul.mubr.f32.gmra.mrb[0].mxu0 %v1589
    %v1960 = vpop.f32.mrb[0].mxu0
    %v1961 = vadd.f32 %v1652, %v1960
    %v1962 = vpop.f32.mrb[0].mxu0
    %v1963 = vadd.f32 %v1652, %v1962
    %1964 = vmatprep.mubr.f32.mxu0 %v1592
    %1965 = vmatmul.mubr.f32.gmra.mrb[0].mxu0 %v1591
    %v1966 = vpop.f32.mrb[0].mxu0
    %v1967 = vadd.f32 %v1657, %v1966
    %v1968 = vpop.f32.mrb[0].mxu0
    %v1969 = vadd.f32 %v1657, %v1968
    %1970 = vmatprep.mubr.f32.mxu0 %v1594
    %1971 = vmatmul.mubr.f32.gmra.mrb[0].mxu0 %v1593
    %v1972 = vpop.f32.mrb[0].mxu0
    %v1973 = vadd.f32 %v1662, %v1972
    %v1974 = vpop.f32.mrb[0].mxu0
    %v1975 = vadd.f32 %v1662, %v1974
    %1976 = vmatprep.mubr.f32.mxu0 %v1596
    %1977 = vmatmul.mubr.f32.gmra.mrb[0].mxu0 %v1595
    %v1978 = vpop.f32.mrb[0].mxu0
    %v1979 = vadd.f32 %v1667, %v1978
    %v1980 = vpop.f32.mrb[0].mxu0
    %v1981 = vadd.f32 %v1667, %v1980
    %1982 = vmatprep.mubr.f32.mxu0 %v1598
    %1983 = vmatmul.mubr.f32.gmra.mrb[0].mxu0 %v1597
    %v1984 = vpop.f32.mrb[0].mxu0
    %v1985 = vadd.f32 %v1672, %v1984
    %v1986 = vpop.f32.mrb[0].mxu0
    %v1987 = vadd.f32 %v1672, %v1986
    %1988 = vmatprep.mubr.f32.mxu0 %v1600
    %1989 = vmatmul.mubr.f32.gmra.mrb[0].mxu0 %v1599
    %v1990 = vpop.f32.mrb[0].mxu0
    %v1991 = vadd.f32 %v1677, %v1990
    %v1992 = vpop.f32.mrb[0].mxu0
    %v1993 = vadd.f32 %v1677, %v1992
    %1994 = vmatprep.mubr.f32.mxu0 %v1602
    %1995 = vmatmul.mubr.f32.gmra.mrb[0].mxu0 %v1601
    %v1996 = vpop.f32.mrb[0].mxu0
    %v1997 = vadd.f32 %v1682, %v1996
    %v1998 = vpop.f32.mrb[0].mxu0
    %v1999 = vadd.f32 %v1682, %v1998
    %2000 = vmatprep.mubr.f32.mxu0 %v1604
    %2001 = vmatmul.mubr.f32.gmra.mrb[0].mxu0 %v1603
    %v2002 = vpop.f32.mrb[0].mxu0
    %v2003 = vadd.f32 %v1687, %v2002
    %v2004 = vpop.f32.mrb[0].mxu0
    %v2005 = vadd.f32 %v1687, %v2004
    %2006 = vmatprep.mubr.f32.mxu0 %v1606
    %2007 = vmatmul.mubr.f32.gmra.mrb[0].mxu0 %v1605
    %v2008 = vpop.f32.mrb[0].mxu0
    %v2009 = vadd.f32 %v1692, %v2008
    %v2010 = vpop.f32.mrb[0].mxu0
    %v2011 = vadd.f32 %v1692, %v2010
    %2012 = vmatprep.mubr.f32.mxu0 %v1608
    %2013 = vmatmul.mubr.f32.gmra.mrb[0].mxu0 %v1607
    %v2014 = vpop.f32.mrb[0].mxu0
    %v2015 = vadd.f32 %v1697, %v2014
    %v2016 = vpop.f32.mrb[0].mxu0
    %v2017 = vadd.f32 %v1697, %v2016
    %2018 = vmatprep.mubr.f32.mxu0 %v1610
    %2019 = vmatmul.mubr.f32.gmra.mrb[0].mxu0 %v1609
    %v2020 = vpop.f32.mrb[0].mxu0
    %v2021 = vadd.f32 %v1702, %v2020
    %v2022 = vpop.f32.mrb[0].mxu0
    %v2023 = vadd.f32 %v1702, %v2022
    %2024 = vmatprep.mubr.f32.mxu0 %v1612
    %2025 = vmatmul.mubr.f32.gmra.mrb[0].mxu0 %v1611
    %v2026 = vpop.f32.mrb[0].mxu0
    %v2027 = vadd.f32 %v1707, %v2026
    %v2028 = vpop.f32.mrb[0].mxu0
    %v2029 = vadd.f32 %v1707, %v2028
    %2030 = vdwg.mxu0
    %2031 = vmatprep.subr.mxu0 %v1362
    %2032 = vmatpush1.msra.mxu0 %v1361
    %2033 = vmatprep.subr.mxu0 %v1369
    %2034 = vmatpush1.msra.mxu0 %v1368
    %2035 = vmatprep.subr.mxu0 %v1376
    %2036 = vmatpush1.msra.mxu0 %v1375
    %2037 = vmatprep.subr.mxu0 %v1383
    %2038 = vmatpush1.msra.mxu0 %v1382
    %2039 = vmatprep.subr.mxu0 %v1390
    %2040 = vmatpush1.msra.mxu0 %v1389
    %2041 = vmatprep.subr.mxu0 %v1397
    %2042 = vmatpush1.msra.mxu0 %v1396
    %2043 = vmatprep.subr.mxu0 %v1404
    %2044 = vmatpush1.msra.mxu0 %v1403
    %2045 = vmatprep.subr.mxu0 %v1411
    %2046 = vmatpush1.msra.mxu0 %v1410
    %2047 = vmatprep.subr.mxu0 %v1418
    %2048 = vmatpush1.msra.mxu0 %v1417
    %2049 = vmatprep.subr.mxu0 %v1425
    %2050 = vmatpush1.msra.mxu0 %v1424
    %2051 = vmatprep.subr.mxu0 %v1432
    %2052 = vmatpush1.msra.mxu0 %v1431
    %2053 = vmatprep.subr.mxu0 %v1439
    %2054 = vmatpush1.msra.mxu0 %v1438
    %2055 = vmatprep.subr.mxu0 %v1446
    %2056 = vmatpush1.msra.mxu0 %v1445
    %2057 = vmatprep.subr.mxu0 %v1453
    %2058 = vmatpush1.msra.mxu0 %v1452
    %2059 = vmatprep.subr.mxu0 %v1460
    %2060 = vmatpush1.msra.mxu0 %v1459
    %2061 = vmatprep.subr.mxu0 %v1467
    %2062 = vmatpush1.msra.mxu0 %v1466
    %2063 = vmatprep.subr.mxu0 %v1474
    %2064 = vmatpush1.msra.mxu0 %v1473
    %2065 = vmatprep.subr.mxu0 %v1481
    %2066 = vmatpush1.msra.mxu0 %v1480
    %2067 = vmatprep.subr.mxu0 %v1488
    %2068 = vmatpush1.msra.mxu0 %v1487
    %2069 = vmatprep.subr.mxu0 %v1495
    %2070 = vmatpush1.msra.mxu0 %v1494
    %2071 = vmatprep.subr.mxu0 %v1502
    %2072 = vmatpush1.msra.mxu0 %v1501
    %2073 = vmatprep.subr.mxu0 %v1509
    %2074 = vmatpush1.msra.mxu0 %v1508
    %2075 = vmatprep.subr.mxu0 %v1516
    %2076 = vmatpush1.msra.mxu0 %v1515
    %2077 = vmatprep.subr.mxu0 %v1523
    %2078 = vmatpush1.msra.mxu0 %v1522
    %2079 = vmatprep.subr.mxu0 %v1530
    %2080 = vmatpush1.msra.mxu0 %v1529
    %2081 = vmatprep.subr.mxu0 %v1537
    %2082 = vmatpush1.msra.mxu0 %v1536
    %2083 = vmatprep.subr.mxu0 %v1544
    %2084 = vmatpush1.msra.mxu0 %v1543
    %2085 = vmatprep.subr.mxu0 %v1551
    %2086 = vmatpush1.msra.mxu0 %v1550
    %2087 = vmatprep.subr.mxu0 %v1558
    %2088 = vmatpush1.msra.mxu0 %v1557
    %2089 = vmatprep.subr.mxu0 %v1565
    %2090 = vmatpush1.msra.mxu0 %v1564
    %2091 = vmatprep.subr.mxu0 %v1572
    %2092 = vmatpush1.msra.mxu0 %v1571
    %2093 = vmatprep.subr.mxu0 %v1579
    %2094 = vmatpush1.msra.mxu0 %v1578
    %2095 = vmatprep.mubr.f32.mxu0 %v1582
    %2096 = vmatmul.mubr.f32.gmra.mrb[0].mxu0 %v1581
    %v2097 = vpop.f32.mrb[0].mxu0
    %v2098 = vadd.f32 %v1632, %v2097
    %v2099 = vpop.f32.mrb[0].mxu0
    %v2100 = vadd.f32 %v1632, %v2099
    %2101 = vmatprep.mubr.f32.mxu0 %v1584
    %2102 = vmatmul.mubr.f32.gmra.mrb[0].mxu0 %v1583
    %v2103 = vpop.f32.mrb[0].mxu0
    %v2104 = vadd.f32 %v1637, %v2103
    %v2105 = vpop.f32.mrb[0].mxu0
    %v2106 = vadd.f32 %v1637, %v2105
    %2107 = vmatprep.mubr.f32.mxu0 %v1586
    %2108 = vmatmul.mubr.f32.gmra.mrb[0].mxu0 %v1585
    %v2109 = vpop.f32.mrb[0].mxu0
    %v2110 = vadd.f32 %v1642, %v2109
    %v2111 = vpop.f32.mrb[0].mxu0
    %v2112 = vadd.f32 %v1642, %v2111
    %2113 = vmatprep.mubr.f32.mxu0 %v1588
    %2114 = vmatmul.mubr.f32.gmra.mrb[0].mxu0 %v1587
    %v2115 = vpop.f32.mrb[0].mxu0
    %v2116 = vadd.f32 %v1647, %v2115
    %v2117 = vpop.f32.mrb[0].mxu0
    %v2118 = vadd.f32 %v1647, %v2117
    %2119 = vmatprep.mubr.f32.mxu0 %v1590
    %2120 = vmatmul.mubr.f32.gmra.mrb[0].mxu0 %v1589
    %v2121 = vpop.f32.mrb[0].mxu0
    %v2122 = vadd.f32 %v1652, %v2121
    %v2123 = vpop.f32.mrb[0].mxu0
    %v2124 = vadd.f32 %v1652, %v2123
    %2125 = vmatprep.mubr.f32.mxu0 %v1592
    %2126 = vmatmul.mubr.f32.gmra.mrb[0].mxu0 %v1591
    %v2127 = vpop.f32.mrb[0].mxu0
    %v2128 = vadd.f32 %v1657, %v2127
    %v2129 = vpop.f32.mrb[0].mxu0
    %v2130 = vadd.f32 %v1657, %v2129
    %2131 = vmatprep.mubr.f32.mxu0 %v1594
    %2132 = vmatmul.mubr.f32.gmra.mrb[0].mxu0 %v1593
    %v2133 = vpop.f32.mrb[0].mxu0
    %v2134 = vadd.f32 %v1662, %v2133
    %v2135 = vpop.f32.mrb[0].mxu0
    %v2136 = vadd.f32 %v1662, %v2135
    %2137 = vmatprep.mubr.f32.mxu0 %v1596
    %2138 = vmatmul.mubr.f32.gmra.mrb[0].mxu0 %v1595
    %v2139 = vpop.f32.mrb[0].mxu0
    %v2140 = vadd.f32 %v1667, %v2139
    %v2141 = vpop.f32.mrb[0].mxu0
    %v2142 = vadd.f32 %v1667, %v2141
    %2143 = vmatprep.mubr.f32.mxu0 %v1598
    %2144 = vmatmul.mubr.f32.gmra.mrb[0].mxu0 %v1597
    %v2145 = vpop.f32.mrb[0].mxu0
    %v2146 = vadd.f32 %v1672, %v2145
    %v2147 = vpop.f32.mrb[0].mxu0
    %v2148 = vadd.f32 %v1672, %v2147
    %2149 = vmatprep.mubr.f32.mxu0 %v1600
    %2150 = vmatmul.mubr.f32.gmra.mrb[0].mxu0 %v1599
    %v2151 = vpop.f32.mrb[0].mxu0
    %v2152 = vadd.f32 %v1677, %v2151
    %v2153 = vpop.f32.mrb[0].mxu0
    %v2154 = vadd.f32 %v1677, %v2153
    %2155 = vmatprep.mubr.f32.mxu0 %v1602
    %2156 = vmatmul.mubr.f32.gmra.mrb[0].mxu0 %v1601
    %v2157 = vpop.f32.mrb[0].mxu0
    %v2158 = vadd.f32 %v1682, %v2157
    %v2159 = vpop.f32.mrb[0].mxu0
    %v2160 = vadd.f32 %v1682, %v2159
    %2161 = vmatprep.mubr.f32.mxu0 %v1604
    %2162 = vmatmul.mubr.f32.gmra.mrb[0].mxu0 %v1603
    %v2163 = vpop.f32.mrb[0].mxu0
    %v2164 = vadd.f32 %v1687, %v2163
    %v2165 = vpop.f32.mrb[0].mxu0
    %v2166 = vadd.f32 %v1687, %v2165
    %2167 = vmatprep.mubr.f32.mxu0 %v1606
    %2168 = vmatmul.mubr.f32.gmra.mrb[0].mxu0 %v1605
    %v2169 = vpop.f32.mrb[0].mxu0
    %v2170 = vadd.f32 %v1692, %v2169
    %v2171 = vpop.f32.mrb[0].mxu0
    %v2172 = vadd.f32 %v1692, %v2171
    %2173 = vmatprep.mubr.f32.mxu0 %v1608
    %2174 = vmatmul.mubr.f32.gmra.mrb[0].mxu0 %v1607
    %v2175 = vpop.f32.mrb[0].mxu0
    %v2176 = vadd.f32 %v1697, %v2175
    %v2177 = vpop.f32.mrb[0].mxu0
    %v2178 = vadd.f32 %v1697, %v2177
    %2179 = vmatprep.mubr.f32.mxu0 %v1610
    %2180 = vmatmul.mubr.f32.gmra.mrb[0].mxu0 %v1609
    %v2181 = vpop.f32.mrb[0].mxu0
    %v2182 = vadd.f32 %v1702, %v2181
    %v2183 = vpop.f32.mrb[0].mxu0
    %v2184 = vadd.f32 %v1702, %v2183
    %2185 = vmatprep.mubr.f32.mxu0 %v1612
    %2186 = vmatmul.mubr.f32.gmra.mrb[0].mxu0 %v1611
    %v2187 = vpop.f32.mrb[0].mxu0
    %v2188 = vadd.f32 %v1707, %v2187
    %v2189 = vpop.f32.mrb[0].mxu0
    %v2190 = vadd.f32 %v1707, %v2189
    %2191 = vdwg.mxu0
    %2192 = vmatprep.subr.mxu0 0.0
    %2193 = vmatpush1.msra.mxu0 %v1363
    %2194 = vmatprep.subr.mxu0 0.0
    %2195 = vmatpush1.msra.mxu0 %v1370
    %2196 = vmatprep.subr.mxu0 0.0
    %2197 = vmatpush1.msra.mxu0 %v1377
    %2198 = vmatprep.subr.mxu0 0.0
    %2199 = vmatpush1.msra.mxu0 %v1384
    %2200 = vmatprep.subr.mxu0 0.0
    %2201 = vmatpush1.msra.mxu0 %v1391
    %2202 = vmatprep.subr.mxu0 0.0
    %2203 = vmatpush1.msra.mxu0 %v1398
    %2204 = vmatprep.subr.mxu0 0.0
    %2205 = vmatpush1.msra.mxu0 %v1405
    %2206 = vmatprep.subr.mxu0 0.0
    %2207 = vmatpush1.msra.mxu0 %v1412
    %2208 = vmatprep.subr.mxu0 0.0
    %2209 = vmatpush1.msra.mxu0 %v1419
    %2210 = vmatprep.subr.mxu0 0.0
    %2211 = vmatpush1.msra.mxu0 %v1426
    %2212 = vmatprep.subr.mxu0 0.0
    %2213 = vmatpush1.msra.mxu0 %v1433
    %2214 = vmatprep.subr.mxu0 0.0
    %2215 = vmatpush1.msra.mxu0 %v1440
    %2216 = vmatprep.subr.mxu0 0.0
    %2217 = vmatpush1.msra.mxu0 %v1447
    %2218 = vmatprep.subr.mxu0 0.0
    %2219 = vmatpush1.msra.mxu0 %v1454
    %2220 = vmatprep.subr.mxu0 0.0
    %2221 = vmatpush1.msra.mxu0 %v1461
    %2222 = vmatprep.subr.mxu0 0.0
    %2223 = vmatpush1.msra.mxu0 %v1468
    %2224 = vmatprep.subr.mxu0 0.0
    %2225 = vmatpush1.msra.mxu0 %v1475
    %2226 = vmatprep.subr.mxu0 0.0
    %2227 = vmatpush1.msra.mxu0 %v1482
    %2228 = vmatprep.subr.mxu0 0.0
    %2229 = vmatpush1.msra.mxu0 %v1489
    %2230 = vmatprep.subr.mxu0 0.0
    %2231 = vmatpush1.msra.mxu0 %v1496
    %2232 = vmatprep.subr.mxu0 0.0
    %2233 = vmatpush1.msra.mxu0 %v1503
    %2234 = vmatprep.subr.mxu0 0.0
    %2235 = vmatpush1.msra.mxu0 %v1510
    %2236 = vmatprep.subr.mxu0 0.0
    %2237 = vmatpush1.msra.mxu0 %v1517
    %2238 = vmatprep.subr.mxu0 0.0
    %2239 = vmatpush1.msra.mxu0 %v1524
    %2240 = vmatprep.subr.mxu0 0.0
    %2241 = vmatpush1.msra.mxu0 %v1531
    %2242 = vmatprep.subr.mxu0 0.0
    %2243 = vmatpush1.msra.mxu0 %v1538
    %2244 = vmatprep.subr.mxu0 0.0
    %2245 = vmatpush1.msra.mxu0 %v1545
    %2246 = vmatprep.subr.mxu0 0.0
    %2247 = vmatpush1.msra.mxu0 %v1552
    %2248 = vmatprep.subr.mxu0 0.0
    %2249 = vmatpush1.msra.mxu0 %v1559
    %2250 = vmatprep.subr.mxu0 0.0
    %2251 = vmatpush1.msra.mxu0 %v1566
    %2252 = vmatprep.subr.mxu0 0.0
    %2253 = vmatpush1.msra.mxu0 %v1573
    %2254 = vmatprep.subr.mxu0 0.0
    %2255 = vmatpush1.msra.mxu0 %v1580
    %2256 = vmatprep.mubr.f32.mxu0 %v1582
    %2257 = vmatmul.mubr.f32.gmra.mrb[0].mxu0 %v1581
    %v2258 = vpop.f32.mrb[0].mxu0
    %v2259 = vadd.f32 %v1632, %v2258
    %v2260 = vpop.f32.mrb[0].mxu0
    %2261 = vmatprep.mubr.f32.mxu0 %v1584
    %2262 = vmatmul.mubr.f32.gmra.mrb[0].mxu0 %v1583
    %v2263 = vpop.f32.mrb[0].mxu0
    %v2264 = vadd.f32 %v1637, %v2263
    %v2265 = vpop.f32.mrb[0].mxu0
    %2266 = vmatprep.mubr.f32.mxu0 %v1586
    %2267 = vmatmul.mubr.f32.gmra.mrb[0].mxu0 %v1585
    %v2268 = vpop.f32.mrb[0].mxu0
    %v2269 = vadd.f32 %v1642, %v2268
    %v2270 = vpop.f32.mrb[0].mxu0
    %2271 = vmatprep.mubr.f32.mxu0 %v1588
    %2272 = vmatmul.mubr.f32.gmra.mrb[0].mxu0 %v1587
    %v2273 = vpop.f32.mrb[0].mxu0
    %v2274 = vadd.f32 %v1647, %v2273
    %v2275 = vpop.f32.mrb[0].mxu0
    %2276 = vmatprep.mubr.f32.mxu0 %v1590
    %2277 = vmatmul.mubr.f32.gmra.mrb[0].mxu0 %v1589
    %v2278 = vpop.f32.mrb[0].mxu0
    %v2279 = vadd.f32 %v1652, %v2278
    %v2280 = vpop.f32.mrb[0].mxu0
    %2281 = vmatprep.mubr.f32.mxu0 %v1592
    %2282 = vmatmul.mubr.f32.gmra.mrb[0].mxu0 %v1591
    %v2283 = vpop.f32.mrb[0].mxu0
    %v2284 = vadd.f32 %v1657, %v2283
    %v2285 = vpop.f32.mrb[0].mxu0
    %2286 = vmatprep.mubr.f32.mxu0 %v1594
    %2287 = vmatmul.mubr.f32.gmra.mrb[0].mxu0 %v1593
    %v2288 = vpop.f32.mrb[0].mxu0
    %v2289 = vadd.f32 %v1662, %v2288
    %v2290 = vpop.f32.mrb[0].mxu0
    %2291 = vmatprep.mubr.f32.mxu0 %v1596
    %2292 = vmatmul.mubr.f32.gmra.mrb[0].mxu0 %v1595
    %v2293 = vpop.f32.mrb[0].mxu0
    %v2294 = vadd.f32 %v1667, %v2293
    %v2295 = vpop.f32.mrb[0].mxu0
    %2296 = vmatprep.mubr.f32.mxu0 %v1598
    %2297 = vmatmul.mubr.f32.gmra.mrb[0].mxu0 %v1597
    %v2298 = vpop.f32.mrb[0].mxu0
    %v2299 = vadd.f32 %v1672, %v2298
    %v2300 = vpop.f32.mrb[0].mxu0
    %2301 = vmatprep.mubr.f32.mxu0 %v1600
    %2302 = vmatmul.mubr.f32.gmra.mrb[0].mxu0 %v1599
    %v2303 = vpop.f32.mrb[0].mxu0
    %v2304 = vadd.f32 %v1677, %v2303
    %v2305 = vpop.f32.mrb[0].mxu0
    %2306 = vmatprep.mubr.f32.mxu0 %v1602
    %2307 = vmatmul.mubr.f32.gmra.mrb[0].mxu0 %v1601
    %v2308 = vpop.f32.mrb[0].mxu0
    %v2309 = vadd.f32 %v1682, %v2308
    %v2310 = vpop.f32.mrb[0].mxu0
    %2311 = vmatprep.mubr.f32.mxu0 %v1604
    %2312 = vmatmul.mubr.f32.gmra.mrb[0].mxu0 %v1603
    %v2313 = vpop.f32.mrb[0].mxu0
    %v2314 = vadd.f32 %v1687, %v2313
    %v2315 = vpop.f32.mrb[0].mxu0
    %2316 = vmatprep.mubr.f32.mxu0 %v1606
    %2317 = vmatmul.mubr.f32.gmra.mrb[0].mxu0 %v1605
    %v2318 = vpop.f32.mrb[0].mxu0
    %v2319 = vadd.f32 %v1692, %v2318
    %v2320 = vpop.f32.mrb[0].mxu0
    %2321 = vmatprep.mubr.f32.mxu0 %v1608
    %2322 = vmatmul.mubr.f32.gmra.mrb[0].mxu0 %v1607
    %v2323 = vpop.f32.mrb[0].mxu0
    %v2324 = vadd.f32 %v1697, %v2323
    %v2325 = vpop.f32.mrb[0].mxu0
    %2326 = vmatprep.mubr.f32.mxu0 %v1610
    %2327 = vmatmul.mubr.f32.gmra.mrb[0].mxu0 %v1609
    %v2328 = vpop.f32.mrb[0].mxu0
    %v2329 = vadd.f32 %v1702, %v2328
    %v2330 = vpop.f32.mrb[0].mxu0
    %2331 = vmatprep.mubr.f32.mxu0 %v1612
    %2332 = vmatmul.mubr.f32.gmra.mrb[0].mxu0 %v1611
    %v2333 = vpop.f32.mrb[0].mxu0
    %v2334 = vadd.f32 %v1707, %v2333
    %v2335 = vpop.f32.mrb[0].mxu0
    %2336 = vdwg.mxu0
    %v2337 = vmax.f32 %v1776, 0.0
    %v2338 = vmax.f32 %v1778, 0.0
    %v2339 = vmax.f32 %v1937, 0.0
    %v2340 = vmax.f32 %v1939, 0.0
    %v2341 = vmax.f32 %v2098, 0.0
    %v2342 = vmax.f32 %v2100, 0.0
    %v2343 = vmax.f32 %v2259, 0.0
    %v2344 = vmax.f32 %v1782, 0.0
    %v2345 = vmax.f32 %v1784, 0.0
    %v2346 = vmax.f32 %v1943, 0.0
    %v2347 = vmax.f32 %v1945, 0.0
    %v2348 = vmax.f32 %v2104, 0.0
    %v2349 = vmax.f32 %v2106, 0.0
    %v2350 = vmax.f32 %v2264, 0.0
    %v2351 = vmax.f32 %v1788, 0.0
    %v2352 = vmax.f32 %v1790, 0.0
    %v2353 = vmax.f32 %v1949, 0.0
    %v2354 = vmax.f32 %v1951, 0.0
    %v2355 = vmax.f32 %v2110, 0.0
    %v2356 = vmax.f32 %v2112, 0.0
    %v2357 = vmax.f32 %v2269, 0.0
    %v2358 = vmax.f32 %v1794, 0.0
    %v2359 = vmax.f32 %v1796, 0.0
    %v2360 = vmax.f32 %v1955, 0.0
    %v2361 = vmax.f32 %v1957, 0.0
    %v2362 = vmax.f32 %v2116, 0.0
    %v2363 = vmax.f32 %v2118, 0.0
    %v2364 = vmax.f32 %v2274, 0.0
    %v2365 = vmax.f32 %v1800, 0.0
    %v2366 = vmax.f32 %v1802, 0.0
    %v2367 = vmax.f32 %v1961, 0.0
    %v2368 = vmax.f32 %v1963, 0.0
    %v2369 = vmax.f32 %v2122, 0.0
    %v2370 = vmax.f32 %v2124, 0.0
    %v2371 = vmax.f32 %v2279, 0.0
    %v2372 = vmax.f32 %v1806, 0.0
    %v2373 = vmax.f32 %v1808, 0.0
    %v2374 = vmax.f32 %v1967, 0.0
    %v2375 = vmax.f32 %v1969, 0.0
    %v2376 = vmax.f32 %v2128, 0.0
    %v2377 = vmax.f32 %v2130, 0.0
    %v2378 = vmax.f32 %v2284, 0.0
    %v2379 = vmax.f32 %v1812, 0.0
    %v2380 = vmax.f32 %v1814, 0.0
    %v2381 = vmax.f32 %v1973, 0.0
    %v2382 = vmax.f32 %v1975, 0.0
    %v2383 = vmax.f32 %v2134, 0.0
    %v2384 = vmax.f32 %v2136, 0.0
    %v2385 = vmax.f32 %v2289, 0.0
    %v2386 = vmax.f32 %v1818, 0.0
    %v2387 = vmax.f32 %v1820, 0.0
    %v2388 = vmax.f32 %v1979, 0.0
    %v2389 = vmax.f32 %v1981, 0.0
    %v2390 = vmax.f32 %v2140, 0.0
    %v2391 = vmax.f32 %v2142, 0.0
    %v2392 = vmax.f32 %v2294, 0.0
    %v2393 = vmax.f32 %v1824, 0.0
    %v2394 = vmax.f32 %v1826, 0.0
    %v2395 = vmax.f32 %v1985, 0.0
    %v2396 = vmax.f32 %v1987, 0.0
    %v2397 = vmax.f32 %v2146, 0.0
    %v2398 = vmax.f32 %v2148, 0.0
    %v2399 = vmax.f32 %v2299, 0.0
    %v2400 = vmax.f32 %v1830, 0.0
    %v2401 = vmax.f32 %v1832, 0.0
    %v2402 = vmax.f32 %v1991, 0.0
    %v2403 = vmax.f32 %v1993, 0.0
    %v2404 = vmax.f32 %v2152, 0.0
    %v2405 = vmax.f32 %v2154, 0.0
    %v2406 = vmax.f32 %v2304, 0.0
    %v2407 = vmax.f32 %v1836, 0.0
    %v2408 = vmax.f32 %v1838, 0.0
    %v2409 = vmax.f32 %v1997, 0.0
    %v2410 = vmax.f32 %v1999, 0.0
    %v2411 = vmax.f32 %v2158, 0.0
    %v2412 = vmax.f32 %v2160, 0.0
    %v2413 = vmax.f32 %v2309, 0.0
    %v2414 = vmax.f32 %v1842, 0.0
    %v2415 = vmax.f32 %v1844, 0.0
    %v2416 = vmax.f32 %v2003, 0.0
    %v2417 = vmax.f32 %v2005, 0.0
    %v2418 = vmax.f32 %v2164, 0.0
    %v2419 = vmax.f32 %v2166, 0.0
    %v2420 = vmax.f32 %v2314, 0.0
    %v2421 = vmax.f32 %v1848, 0.0
    %v2422 = vmax.f32 %v1850, 0.0
    %v2423 = vmax.f32 %v2009, 0.0
    %v2424 = vmax.f32 %v2011, 0.0
    %v2425 = vmax.f32 %v2170, 0.0
    %v2426 = vmax.f32 %v2172, 0.0
    %v2427 = vmax.f32 %v2319, 0.0
    %v2428 = vmax.f32 %v1854, 0.0
    %v2429 = vmax.f32 %v1856, 0.0
    %v2430 = vmax.f32 %v2015, 0.0
    %v2431 = vmax.f32 %v2017, 0.0
    %v2432 = vmax.f32 %v2176, 0.0
    %v2433 = vmax.f32 %v2178, 0.0
    %v2434 = vmax.f32 %v2324, 0.0
    %v2435 = vmax.f32 %v1860, 0.0
    %v2436 = vmax.f32 %v1862, 0.0
    %v2437 = vmax.f32 %v2021, 0.0
    %v2438 = vmax.f32 %v2023, 0.0
    %v2439 = vmax.f32 %v2182, 0.0
    %v2440 = vmax.f32 %v2184, 0.0
    %v2441 = vmax.f32 %v2329, 0.0
    %v2442 = vmax.f32 %v1866, 0.0
    %v2443 = vmax.f32 %v1868, 0.0
    %v2444 = vmax.f32 %v2027, 0.0
    %v2445 = vmax.f32 %v2029, 0.0
    %v2446 = vmax.f32 %v2188, 0.0
    %v2447 = vmax.f32 %v2190, 0.0
    %v2448 = vmax.f32 %v2334, 0.0
    %v2449 = vld [vmem:[%s5] sm:$0xff]
    %v2450 = vld [vmem:[%s5 + $0x8] sm:$0xff]
    %v2451 = vld [vmem:[%s5 + $0x10] sm:$0xff]
    %v2452 = vld [vmem:[%s5 + $0x18] sm:$0xff]
    %v2453 = vld [vmem:[%s5 + $0x20] sm:$0xff]
    %v2454 = vld [vmem:[%s5 + $0x28] sm:$0xff]
    %v2455 = vld [vmem:[%s5 + $0x30] sm:$0xff]
    %v2456 = vld [vmem:[%s5 + $0x38] sm:$0xff]
    %v2457 = vld [vmem:[%s5 + $0x40] sm:$0xff]
    %v2458 = vld [vmem:[%s5 + $0x48] sm:$0xff]
    %v2459 = vld [vmem:[%s5 + $0x50] sm:$0xff]
    %v2460 = vld [vmem:[%s5 + $0x58] sm:$0xff]
    %v2461 = vld [vmem:[%s5 + $0x60] sm:$0xff]
    %v2462 = vld [vmem:[%s5 + $0x68] sm:$0xff]
    %v2463 = vld [vmem:[%s5 + $0x70] sm:$0xff]
    %v2464 = vld [vmem:[%s5 + $0x78] sm:$0xff]
    %v2465 = vld [vmem:[%s6] sm:$0xff]
    %v2466 = vld [vmem:[%s6 + $0x8] sm:$0xff]
    %v2467 = vld [vmem:[%s6 + $0x10] sm:$0xff]
    %v2468 = vld [vmem:[%s6 + $0x18] sm:$0xff]
    %v2469 = vld [vmem:[%s6 + $0x20] sm:$0xff]
    %v2470 = vld [vmem:[%s6 + $0x28] sm:$0xff]
    %v2471 = vld [vmem:[%s6 + $0x30] sm:$0xff]
    %v2472 = vld [vmem:[%s6 + $0x38] sm:$0xff]
    %v2473 = vld [vmem:[%s6 + $0x40] sm:$0xff]
    %v2474 = vld [vmem:[%s6 + $0x48] sm:$0xff]
    %v2475 = vld [vmem:[%s6 + $0x50] sm:$0xff]
    %v2476 = vld [vmem:[%s6 + $0x58] sm:$0xff]
    %v2477 = vld [vmem:[%s6 + $0x60] sm:$0xff]
    %v2478 = vld [vmem:[%s6 + $0x68] sm:$0xff]
    %v2479 = vld [vmem:[%s6 + $0x70] sm:$0xff]
    %v2480 = vld [vmem:[%s6 + $0x78] sm:$0xff]
    %2482 = vset.pattern.permute.xlu0 0
    %2483 = vperm.xlu0 %2482, %v2465
    %v2484 = vpop.permute.xlu0 %2483
    %2487 = vset.pattern.permute.xlu0 0
    %2488 = vperm.xlu0 %2487, %v2466
    %v2489 = vpop.permute.xlu0 %2488
    %2492 = vset.pattern.permute.xlu0 0
    %2493 = vperm.xlu0 %2492, %v2467
    %v2494 = vpop.permute.xlu0 %2493
    %2497 = vset.pattern.permute.xlu0 0
    %2498 = vperm.xlu0 %2497, %v2468
    %v2499 = vpop.permute.xlu0 %2498
    %2502 = vset.pattern.permute.xlu0 0
    %2503 = vperm.xlu0 %2502, %v2469
    %v2504 = vpop.permute.xlu0 %2503
    %2507 = vset.pattern.permute.xlu0 0
    %2508 = vperm.xlu0 %2507, %v2470
    %v2509 = vpop.permute.xlu0 %2508
    %2512 = vset.pattern.permute.xlu0 0
    %2513 = vperm.xlu0 %2512, %v2471
    %v2514 = vpop.permute.xlu0 %2513
    %2517 = vset.pattern.permute.xlu0 0
    %2518 = vperm.xlu0 %2517, %v2472
    %v2519 = vpop.permute.xlu0 %2518
    %2522 = vset.pattern.permute.xlu0 0
    %2523 = vperm.xlu0 %2522, %v2473
    %v2524 = vpop.permute.xlu0 %2523
    %2527 = vset.pattern.permute.xlu0 0
    %2528 = vperm.xlu0 %2527, %v2474
    %v2529 = vpop.permute.xlu0 %2528
    %2532 = vset.pattern.permute.xlu0 0
    %2533 = vperm.xlu0 %2532, %v2475
    %v2534 = vpop.permute.xlu0 %2533
    %2537 = vset.pattern.permute.xlu0 0
    %2538 = vperm.xlu0 %2537, %v2476
    %v2539 = vpop.permute.xlu0 %2538
    %2542 = vset.pattern.permute.xlu0 0
    %2543 = vperm.xlu0 %2542, %v2477
    %v2544 = vpop.permute.xlu0 %2543
    %2547 = vset.pattern.permute.xlu0 0
    %2548 = vperm.xlu0 %2547, %v2478
    %v2549 = vpop.permute.xlu0 %2548
    %2552 = vset.pattern.permute.xlu0 0
    %2553 = vperm.xlu0 %2552, %v2479
    %v2554 = vpop.permute.xlu0 %2553
    %2557 = vset.pattern.permute.xlu0 0
    %2558 = vperm.xlu0 %2557, %v2480
    %v2559 = vpop.permute.xlu0 %2558
    %2561 = vmatprep.subr.mxu0 %v2338
    %2562 = vmatpush1.msra.mxu0 %v2337
    %2563 = vmatprep.subr.mxu0 %v2345
    %2564 = vmatpush1.msra.mxu0 %v2344
    %2565 = vmatprep.subr.mxu0 %v2352
    %2566 = vmatpush1.msra.mxu0 %v2351
    %2567 = vmatprep.subr.mxu0 %v2359
    %2568 = vmatpush1.msra.mxu0 %v2358
    %2569 = vmatprep.subr.mxu0 %v2366
    %2570 = vmatpush1.msra.mxu0 %v2365
    %2571 = vmatprep.subr.mxu0 %v2373
    %2572 = vmatpush1.msra.mxu0 %v2372
    %2573 = vmatprep.subr.mxu0 %v2380
    %2574 = vmatpush1.msra.mxu0 %v2379
    %2575 = vmatprep.subr.mxu0 %v2387
    %2576 = vmatpush1.msra.mxu0 %v2386
    %2577 = vmatprep.subr.mxu0 %v2394
    %2578 = vmatpush1.msra.mxu0 %v2393
    %2579 = vmatprep.subr.mxu0 %v2401
    %2580 = vmatpush1.msra.mxu0 %v2400
    %2581 = vmatprep.subr.mxu0 %v2408
    %2582 = vmatpush1.msra.mxu0 %v2407
    %2583 = vmatprep.subr.mxu0 %v2415
    %2584 = vmatpush1.msra.mxu0 %v2414
    %2585 = vmatprep.subr.mxu0 %v2422
    %2586 = vmatpush1.msra.mxu0 %v2421
    %2587 = vmatprep.subr.mxu0 %v2429
    %2588 = vmatpush1.msra.mxu0 %v2428
    %2589 = vmatprep.subr.mxu0 %v2436
    %2590 = vmatpush1.msra.mxu0 %v2435
    %2591 = vmatprep.subr.mxu0 %v2443
    %2592 = vmatpush1.msra.mxu0 %v2442
    %2593 = vmatprep.subr.mxu0 0.0
    %2594 = vmatpush1.msra.mxu0 0.0
    %2595 = vmatprep.subr.mxu0 0.0
    %2596 = vmatpush1.msra.mxu0 0.0
    %2597 = vmatprep.subr.mxu0 0.0
    %2598 = vmatpush1.msra.mxu0 0.0
    %2599 = vmatprep.subr.mxu0 0.0
    %2600 = vmatpush1.msra.mxu0 0.0
    %2601 = vmatprep.subr.mxu0 0.0
    %2602 = vmatpush1.msra.mxu0 0.0
    %2603 = vmatprep.subr.mxu0 0.0
    %2604 = vmatpush1.msra.mxu0 0.0
    %2605 = vmatprep.subr.mxu0 0.0
    %2606 = vmatpush1.msra.mxu0 0.0
    %2607 = vmatprep.subr.mxu0 0.0
    %2608 = vmatpush1.msra.mxu0 0.0
    %2609 = vmatprep.subr.mxu0 0.0
    %2610 = vmatpush1.msra.mxu0 0.0
    %2611 = vmatprep.subr.mxu0 0.0
    %2612 = vmatpush1.msra.mxu0 0.0
    %2613 = vmatprep.subr.mxu0 0.0
    %2614 = vmatpush1.msra.mxu0 0.0
    %2615 = vmatprep.subr.mxu0 0.0
    %2616 = vmatpush1.msra.mxu0 0.0
    %2617 = vmatprep.subr.mxu0 0.0
    %2618 = vmatpush1.msra.mxu0 0.0
    %2619 = vmatprep.subr.mxu0 0.0
    %2620 = vmatpush1.msra.mxu0 0.0
    %2621 = vmatprep.subr.mxu0 0.0
    %2622 = vmatpush1.msra.mxu0 0.0
    %2623 = vmatprep.subr.mxu0 0.0
    %2624 = vmatpush1.msra.mxu0 0.0
    %2625 = vmatprep.mubr.f32.mxu0 0.0
    %2626 = vmatmul.mubr.f32.gmra.mrb[0].mxu0 %v2449
    %v2627 = vpop.f32.mrb[0].mxu0
    %v2628 = vadd.f32 %v2484, %v2627
    %v2629 = vpop.f32.mrb[0].mxu0
    %v2630 = vadd.f32 %v2484, %v2629
    %2631 = vmatprep.mubr.f32.mxu0 0.0
    %2632 = vmatmul.mubr.f32.gmra.mrb[0].mxu0 %v2450
    %v2633 = vpop.f32.mrb[0].mxu0
    %v2634 = vadd.f32 %v2489, %v2633
    %v2635 = vpop.f32.mrb[0].mxu0
    %v2636 = vadd.f32 %v2489, %v2635
    %2637 = vmatprep.mubr.f32.mxu0 0.0
    %2638 = vmatmul.mubr.f32.gmra.mrb[0].mxu0 %v2451
    %v2639 = vpop.f32.mrb[0].mxu0
    %v2640 = vadd.f32 %v2494, %v2639
    %v2641 = vpop.f32.mrb[0].mxu0
    %v2642 = vadd.f32 %v2494, %v2641
    %2643 = vmatprep.mubr.f32.mxu0 0.0
    %2644 = vmatmul.mubr.f32.gmra.mrb[0].mxu0 %v2452
    %v2645 = vpop.f32.mrb[0].mxu0
    %v2646 = vadd.f32 %v2499, %v2645
    %v2647 = vpop.f32.mrb[0].mxu0
    %v2648 = vadd.f32 %v2499, %v2647
    %2649 = vmatprep.mubr.f32.mxu0 0.0
    %2650 = vmatmul.mubr.f32.gmra.mrb[0].mxu0 %v2453
    %v2651 = vpop.f32.mrb[0].mxu0
    %v2652 = vadd.f32 %v2504, %v2651
    %v2653 = vpop.f32.mrb[0].mxu0
    %v2654 = vadd.f32 %v2504, %v2653
    %2655 = vmatprep.mubr.f32.mxu0 0.0
    %2656 = vmatmul.mubr.f32.gmra.mrb[0].mxu0 %v2454
    %v2657 = vpop.f32.mrb[0].mxu0
    %v2658 = vadd.f32 %v2509, %v2657
    %v2659 = vpop.f32.mrb[0].mxu0
    %v2660 = vadd.f32 %v2509, %v2659
    %2661 = vmatprep.mubr.f32.mxu0 0.0
    %2662 = vmatmul.mubr.f32.gmra.mrb[0].mxu0 %v2455
    %v2663 = vpop.f32.mrb[0].mxu0
    %v2664 = vadd.f32 %v2514, %v2663
    %v2665 = vpop.f32.mrb[0].mxu0
    %v2666 = vadd.f32 %v2514, %v2665
    %2667 = vmatprep.mubr.f32.mxu0 0.0
    %2668 = vmatmul.mubr.f32.gmra.mrb[0].mxu0 %v2456
    %v2669 = vpop.f32.mrb[0].mxu0
    %v2670 = vadd.f32 %v2519, %v2669
    %v2671 = vpop.f32.mrb[0].mxu0
    %v2672 = vadd.f32 %v2519, %v2671
    %2673 = vmatprep.mubr.f32.mxu0 0.0
    %2674 = vmatmul.mubr.f32.gmra.mrb[0].mxu0 %v2457
    %v2675 = vpop.f32.mrb[0].mxu0
    %v2676 = vadd.f32 %v2524, %v2675
    %v2677 = vpop.f32.mrb[0].mxu0
    %v2678 = vadd.f32 %v2524, %v2677
    %2679 = vmatprep.mubr.f32.mxu0 0.0
    %2680 = vmatmul.mubr.f32.gmra.mrb[0].mxu0 %v2458
    %v2681 = vpop.f32.mrb[0].mxu0
    %v2682 = vadd.f32 %v2529, %v2681
    %v2683 = vpop.f32.mrb[0].mxu0
    %v2684 = vadd.f32 %v2529, %v2683
    %2685 = vmatprep.mubr.f32.mxu0 0.0
    %2686 = vmatmul.mubr.f32.gmra.mrb[0].mxu0 %v2459
    %v2687 = vpop.f32.mrb[0].mxu0
    %v2688 = vadd.f32 %v2534, %v2687
    %v2689 = vpop.f32.mrb[0].mxu0
    %v2690 = vadd.f32 %v2534, %v2689
    %2691 = vmatprep.mubr.f32.mxu0 0.0
    %2692 = vmatmul.mubr.f32.gmra.mrb[0].mxu0 %v2460
    %v2693 = vpop.f32.mrb[0].mxu0
    %v2694 = vadd.f32 %v2539, %v2693
    %v2695 = vpop.f32.mrb[0].mxu0
    %v2696 = vadd.f32 %v2539, %v2695
    %2697 = vmatprep.mubr.f32.mxu0 0.0
    %2698 = vmatmul.mubr.f32.gmra.mrb[0].mxu0 %v2461
    %v2699 = vpop.f32.mrb[0].mxu0
    %v2700 = vadd.f32 %v2544, %v2699
    %v2701 = vpop.f32.mrb[0].mxu0
    %v2702 = vadd.f32 %v2544, %v2701
    %2703 = vmatprep.mubr.f32.mxu0 0.0
    %2704 = vmatmul.mubr.f32.gmra.mrb[0].mxu0 %v2462
    %v2705 = vpop.f32.mrb[0].mxu0
    %v2706 = vadd.f32 %v2549, %v2705
    %v2707 = vpop.f32.mrb[0].mxu0
    %v2708 = vadd.f32 %v2549, %v2707
    %2709 = vmatprep.mubr.f32.mxu0 0.0
    %2710 = vmatmul.mubr.f32.gmra.mrb[0].mxu0 %v2463
    %v2711 = vpop.f32.mrb[0].mxu0
    %v2712 = vadd.f32 %v2554, %v2711
    %v2713 = vpop.f32.mrb[0].mxu0
    %v2714 = vadd.f32 %v2554, %v2713
    %2715 = vmatprep.mubr.f32.mxu0 0.0
    %2716 = vmatmul.mubr.f32.gmra.mrb[0].mxu0 %v2464
    %v2717 = vpop.f32.mrb[0].mxu0
    %v2718 = vadd.f32 %v2559, %v2717
    %v2719 = vpop.f32.mrb[0].mxu0
    %v2720 = vadd.f32 %v2559, %v2719
    %2721 = vdwg.mxu0
    %2722 = vmatprep.subr.mxu0 %v2340
    %2723 = vmatpush1.msra.mxu0 %v2339
    %2724 = vmatprep.subr.mxu0 %v2347
    %2725 = vmatpush1.msra.mxu0 %v2346
    %2726 = vmatprep.subr.mxu0 %v2354
    %2727 = vmatpush1.msra.mxu0 %v2353
    %2728 = vmatprep.subr.mxu0 %v2361
    %2729 = vmatpush1.msra.mxu0 %v2360
    %2730 = vmatprep.subr.mxu0 %v2368
    %2731 = vmatpush1.msra.mxu0 %v2367
    %2732 = vmatprep.subr.mxu0 %v2375
    %2733 = vmatpush1.msra.mxu0 %v2374
    %2734 = vmatprep.subr.mxu0 %v2382
    %2735 = vmatpush1.msra.mxu0 %v2381
    %2736 = vmatprep.subr.mxu0 %v2389
    %2737 = vmatpush1.msra.mxu0 %v2388
    %2738 = vmatprep.subr.mxu0 %v2396
    %2739 = vmatpush1.msra.mxu0 %v2395
    %2740 = vmatprep.subr.mxu0 %v2403
    %2741 = vmatpush1.msra.mxu0 %v2402
    %2742 = vmatprep.subr.mxu0 %v2410
    %2743 = vmatpush1.msra.mxu0 %v2409
    %2744 = vmatprep.subr.mxu0 %v2417
    %2745 = vmatpush1.msra.mxu0 %v2416
    %2746 = vmatprep.subr.mxu0 %v2424
    %2747 = vmatpush1.msra.mxu0 %v2423
    %2748 = vmatprep.subr.mxu0 %v2431
    %2749 = vmatpush1.msra.mxu0 %v2430
    %2750 = vmatprep.subr.mxu0 %v2438
    %2751 = vmatpush1.msra.mxu0 %v2437
    %2752 = vmatprep.subr.mxu0 %v2445
    %2753 = vmatpush1.msra.mxu0 %v2444
    %2754 = vmatprep.subr.mxu0 0.0
    %2755 = vmatpush1.msra.mxu0 0.0
    %2756 = vmatprep.subr.mxu0 0.0
    %2757 = vmatpush1.msra.mxu0 0.0
    %2758 = vmatprep.subr.mxu0 0.0
    %2759 = vmatpush1.msra.mxu0 0.0
    %2760 = vmatprep.subr.mxu0 0.0
    %2761 = vmatpush1.msra.mxu0 0.0
    %2762 = vmatprep.subr.mxu0 0.0
    %2763 = vmatpush1.msra.mxu0 0.0
    %2764 = vmatprep.subr.mxu0 0.0
    %2765 = vmatpush1.msra.mxu0 0.0
    %2766 = vmatprep.subr.mxu0 0.0
    %2767 = vmatpush1.msra.mxu0 0.0
    %2768 = vmatprep.subr.mxu0 0.0
    %2769 = vmatpush1.msra.mxu0 0.0
    %2770 = vmatprep.subr.mxu0 0.0
    %2771 = vmatpush1.msra.mxu0 0.0
    %2772 = vmatprep.subr.mxu0 0.0
    %2773 = vmatpush1.msra.mxu0 0.0
    %2774 = vmatprep.subr.mxu0 0.0
    %2775 = vmatpush1.msra.mxu0 0.0
    %2776 = vmatprep.subr.mxu0 0.0
    %2777 = vmatpush1.msra.mxu0 0.0
    %2778 = vmatprep.subr.mxu0 0.0
    %2779 = vmatpush1.msra.mxu0 0.0
    %2780 = vmatprep.subr.mxu0 0.0
    %2781 = vmatpush1.msra.mxu0 0.0
    %2782 = vmatprep.subr.mxu0 0.0
    %2783 = vmatpush1.msra.mxu0 0.0
    %2784 = vmatprep.subr.mxu0 0.0
    %2785 = vmatpush1.msra.mxu0 0.0
    %2786 = vmatprep.mubr.f32.mxu0 0.0
    %2787 = vmatmul.mubr.f32.gmra.mrb[0].mxu0 %v2449
    %v2788 = vpop.f32.mrb[0].mxu0
    %v2789 = vadd.f32 %v2484, %v2788
    %v2790 = vpop.f32.mrb[0].mxu0
    %v2791 = vadd.f32 %v2484, %v2790
    %2792 = vmatprep.mubr.f32.mxu0 0.0
    %2793 = vmatmul.mubr.f32.gmra.mrb[0].mxu0 %v2450
    %v2794 = vpop.f32.mrb[0].mxu0
    %v2795 = vadd.f32 %v2489, %v2794
    %v2796 = vpop.f32.mrb[0].mxu0
    %v2797 = vadd.f32 %v2489, %v2796
    %2798 = vmatprep.mubr.f32.mxu0 0.0
    %2799 = vmatmul.mubr.f32.gmra.mrb[0].mxu0 %v2451
    %v2800 = vpop.f32.mrb[0].mxu0
    %v2801 = vadd.f32 %v2494, %v2800
    %v2802 = vpop.f32.mrb[0].mxu0
    %v2803 = vadd.f32 %v2494, %v2802
    %2804 = vmatprep.mubr.f32.mxu0 0.0
    %2805 = vmatmul.mubr.f32.gmra.mrb[0].mxu0 %v2452
    %v2806 = vpop.f32.mrb[0].mxu0
    %v2807 = vadd.f32 %v2499, %v2806
    %v2808 = vpop.f32.mrb[0].mxu0
    %v2809 = vadd.f32 %v2499, %v2808
    %2810 = vmatprep.mubr.f32.mxu0 0.0
    %2811 = vmatmul.mubr.f32.gmra.mrb[0].mxu0 %v2453
    %v2812 = vpop.f32.mrb[0].mxu0
    %v2813 = vadd.f32 %v2504, %v2812
    %v2814 = vpop.f32.mrb[0].mxu0
    %v2815 = vadd.f32 %v2504, %v2814
    %2816 = vmatprep.mubr.f32.mxu0 0.0
    %2817 = vmatmul.mubr.f32.gmra.mrb[0].mxu0 %v2454
    %v2818 = vpop.f32.mrb[0].mxu0
    %v2819 = vadd.f32 %v2509, %v2818
    %v2820 = vpop.f32.mrb[0].mxu0
    %v2821 = vadd.f32 %v2509, %v2820
    %2822 = vmatprep.mubr.f32.mxu0 0.0
    %2823 = vmatmul.mubr.f32.gmra.mrb[0].mxu0 %v2455
    %v2824 = vpop.f32.mrb[0].mxu0
    %v2825 = vadd.f32 %v2514, %v2824
    %v2826 = vpop.f32.mrb[0].mxu0
    %v2827 = vadd.f32 %v2514, %v2826
    %2828 = vmatprep.mubr.f32.mxu0 0.0
    %2829 = vmatmul.mubr.f32.gmra.mrb[0].mxu0 %v2456
    %v2830 = vpop.f32.mrb[0].mxu0
    %v2831 = vadd.f32 %v2519, %v2830
    %v2832 = vpop.f32.mrb[0].mxu0
    %v2833 = vadd.f32 %v2519, %v2832
    %2834 = vmatprep.mubr.f32.mxu0 0.0
    %2835 = vmatmul.mubr.f32.gmra.mrb[0].mxu0 %v2457
    %v2836 = vpop.f32.mrb[0].mxu0
    %v2837 = vadd.f32 %v2524, %v2836
    %v2838 = vpop.f32.mrb[0].mxu0
    %v2839 = vadd.f32 %v2524, %v2838
    %2840 = vmatprep.mubr.f32.mxu0 0.0
    %2841 = vmatmul.mubr.f32.gmra.mrb[0].mxu0 %v2458
    %v2842 = vpop.f32.mrb[0].mxu0
    %v2843 = vadd.f32 %v2529, %v2842
    %v2844 = vpop.f32.mrb[0].mxu0
    %v2845 = vadd.f32 %v2529, %v2844
    %2846 = vmatprep.mubr.f32.mxu0 0.0
    %2847 = vmatmul.mubr.f32.gmra.mrb[0].mxu0 %v2459
    %v2848 = vpop.f32.mrb[0].mxu0
    %v2849 = vadd.f32 %v2534, %v2848
    %v2850 = vpop.f32.mrb[0].mxu0
    %v2851 = vadd.f32 %v2534, %v2850
    %2852 = vmatprep.mubr.f32.mxu0 0.0
    %2853 = vmatmul.mubr.f32.gmra.mrb[0].mxu0 %v2460
    %v2854 = vpop.f32.mrb[0].mxu0
    %v2855 = vadd.f32 %v2539, %v2854
    %v2856 = vpop.f32.mrb[0].mxu0
    %v2857 = vadd.f32 %v2539, %v2856
    %2858 = vmatprep.mubr.f32.mxu0 0.0
    %2859 = vmatmul.mubr.f32.gmra.mrb[0].mxu0 %v2461
    %v2860 = vpop.f32.mrb[0].mxu0
    %v2861 = vadd.f32 %v2544, %v2860
    %v2862 = vpop.f32.mrb[0].mxu0
    %v2863 = vadd.f32 %v2544, %v2862
    %2864 = vmatprep.mubr.f32.mxu0 0.0
    %2865 = vmatmul.mubr.f32.gmra.mrb[0].mxu0 %v2462
    %v2866 = vpop.f32.mrb[0].mxu0
    %v2867 = vadd.f32 %v2549, %v2866
    %v2868 = vpop.f32.mrb[0].mxu0
    %v2869 = vadd.f32 %v2549, %v2868
    %2870 = vmatprep.mubr.f32.mxu0 0.0
    %2871 = vmatmul.mubr.f32.gmra.mrb[0].mxu0 %v2463
    %v2872 = vpop.f32.mrb[0].mxu0
    %v2873 = vadd.f32 %v2554, %v2872
    %v2874 = vpop.f32.mrb[0].mxu0
    %v2875 = vadd.f32 %v2554, %v2874
    %2876 = vmatprep.mubr.f32.mxu0 0.0
    %2877 = vmatmul.mubr.f32.gmra.mrb[0].mxu0 %v2464
    %v2878 = vpop.f32.mrb[0].mxu0
    %v2879 = vadd.f32 %v2559, %v2878
    %v2880 = vpop.f32.mrb[0].mxu0
    %v2881 = vadd.f32 %v2559, %v2880
    %2882 = vdwg.mxu0
    %2883 = vmatprep.subr.mxu0 %v2342
    %2884 = vmatpush1.msra.mxu0 %v2341
    %2885 = vmatprep.subr.mxu0 %v2349
    %2886 = vmatpush1.msra.mxu0 %v2348
    %2887 = vmatprep.subr.mxu0 %v2356
    %2888 = vmatpush1.msra.mxu0 %v2355
    %2889 = vmatprep.subr.mxu0 %v2363
    %2890 = vmatpush1.msra.mxu0 %v2362
    %2891 = vmatprep.subr.mxu0 %v2370
    %2892 = vmatpush1.msra.mxu0 %v2369
    %2893 = vmatprep.subr.mxu0 %v2377
    %2894 = vmatpush1.msra.mxu0 %v2376
    %2895 = vmatprep.subr.mxu0 %v2384
    %2896 = vmatpush1.msra.mxu0 %v2383
    %2897 = vmatprep.subr.mxu0 %v2391
    %2898 = vmatpush1.msra.mxu0 %v2390
    %2899 = vmatprep.subr.mxu0 %v2398
    %2900 = vmatpush1.msra.mxu0 %v2397
    %2901 = vmatprep.subr.mxu0 %v2405
    %2902 = vmatpush1.msra.mxu0 %v2404
    %2903 = vmatprep.subr.mxu0 %v2412
    %2904 = vmatpush1.msra.mxu0 %v2411
    %2905 = vmatprep.subr.mxu0 %v2419
    %2906 = vmatpush1.msra.mxu0 %v2418
    %2907 = vmatprep.subr.mxu0 %v2426
    %2908 = vmatpush1.msra.mxu0 %v2425
    %2909 = vmatprep.subr.mxu0 %v2433
    %2910 = vmatpush1.msra.mxu0 %v2432
    %2911 = vmatprep.subr.mxu0 %v2440
    %2912 = vmatpush1.msra.mxu0 %v2439
    %2913 = vmatprep.subr.mxu0 %v2447
    %2914 = vmatpush1.msra.mxu0 %v2446
    %2915 = vmatprep.subr.mxu0 0.0
    %2916 = vmatpush1.msra.mxu0 0.0
    %2917 = vmatprep.subr.mxu0 0.0
    %2918 = vmatpush1.msra.mxu0 0.0
    %2919 = vmatprep.subr.mxu0 0.0
    %2920 = vmatpush1.msra.mxu0 0.0
    %2921 = vmatprep.subr.mxu0 0.0
    %2922 = vmatpush1.msra.mxu0 0.0
    %2923 = vmatprep.subr.mxu0 0.0
    %2924 = vmatpush1.msra.mxu0 0.0
    %2925 = vmatprep.subr.mxu0 0.0
    %2926 = vmatpush1.msra.mxu0 0.0
    %2927 = vmatprep.subr.mxu0 0.0
    %2928 = vmatpush1.msra.mxu0 0.0
    %2929 = vmatprep.subr.mxu0 0.0
    %2930 = vmatpush1.msra.mxu0 0.0
    %2931 = vmatprep.subr.mxu0 0.0
    %2932 = vmatpush1.msra.mxu0 0.0
    %2933 = vmatprep.subr.mxu0 0.0
    %2934 = vmatpush1.msra.mxu0 0.0
    %2935 = vmatprep.subr.mxu0 0.0
    %2936 = vmatpush1.msra.mxu0 0.0
    %2937 = vmatprep.subr.mxu0 0.0
    %2938 = vmatpush1.msra.mxu0 0.0
    %2939 = vmatprep.subr.mxu0 0.0
    %2940 = vmatpush1.msra.mxu0 0.0
    %2941 = vmatprep.subr.mxu0 0.0
    %2942 = vmatpush1.msra.mxu0 0.0
    %2943 = vmatprep.subr.mxu0 0.0
    %2944 = vmatpush1.msra.mxu0 0.0
    %2945 = vmatprep.subr.mxu0 0.0
    %2946 = vmatpush1.msra.mxu0 0.0
    %2947 = vmatprep.mubr.f32.mxu0 0.0
    %2948 = vmatmul.mubr.f32.gmra.mrb[0].mxu0 %v2449
    %v2949 = vpop.f32.mrb[0].mxu0
    %v2950 = vadd.f32 %v2484, %v2949
    %v2951 = vpop.f32.mrb[0].mxu0
    %v2952 = vadd.f32 %v2484, %v2951
    %2953 = vmatprep.mubr.f32.mxu0 0.0
    %2954 = vmatmul.mubr.f32.gmra.mrb[0].mxu0 %v2450
    %v2955 = vpop.f32.mrb[0].mxu0
    %v2956 = vadd.f32 %v2489, %v2955
    %v2957 = vpop.f32.mrb[0].mxu0
    %v2958 = vadd.f32 %v2489, %v2957
    %2959 = vmatprep.mubr.f32.mxu0 0.0
    %2960 = vmatmul.mubr.f32.gmra.mrb[0].mxu0 %v2451
    %v2961 = vpop.f32.mrb[0].mxu0
    %v2962 = vadd.f32 %v2494, %v2961
    %v2963 = vpop.f32.mrb[0].mxu0
    %v2964 = vadd.f32 %v2494, %v2963
    %2965 = vmatprep.mubr.f32.mxu0 0.0
    %2966 = vmatmul.mubr.f32.gmra.mrb[0].mxu0 %v2452
    %v2967 = vpop.f32.mrb[0].mxu0
    %v2968 = vadd.f32 %v2499, %v2967
    %v2969 = vpop.f32.mrb[0].mxu0
    %v2970 = vadd.f32 %v2499, %v2969
    %2971 = vmatprep.mubr.f32.mxu0 0.0
    %2972 = vmatmul.mubr.f32.gmra.mrb[0].mxu0 %v2453
    %v2973 = vpop.f32.mrb[0].mxu0
    %v2974 = vadd.f32 %v2504, %v2973
    %v2975 = vpop.f32.mrb[0].mxu0
    %v2976 = vadd.f32 %v2504, %v2975
    %2977 = vmatprep.mubr.f32.mxu0 0.0
    %2978 = vmatmul.mubr.f32.gmra.mrb[0].mxu0 %v2454
    %v2979 = vpop.f32.mrb[0].mxu0
    %v2980 = vadd.f32 %v2509, %v2979
    %v2981 = vpop.f32.mrb[0].mxu0
    %v2982 = vadd.f32 %v2509, %v2981
    %2983 = vmatprep.mubr.f32.mxu0 0.0
    %2984 = vmatmul.mubr.f32.gmra.mrb[0].mxu0 %v2455
    %v2985 = vpop.f32.mrb[0].mxu0
    %v2986 = vadd.f32 %v2514, %v2985
    %v2987 = vpop.f32.mrb[0].mxu0
    %v2988 = vadd.f32 %v2514, %v2987
    %2989 = vmatprep.mubr.f32.mxu0 0.0
    %2990 = vmatmul.mubr.f32.gmra.mrb[0].mxu0 %v2456
    %v2991 = vpop.f32.mrb[0].mxu0
    %v2992 = vadd.f32 %v2519, %v2991
    %v2993 = vpop.f32.mrb[0].mxu0
    %v2994 = vadd.f32 %v2519, %v2993
    %2995 = vmatprep.mubr.f32.mxu0 0.0
    %2996 = vmatmul.mubr.f32.gmra.mrb[0].mxu0 %v2457
    %v2997 = vpop.f32.mrb[0].mxu0
    %v2998 = vadd.f32 %v2524, %v2997
    %v2999 = vpop.f32.mrb[0].mxu0
    %v3000 = vadd.f32 %v2524, %v2999
    %3001 = vmatprep.mubr.f32.mxu0 0.0
    %3002 = vmatmul.mubr.f32.gmra.mrb[0].mxu0 %v2458
    %v3003 = vpop.f32.mrb[0].mxu0
    %v3004 = vadd.f32 %v2529, %v3003
    %v3005 = vpop.f32.mrb[0].mxu0
    %v3006 = vadd.f32 %v2529, %v3005
    %3007 = vmatprep.mubr.f32.mxu0 0.0
    %3008 = vmatmul.mubr.f32.gmra.mrb[0].mxu0 %v2459
    %v3009 = vpop.f32.mrb[0].mxu0
    %v3010 = vadd.f32 %v2534, %v3009
    %v3011 = vpop.f32.mrb[0].mxu0
    %v3012 = vadd.f32 %v2534, %v3011
    %3013 = vmatprep.mubr.f32.mxu0 0.0
    %3014 = vmatmul.mubr.f32.gmra.mrb[0].mxu0 %v2460
    %v3015 = vpop.f32.mrb[0].mxu0
    %v3016 = vadd.f32 %v2539, %v3015
    %v3017 = vpop.f32.mrb[0].mxu0
    %v3018 = vadd.f32 %v2539, %v3017
    %3019 = vmatprep.mubr.f32.mxu0 0.0
    %3020 = vmatmul.mubr.f32.gmra.mrb[0].mxu0 %v2461
    %v3021 = vpop.f32.mrb[0].mxu0
    %v3022 = vadd.f32 %v2544, %v3021
    %v3023 = vpop.f32.mrb[0].mxu0
    %v3024 = vadd.f32 %v2544, %v3023
    %3025 = vmatprep.mubr.f32.mxu0 0.0
    %3026 = vmatmul.mubr.f32.gmra.mrb[0].mxu0 %v2462
    %v3027 = vpop.f32.mrb[0].mxu0
    %v3028 = vadd.f32 %v2549, %v3027
    %v3029 = vpop.f32.mrb[0].mxu0
    %v3030 = vadd.f32 %v2549, %v3029
    %3031 = vmatprep.mubr.f32.mxu0 0.0
    %3032 = vmatmul.mubr.f32.gmra.mrb[0].mxu0 %v2463
    %v3033 = vpop.f32.mrb[0].mxu0
    %v3034 = vadd.f32 %v2554, %v3033
    %v3035 = vpop.f32.mrb[0].mxu0
    %v3036 = vadd.f32 %v2554, %v3035
    %3037 = vmatprep.mubr.f32.mxu0 0.0
    %3038 = vmatmul.mubr.f32.gmra.mrb[0].mxu0 %v2464
    %v3039 = vpop.f32.mrb[0].mxu0
    %v3040 = vadd.f32 %v2559, %v3039
    %v3041 = vpop.f32.mrb[0].mxu0
    %v3042 = vadd.f32 %v2559, %v3041
    %3043 = vdwg.mxu0
    %3044 = vmatprep.subr.mxu0 0.0
    %3045 = vmatpush1.msra.mxu0 %v2343
    %3046 = vmatprep.subr.mxu0 0.0
    %3047 = vmatpush1.msra.mxu0 %v2350
    %3048 = vmatprep.subr.mxu0 0.0
    %3049 = vmatpush1.msra.mxu0 %v2357
    %3050 = vmatprep.subr.mxu0 0.0
    %3051 = vmatpush1.msra.mxu0 %v2364
    %3052 = vmatprep.subr.mxu0 0.0
    %3053 = vmatpush1.msra.mxu0 %v2371
    %3054 = vmatprep.subr.mxu0 0.0
    %3055 = vmatpush1.msra.mxu0 %v2378
    %3056 = vmatprep.subr.mxu0 0.0
    %3057 = vmatpush1.msra.mxu0 %v2385
    %3058 = vmatprep.subr.mxu0 0.0
    %3059 = vmatpush1.msra.mxu0 %v2392
    %3060 = vmatprep.subr.mxu0 0.0
    %3061 = vmatpush1.msra.mxu0 %v2399
    %3062 = vmatprep.subr.mxu0 0.0
    %3063 = vmatpush1.msra.mxu0 %v2406
    %3064 = vmatprep.subr.mxu0 0.0
    %3065 = vmatpush1.msra.mxu0 %v2413
    %3066 = vmatprep.subr.mxu0 0.0
    %3067 = vmatpush1.msra.mxu0 %v2420
    %3068 = vmatprep.subr.mxu0 0.0
    %3069 = vmatpush1.msra.mxu0 %v2427
    %3070 = vmatprep.subr.mxu0 0.0
    %3071 = vmatpush1.msra.mxu0 %v2434
    %3072 = vmatprep.subr.mxu0 0.0
    %3073 = vmatpush1.msra.mxu0 %v2441
    %3074 = vmatprep.subr.mxu0 0.0
    %3075 = vmatpush1.msra.mxu0 %v2448
    %3076 = vmatprep.subr.mxu0 0.0
    %3077 = vmatpush1.msra.mxu0 0.0
    %3078 = vmatprep.subr.mxu0 0.0
    %3079 = vmatpush1.msra.mxu0 0.0
    %3080 = vmatprep.subr.mxu0 0.0
    %3081 = vmatpush1.msra.mxu0 0.0
    %3082 = vmatprep.subr.mxu0 0.0
    %3083 = vmatpush1.msra.mxu0 0.0
    %3084 = vmatprep.subr.mxu0 0.0
    %3085 = vmatpush1.msra.mxu0 0.0
    %3086 = vmatprep.subr.mxu0 0.0
    %3087 = vmatpush1.msra.mxu0 0.0
    %3088 = vmatprep.subr.mxu0 0.0
    %3089 = vmatpush1.msra.mxu0 0.0
    %3090 = vmatprep.subr.mxu0 0.0
    %3091 = vmatpush1.msra.mxu0 0.0
    %3092 = vmatprep.subr.mxu0 0.0
    %3093 = vmatpush1.msra.mxu0 0.0
    %3094 = vmatprep.subr.mxu0 0.0
    %3095 = vmatpush1.msra.mxu0 0.0
    %3096 = vmatprep.subr.mxu0 0.0
    %3097 = vmatpush1.msra.mxu0 0.0
    %3098 = vmatprep.subr.mxu0 0.0
    %3099 = vmatpush1.msra.mxu0 0.0
    %3100 = vmatprep.subr.mxu0 0.0
    %3101 = vmatpush1.msra.mxu0 0.0
    %3102 = vmatprep.subr.mxu0 0.0
    %3103 = vmatpush1.msra.mxu0 0.0
    %3104 = vmatprep.subr.mxu0 0.0
    %3105 = vmatpush1.msra.mxu0 0.0
    %3106 = vmatprep.subr.mxu0 0.0
    %3107 = vmatpush1.msra.mxu0 0.0
    %3108 = vmatprep.mubr.f32.mxu0 0.0
    %3109 = vmatmul.mubr.f32.gmra.mrb[0].mxu0 %v2449
    %v3110 = vpop.f32.mrb[0].mxu0
    %v3111 = vadd.f32 %v2484, %v3110
    %v3112 = vpop.f32.mrb[0].mxu0
    %3113 = vmatprep.mubr.f32.mxu0 0.0
    %3114 = vmatmul.mubr.f32.gmra.mrb[0].mxu0 %v2450
    %v3115 = vpop.f32.mrb[0].mxu0
    %v3116 = vadd.f32 %v2489, %v3115
    %v3117 = vpop.f32.mrb[0].mxu0
    %3118 = vmatprep.mubr.f32.mxu0 0.0
    %3119 = vmatmul.mubr.f32.gmra.mrb[0].mxu0 %v2451
    %v3120 = vpop.f32.mrb[0].mxu0
    %v3121 = vadd.f32 %v2494, %v3120
    %v3122 = vpop.f32.mrb[0].mxu0
    %3123 = vmatprep.mubr.f32.mxu0 0.0
    %3124 = vmatmul.mubr.f32.gmra.mrb[0].mxu0 %v2452
    %v3125 = vpop.f32.mrb[0].mxu0
    %v3126 = vadd.f32 %v2499, %v3125
    %v3127 = vpop.f32.mrb[0].mxu0
    %3128 = vmatprep.mubr.f32.mxu0 0.0
    %3129 = vmatmul.mubr.f32.gmra.mrb[0].mxu0 %v2453
    %v3130 = vpop.f32.mrb[0].mxu0
    %v3131 = vadd.f32 %v2504, %v3130
    %v3132 = vpop.f32.mrb[0].mxu0
    %3133 = vmatprep.mubr.f32.mxu0 0.0
    %3134 = vmatmul.mubr.f32.gmra.mrb[0].mxu0 %v2454
    %v3135 = vpop.f32.mrb[0].mxu0
    %v3136 = vadd.f32 %v2509, %v3135
    %v3137 = vpop.f32.mrb[0].mxu0
    %3138 = vmatprep.mubr.f32.mxu0 0.0
    %3139 = vmatmul.mubr.f32.gmra.mrb[0].mxu0 %v2455
    %v3140 = vpop.f32.mrb[0].mxu0
    %v3141 = vadd.f32 %v2514, %v3140
    %v3142 = vpop.f32.mrb[0].mxu0
    %3143 = vmatprep.mubr.f32.mxu0 0.0
    %3144 = vmatmul.mubr.f32.gmra.mrb[0].mxu0 %v2456
    %v3145 = vpop.f32.mrb[0].mxu0
    %v3146 = vadd.f32 %v2519, %v3145
    %v3147 = vpop.f32.mrb[0].mxu0
    %3148 = vmatprep.mubr.f32.mxu0 0.0
    %3149 = vmatmul.mubr.f32.gmra.mrb[0].mxu0 %v2457
    %v3150 = vpop.f32.mrb[0].mxu0
    %v3151 = vadd.f32 %v2524, %v3150
    %v3152 = vpop.f32.mrb[0].mxu0
    %3153 = vmatprep.mubr.f32.mxu0 0.0
    %3154 = vmatmul.mubr.f32.gmra.mrb[0].mxu0 %v2458
    %v3155 = vpop.f32.mrb[0].mxu0
    %v3156 = vadd.f32 %v2529, %v3155
    %v3157 = vpop.f32.mrb[0].mxu0
    %3158 = vmatprep.mubr.f32.mxu0 0.0
    %3159 = vmatmul.mubr.f32.gmra.mrb[0].mxu0 %v2459
    %v3160 = vpop.f32.mrb[0].mxu0
    %v3161 = vadd.f32 %v2534, %v3160
    %v3162 = vpop.f32.mrb[0].mxu0
    %3163 = vmatprep.mubr.f32.mxu0 0.0
    %3164 = vmatmul.mubr.f32.gmra.mrb[0].mxu0 %v2460
    %v3165 = vpop.f32.mrb[0].mxu0
    %v3166 = vadd.f32 %v2539, %v3165
    %v3167 = vpop.f32.mrb[0].mxu0
    %3168 = vmatprep.mubr.f32.mxu0 0.0
    %3169 = vmatmul.mubr.f32.gmra.mrb[0].mxu0 %v2461
    %v3170 = vpop.f32.mrb[0].mxu0
    %v3171 = vadd.f32 %v2544, %v3170
    %v3172 = vpop.f32.mrb[0].mxu0
    %3173 = vmatprep.mubr.f32.mxu0 0.0
    %3174 = vmatmul.mubr.f32.gmra.mrb[0].mxu0 %v2462
    %v3175 = vpop.f32.mrb[0].mxu0
    %v3176 = vadd.f32 %v2549, %v3175
    %v3177 = vpop.f32.mrb[0].mxu0
    %3178 = vmatprep.mubr.f32.mxu0 0.0
    %3179 = vmatmul.mubr.f32.gmra.mrb[0].mxu0 %v2463
    %v3180 = vpop.f32.mrb[0].mxu0
    %v3181 = vadd.f32 %v2554, %v3180
    %v3182 = vpop.f32.mrb[0].mxu0
    %3183 = vmatprep.mubr.f32.mxu0 0.0
    %3184 = vmatmul.mubr.f32.gmra.mrb[0].mxu0 %v2464
    %v3185 = vpop.f32.mrb[0].mxu0
    %v3186 = vadd.f32 %v2559, %v3185
    %v3187 = vpop.f32.mrb[0].mxu0
    %3188 = vdwg.mxu0
    %v3189 = vmax.f32 %v2628, 0.0
    %v3190 = vmax.f32 %v2630, 0.0
    %v3191 = vmax.f32 %v2789, 0.0
    %v3192 = vmax.f32 %v2791, 0.0
    %v3193 = vmax.f32 %v2950, 0.0
    %v3194 = vmax.f32 %v2952, 0.0
    %v3195 = vmax.f32 %v3111, 0.0
    %v3196 = vmax.f32 %v2634, 0.0
    %v3197 = vmax.f32 %v2636, 0.0
    %v3198 = vmax.f32 %v2795, 0.0
    %v3199 = vmax.f32 %v2797, 0.0
    %v3200 = vmax.f32 %v2956, 0.0
    %v3201 = vmax.f32 %v2958, 0.0
    %v3202 = vmax.f32 %v3116, 0.0
    %v3203 = vmax.f32 %v2640, 0.0
    %v3204 = vmax.f32 %v2642, 0.0
    %v3205 = vmax.f32 %v2801, 0.0
    %v3206 = vmax.f32 %v2803, 0.0
    %v3207 = vmax.f32 %v2962, 0.0
    %v3208 = vmax.f32 %v2964, 0.0
    %v3209 = vmax.f32 %v3121, 0.0
    %v3210 = vmax.f32 %v2646, 0.0
    %v3211 = vmax.f32 %v2648, 0.0
    %v3212 = vmax.f32 %v2807, 0.0
    %v3213 = vmax.f32 %v2809, 0.0
    %v3214 = vmax.f32 %v2968, 0.0
    %v3215 = vmax.f32 %v2970, 0.0
    %v3216 = vmax.f32 %v3126, 0.0
    %v3217 = vmax.f32 %v2652, 0.0
    %v3218 = vmax.f32 %v2654, 0.0
    %v3219 = vmax.f32 %v2813, 0.0
    %v3220 = vmax.f32 %v2815, 0.0
    %v3221 = vmax.f32 %v2974, 0.0
    %v3222 = vmax.f32 %v2976, 0.0
    %v3223 = vmax.f32 %v3131, 0.0
    %v3224 = vmax.f32 %v2658, 0.0
    %v3225 = vmax.f32 %v2660, 0.0
    %v3226 = vmax.f32 %v2819, 0.0
    %v3227 = vmax.f32 %v2821, 0.0
    %v3228 = vmax.f32 %v2980, 0.0
    %v3229 = vmax.f32 %v2982, 0.0
    %v3230 = vmax.f32 %v3136, 0.0
    %v3231 = vmax.f32 %v2664, 0.0
    %v3232 = vmax.f32 %v2666, 0.0
    %v3233 = vmax.f32 %v2825, 0.0
    %v3234 = vmax.f32 %v2827, 0.0
    %v3235 = vmax.f32 %v2986, 0.0
    %v3236 = vmax.f32 %v2988, 0.0
    %v3237 = vmax.f32 %v3141, 0.0
    %v3238 = vmax.f32 %v2670, 0.0
    %v3239 = vmax.f32 %v2672, 0.0
    %v3240 = vmax.f32 %v2831, 0.0
    %v3241 = vmax.f32 %v2833, 0.0
    %v3242 = vmax.f32 %v2992, 0.0
    %v3243 = vmax.f32 %v2994, 0.0
    %v3244 = vmax.f32 %v3146, 0.0
    %v3245 = vmax.f32 %v2676, 0.0
    %v3246 = vmax.f32 %v2678, 0.0
    %v3247 = vmax.f32 %v2837, 0.0
    %v3248 = vmax.f32 %v2839, 0.0
    %v3249 = vmax.f32 %v2998, 0.0
    %v3250 = vmax.f32 %v3000, 0.0
    %v3251 = vmax.f32 %v3151, 0.0
    %v3252 = vmax.f32 %v2682, 0.0
    %v3253 = vmax.f32 %v2684, 0.0
    %v3254 = vmax.f32 %v2843, 0.0
    %v3255 = vmax.f32 %v2845, 0.0
    %v3256 = vmax.f32 %v3004, 0.0
    %v3257 = vmax.f32 %v3006, 0.0
    %v3258 = vmax.f32 %v3156, 0.0
    %v3259 = vmax.f32 %v2688, 0.0
    %v3260 = vmax.f32 %v2690, 0.0
    %v3261 = vmax.f32 %v2849, 0.0
    %v3262 = vmax.f32 %v2851, 0.0
    %v3263 = vmax.f32 %v3010, 0.0
    %v3264 = vmax.f32 %v3012, 0.0
    %v3265 = vmax.f32 %v3161, 0.0
    %v3266 = vmax.f32 %v2694, 0.0
    %v3267 = vmax.f32 %v2696, 0.0
    %v3268 = vmax.f32 %v2855, 0.0
    %v3269 = vmax.f32 %v2857, 0.0
    %v3270 = vmax.f32 %v3016, 0.0
    %v3271 = vmax.f32 %v3018, 0.0
    %v3272 = vmax.f32 %v3166, 0.0
    %v3273 = vmax.f32 %v2700, 0.0
    %v3274 = vmax.f32 %v2702, 0.0
    %v3275 = vmax.f32 %v2861, 0.0
    %v3276 = vmax.f32 %v2863, 0.0
    %v3277 = vmax.f32 %v3022, 0.0
    %v3278 = vmax.f32 %v3024, 0.0
    %v3279 = vmax.f32 %v3171, 0.0
    %v3280 = vmax.f32 %v2706, 0.0
    %v3281 = vmax.f32 %v2708, 0.0
    %v3282 = vmax.f32 %v2867, 0.0
    %v3283 = vmax.f32 %v2869, 0.0
    %v3284 = vmax.f32 %v3028, 0.0
    %v3285 = vmax.f32 %v3030, 0.0
    %v3286 = vmax.f32 %v3176, 0.0
    %v3287 = vmax.f32 %v2712, 0.0
    %v3288 = vmax.f32 %v2714, 0.0
    %v3289 = vmax.f32 %v2873, 0.0
    %v3290 = vmax.f32 %v2875, 0.0
    %v3291 = vmax.f32 %v3034, 0.0
    %v3292 = vmax.f32 %v3036, 0.0
    %v3293 = vmax.f32 %v3181, 0.0
    %v3294 = vmax.f32 %v2718, 0.0
    %v3295 = vmax.f32 %v2720, 0.0
    %v3296 = vmax.f32 %v2879, 0.0
    %v3297 = vmax.f32 %v2881, 0.0
    %v3298 = vmax.f32 %v3040, 0.0
    %v3299 = vmax.f32 %v3042, 0.0
    %v3300 = vmax.f32 %v3186, 0.0
    %v3301 = vld [vmem:[%s7] sm:$0xff]
    %v3302 = vld [vmem:[%s8] sm:$0xff]
    %3304 = vset.pattern.permute.xlu0 0
    %3305 = vperm.xlu0 %3304, %v3302
    %v3306 = vpop.permute.xlu0 %3305
    %3308 = vmatprep.subr.mxu0 %v3190
    %3309 = vmatpush1.msra.mxu0 %v3189
    %3310 = vmatprep.subr.mxu0 %v3197
    %3311 = vmatpush1.msra.mxu0 %v3196
    %3312 = vmatprep.subr.mxu0 %v3204
    %3313 = vmatpush1.msra.mxu0 %v3203
    %3314 = vmatprep.subr.mxu0 %v3211
    %3315 = vmatpush1.msra.mxu0 %v3210
    %3316 = vmatprep.subr.mxu0 %v3218
    %3317 = vmatpush1.msra.mxu0 %v3217
    %3318 = vmatprep.subr.mxu0 %v3225
    %3319 = vmatpush1.msra.mxu0 %v3224
    %3320 = vmatprep.subr.mxu0 %v3232
    %3321 = vmatpush1.msra.mxu0 %v3231
    %3322 = vmatprep.subr.mxu0 %v3239
    %3323 = vmatpush1.msra.mxu0 %v3238
    %3324 = vmatprep.subr.mxu0 %v3246
    %3325 = vmatpush1.msra.mxu0 %v3245
    %3326 = vmatprep.subr.mxu0 %v3253
    %3327 = vmatpush1.msra.mxu0 %v3252
    %3328 = vmatprep.subr.mxu0 %v3260
    %3329 = vmatpush1.msra.mxu0 %v3259
    %3330 = vmatprep.subr.mxu0 %v3267
    %3331 = vmatpush1.msra.mxu0 %v3266
    %3332 = vmatprep.subr.mxu0 %v3274
    %3333 = vmatpush1.msra.mxu0 %v3273
    %3334 = vmatprep.subr.mxu0 %v3281
    %3335 = vmatpush1.msra.mxu0 %v3280
    %3336 = vmatprep.subr.mxu0 %v3288
    %3337 = vmatpush1.msra.mxu0 %v3287
    %3338 = vmatprep.subr.mxu0 %v3295
    %3339 = vmatpush1.msra.mxu0 %v3294
    %3340 = vmatprep.subr.mxu0 0.0
    %3341 = vmatpush1.msra.mxu0 0.0
    %3342 = vmatprep.subr.mxu0 0.0
    %3343 = vmatpush1.msra.mxu0 0.0
    %3344 = vmatprep.subr.mxu0 0.0
    %3345 = vmatpush1.msra.mxu0 0.0
    %3346 = vmatprep.subr.mxu0 0.0
    %3347 = vmatpush1.msra.mxu0 0.0
    %3348 = vmatprep.subr.mxu0 0.0
    %3349 = vmatpush1.msra.mxu0 0.0
    %3350 = vmatprep.subr.mxu0 0.0
    %3351 = vmatpush1.msra.mxu0 0.0
    %3352 = vmatprep.subr.mxu0 0.0
    %3353 = vmatpush1.msra.mxu0 0.0
    %3354 = vmatprep.subr.mxu0 0.0
    %3355 = vmatpush1.msra.mxu0 0.0
    %3356 = vmatprep.subr.mxu0 0.0
    %3357 = vmatpush1.msra.mxu0 0.0
    %3358 = vmatprep.subr.mxu0 0.0
    %3359 = vmatpush1.msra.mxu0 0.0
    %3360 = vmatprep.subr.mxu0 0.0
    %3361 = vmatpush1.msra.mxu0 0.0
    %3362 = vmatprep.subr.mxu0 0.0
    %3363 = vmatpush1.msra.mxu0 0.0
    %3364 = vmatprep.subr.mxu0 0.0
    %3365 = vmatpush1.msra.mxu0 0.0
    %3366 = vmatprep.subr.mxu0 0.0
    %3367 = vmatpush1.msra.mxu0 0.0
    %3368 = vmatprep.subr.mxu0 0.0
    %3369 = vmatpush1.msra.mxu0 0.0
    %3370 = vmatprep.subr.mxu0 0.0
    %3371 = vmatpush1.msra.mxu0 0.0
    %3372 = vmatprep.mubr.f32.mxu0 0.0
    %3373 = vmatmul.mubr.f32.gmra.mrb[0].mxu0 %v3301
    %v3374 = vpop.f32.mrb[0].mxu0
    %v3375 = vadd.f32 %v3306, %v3374
    %v3376 = vpop.f32.mrb[0].mxu0
    %v3377 = vadd.f32 %v3306, %v3376
    %3378 = vdwg.mxu0
    %3379 = vmatprep.subr.mxu0 %v3192
    %3380 = vmatpush1.msra.mxu0 %v3191
    %3381 = vmatprep.subr.mxu0 %v3199
    %3382 = vmatpush1.msra.mxu0 %v3198
    %3383 = vmatprep.subr.mxu0 %v3206
    %3384 = vmatpush1.msra.mxu0 %v3205
    %3385 = vmatprep.subr.mxu0 %v3213
    %3386 = vmatpush1.msra.mxu0 %v3212
    %3387 = vmatprep.subr.mxu0 %v3220
    %3388 = vmatpush1.msra.mxu0 %v3219
    %3389 = vmatprep.subr.mxu0 %v3227
    %3390 = vmatpush1.msra.mxu0 %v3226
    %3391 = vmatprep.subr.mxu0 %v3234
    %3392 = vmatpush1.msra.mxu0 %v3233
    %3393 = vmatprep.subr.mxu0 %v3241
    %3394 = vmatpush1.msra.mxu0 %v3240
    %3395 = vmatprep.subr.mxu0 %v3248
    %3396 = vmatpush1.msra.mxu0 %v3247
    %3397 = vmatprep.subr.mxu0 %v3255
    %3398 = vmatpush1.msra.mxu0 %v3254
    %3399 = vmatprep.subr.mxu0 %v3262
    %3400 = vmatpush1.msra.mxu0 %v3261
    %3401 = vmatprep.subr.mxu0 %v3269
    %3402 = vmatpush1.msra.mxu0 %v3268
    %3403 = vmatprep.subr.mxu0 %v3276
    %3404 = vmatpush1.msra.mxu0 %v3275
    %3405 = vmatprep.subr.mxu0 %v3283
    %3406 = vmatpush1.msra.mxu0 %v3282
    %3407 = vmatprep.subr.mxu0 %v3290
    %3408 = vmatpush1.msra.mxu0 %v3289
    %3409 = vmatprep.subr.mxu0 %v3297
    %3410 = vmatpush1.msra.mxu0 %v3296
    %3411 = vmatprep.subr.mxu0 0.0
    %3412 = vmatpush1.msra.mxu0 0.0
    %3413 = vmatprep.subr.mxu0 0.0
    %3414 = vmatpush1.msra.mxu0 0.0
    %3415 = vmatprep.subr.mxu0 0.0
    %3416 = vmatpush1.msra.mxu0 0.0
    %3417 = vmatprep.subr.mxu0 0.0
    %3418 = vmatpush1.msra.mxu0 0.0
    %3419 = vmatprep.subr.mxu0 0.0
    %3420 = vmatpush1.msra.mxu0 0.0
    %3421 = vmatprep.subr.mxu0 0.0
    %3422 = vmatpush1.msra.mxu0 0.0
    %3423 = vmatprep.subr.mxu0 0.0
    %3424 = vmatpush1.msra.mxu0 0.0
    %3425 = vmatprep.subr.mxu0 0.0
    %3426 = vmatpush1.msra.mxu0 0.0
    %3427 = vmatprep.subr.mxu0 0.0
    %3428 = vmatpush1.msra.mxu0 0.0
    %3429 = vmatprep.subr.mxu0 0.0
    %3430 = vmatpush1.msra.mxu0 0.0
    %3431 = vmatprep.subr.mxu0 0.0
    %3432 = vmatpush1.msra.mxu0 0.0
    %3433 = vmatprep.subr.mxu0 0.0
    %3434 = vmatpush1.msra.mxu0 0.0
    %3435 = vmatprep.subr.mxu0 0.0
    %3436 = vmatpush1.msra.mxu0 0.0
    %3437 = vmatprep.subr.mxu0 0.0
    %3438 = vmatpush1.msra.mxu0 0.0
    %3439 = vmatprep.subr.mxu0 0.0
    %3440 = vmatpush1.msra.mxu0 0.0
    %3441 = vmatprep.subr.mxu0 0.0
    %3442 = vmatpush1.msra.mxu0 0.0
    %3443 = vmatprep.mubr.f32.mxu0 0.0
    %3444 = vmatmul.mubr.f32.gmra.mrb[0].mxu0 %v3301
    %v3445 = vpop.f32.mrb[0].mxu0
    %v3446 = vadd.f32 %v3306, %v3445
    %v3447 = vpop.f32.mrb[0].mxu0
    %v3448 = vadd.f32 %v3306, %v3447
    %3449 = vdwg.mxu0
    %3450 = vmatprep.subr.mxu0 %v3194
    %3451 = vmatpush1.msra.mxu0 %v3193
    %3452 = vmatprep.subr.mxu0 %v3201
    %3453 = vmatpush1.msra.mxu0 %v3200
    %3454 = vmatprep.subr.mxu0 %v3208
    %3455 = vmatpush1.msra.mxu0 %v3207
    %3456 = vmatprep.subr.mxu0 %v3215
    %3457 = vmatpush1.msra.mxu0 %v3214
    %3458 = vmatprep.subr.mxu0 %v3222
    %3459 = vmatpush1.msra.mxu0 %v3221
    %3460 = vmatprep.subr.mxu0 %v3229
    %3461 = vmatpush1.msra.mxu0 %v3228
    %3462 = vmatprep.subr.mxu0 %v3236
    %3463 = vmatpush1.msra.mxu0 %v3235
    %3464 = vmatprep.subr.mxu0 %v3243
    %3465 = vmatpush1.msra.mxu0 %v3242
    %3466 = vmatprep.subr.mxu0 %v3250
    %3467 = vmatpush1.msra.mxu0 %v3249
    %3468 = vmatprep.subr.mxu0 %v3257
    %3469 = vmatpush1.msra.mxu0 %v3256
    %3470 = vmatprep.subr.mxu0 %v3264
    %3471 = vmatpush1.msra.mxu0 %v3263
    %3472 = vmatprep.subr.mxu0 %v3271
    %3473 = vmatpush1.msra.mxu0 %v3270
    %3474 = vmatprep.subr.mxu0 %v3278
    %3475 = vmatpush1.msra.mxu0 %v3277
    %3476 = vmatprep.subr.mxu0 %v3285
    %3477 = vmatpush1.msra.mxu0 %v3284
    %3478 = vmatprep.subr.mxu0 %v3292
    %3479 = vmatpush1.msra.mxu0 %v3291
    %3480 = vmatprep.subr.mxu0 %v3299
    %3481 = vmatpush1.msra.mxu0 %v3298
    %3482 = vmatprep.subr.mxu0 0.0
    %3483 = vmatpush1.msra.mxu0 0.0
    %3484 = vmatprep.subr.mxu0 0.0
    %3485 = vmatpush1.msra.mxu0 0.0
    %3486 = vmatprep.subr.mxu0 0.0
    %3487 = vmatpush1.msra.mxu0 0.0
    %3488 = vmatprep.subr.mxu0 0.0
    %3489 = vmatpush1.msra.mxu0 0.0
    %3490 = vmatprep.subr.mxu0 0.0
    %3491 = vmatpush1.msra.mxu0 0.0
    %3492 = vmatprep.subr.mxu0 0.0
    %3493 = vmatpush1.msra.mxu0 0.0
    %3494 = vmatprep.subr.mxu0 0.0
    %3495 = vmatpush1.msra.mxu0 0.0
    %3496 = vmatprep.subr.mxu0 0.0
    %3497 = vmatpush1.msra.mxu0 0.0
    %3498 = vmatprep.subr.mxu0 0.0
    %3499 = vmatpush1.msra.mxu0 0.0
    %3500 = vmatprep.subr.mxu0 0.0
    %3501 = vmatpush1.msra.mxu0 0.0
    %3502 = vmatprep.subr.mxu0 0.0
    %3503 = vmatpush1.msra.mxu0 0.0
    %3504 = vmatprep.subr.mxu0 0.0
    %3505 = vmatpush1.msra.mxu0 0.0
    %3506 = vmatprep.subr.mxu0 0.0
    %3507 = vmatpush1.msra.mxu0 0.0
    %3508 = vmatprep.subr.mxu0 0.0
    %3509 = vmatpush1.msra.mxu0 0.0
    %3510 = vmatprep.subr.mxu0 0.0
    %3511 = vmatpush1.msra.mxu0 0.0
    %3512 = vmatprep.subr.mxu0 0.0
    %3513 = vmatpush1.msra.mxu0 0.0
    %3514 = vmatprep.mubr.f32.mxu0 0.0
    %3515 = vmatmul.mubr.f32.gmra.mrb[0].mxu0 %v3301
    %v3516 = vpop.f32.mrb[0].mxu0
    %v3517 = vadd.f32 %v3306, %v3516
    %v3518 = vpop.f32.mrb[0].mxu0
    %v3519 = vadd.f32 %v3306, %v3518
    %3520 = vdwg.mxu0
    %3521 = vmatprep.subr.mxu0 0.0
    %3522 = vmatpush1.msra.mxu0 %v3195
    %3523 = vmatprep.subr.mxu0 0.0
    %3524 = vmatpush1.msra.mxu0 %v3202
    %3525 = vmatprep.subr.mxu0 0.0
    %3526 = vmatpush1.msra.mxu0 %v3209
    %3527 = vmatprep.subr.mxu0 0.0
    %3528 = vmatpush1.msra.mxu0 %v3216
    %3529 = vmatprep.subr.mxu0 0.0
    %3530 = vmatpush1.msra.mxu0 %v3223
    %3531 = vmatprep.subr.mxu0 0.0
    %3532 = vmatpush1.msra.mxu0 %v3230
    %3533 = vmatprep.subr.mxu0 0.0
    %3534 = vmatpush1.msra.mxu0 %v3237
    %3535 = vmatprep.subr.mxu0 0.0
    %3536 = vmatpush1.msra.mxu0 %v3244
    %3537 = vmatprep.subr.mxu0 0.0
    %3538 = vmatpush1.msra.mxu0 %v3251
    %3539 = vmatprep.subr.mxu0 0.0
    %3540 = vmatpush1.msra.mxu0 %v3258
    %3541 = vmatprep.subr.mxu0 0.0
    %3542 = vmatpush1.msra.mxu0 %v3265
    %3543 = vmatprep.subr.mxu0 0.0
    %3544 = vmatpush1.msra.mxu0 %v3272
    %3545 = vmatprep.subr.mxu0 0.0
    %3546 = vmatpush1.msra.mxu0 %v3279
    %3547 = vmatprep.subr.mxu0 0.0
    %3548 = vmatpush1.msra.mxu0 %v3286
    %3549 = vmatprep.subr.mxu0 0.0
    %3550 = vmatpush1.msra.mxu0 %v3293
    %3551 = vmatprep.subr.mxu0 0.0
    %3552 = vmatpush1.msra.mxu0 %v3300
    %3553 = vmatprep.subr.mxu0 0.0
    %3554 = vmatpush1.msra.mxu0 0.0
    %3555 = vmatprep.subr.mxu0 0.0
    %3556 = vmatpush1.msra.mxu0 0.0
    %3557 = vmatprep.subr.mxu0 0.0
    %3558 = vmatpush1.msra.mxu0 0.0
    %3559 = vmatprep.subr.mxu0 0.0
    %3560 = vmatpush1.msra.mxu0 0.0
    %3561 = vmatprep.subr.mxu0 0.0
    %3562 = vmatpush1.msra.mxu0 0.0
    %3563 = vmatprep.subr.mxu0 0.0
    %3564 = vmatpush1.msra.mxu0 0.0
    %3565 = vmatprep.subr.mxu0 0.0
    %3566 = vmatpush1.msra.mxu0 0.0
    %3567 = vmatprep.subr.mxu0 0.0
    %3568 = vmatpush1.msra.mxu0 0.0
    %3569 = vmatprep.subr.mxu0 0.0
    %3570 = vmatpush1.msra.mxu0 0.0
    %3571 = vmatprep.subr.mxu0 0.0
    %3572 = vmatpush1.msra.mxu0 0.0
    %3573 = vmatprep.subr.mxu0 0.0
    %3574 = vmatpush1.msra.mxu0 0.0
    %3575 = vmatprep.subr.mxu0 0.0
    %3576 = vmatpush1.msra.mxu0 0.0
    %3577 = vmatprep.subr.mxu0 0.0
    %3578 = vmatpush1.msra.mxu0 0.0
    %3579 = vmatprep.subr.mxu0 0.0
    %3580 = vmatpush1.msra.mxu0 0.0
    %3581 = vmatprep.subr.mxu0 0.0
    %3582 = vmatpush1.msra.mxu0 0.0
    %3583 = vmatprep.subr.mxu0 0.0
    %3584 = vmatpush1.msra.mxu0 0.0
    %3585 = vmatprep.mubr.f32.mxu0 0.0
    %3586 = vmatmul.mubr.f32.gmra.mrb[0].mxu0 %v3301
    %v3587 = vpop.f32.mrb[0].mxu0
    %v3588 = vadd.f32 %v3306, %v3587
    %v3589 = vpop.f32.mrb[0].mxu0
    %3590 = vdwg.mxu0
    %v3591 = vsub.f32 0.0, %v3375
    %v3592 = vsub.f32 0.0, %v3377
    %v3593 = vsub.f32 0.0, %v3446
    %v3594 = vsub.f32 0.0, %v3448
    %v3595 = vsub.f32 0.0, %v3517
    %v3596 = vsub.f32 0.0, %v3519
    %v3597 = vsub.f32 0.0, %v3588
    %v3598 = vmul.f32 %v3591, 1.442695
    %v3599 = vpow.pop %v3598
    %v3600 = vmul.f32 %v3592, 1.442695
    %v3601 = vpow.pop %v3600
    %v3602 = vmul.f32 %v3593, 1.442695
    %v3603 = vpow.pop %v3602
    %v3604 = vmul.f32 %v3594, 1.442695
    %v3605 = vpow.pop %v3604
    %v3606 = vmul.f32 %v3595, 1.442695
    %v3607 = vpow.pop %v3606
    %v3608 = vmul.f32 %v3596, 1.442695
    %v3609 = vpow.pop %v3608
    %v3610 = vmul.f32 %v3597, 1.442695
    %v3611 = vpow.pop %v3610
    %v3612 = vadd.f32 %v3599, 1.0
    %v3613 = vadd.f32 %v3601, 1.0
    %v3614 = vadd.f32 %v3603, 1.0
    %v3615 = vadd.f32 %v3605, 1.0
    %v3616 = vadd.f32 %v3607, 1.0
    %v3617 = vadd.f32 %v3609, 1.0
    %v3618 = vadd.f32 %v3611, 1.0
    %v3619 = vrcp.pop %v3612
    %v3620 = vrcp.pop %v3613
    %v3621 = vrcp.pop %v3614
    %v3622 = vrcp.pop %v3615
    %v3623 = vrcp.pop %v3616
    %v3624 = vrcp.pop %v3617
    %v3625 = vrcp.pop %v3618
    %3626 = vst [vmem:[#allocation2] sm:$0xff] %v3619
    %3627 = vst [vmem:[#allocation2 + $0x8] sm:$0xff] %v3620
    %3628 = vst [vmem:[#allocation2 + $0x10] sm:$0xff] %v3621
    %3629 = vst [vmem:[#allocation2 + $0x18] sm:$0xff] %v3622
    %3630 = vst [vmem:[#allocation2 + $0x20] sm:$0xff] %v3623
    %3631 = vst [vmem:[#allocation2 + $0x28] sm:$0xff] %v3624
    %3632 = vst [vmem:[#allocation2 + $0x30] sm:$0xff] %v3625
    // Predicated region
    $region38: #{tpu_custom_call.1} parent=1 // pred_check
      _
    $region39: #{tpu_custom_call.1} parent=1 // pred_check_branch
      %3634 = sbr.rel (0) target = $region41
    $region40: #{tpu_custom_call.1} parent=1 // pred_region
      %s3636 = ssub.s32 896, 896
      %3637 = vsyncadd [#allocation3], %s3636
      %s3639 = sshll.u32 [#allocation2], 4
      %s3640 = int_to_ptr.vmem [resolvable:$true] %s3639
      %3642 = dma.vmem_to_hbm [thread:$0]  %s3640, 896, %s9, [#allocation3]
    $region41: #{tpu_custom_call.1} parent=1 // pred_fallthru
      _
    // Predicated region
    $region42: #{tpu_custom_call.1} parent=1 // pred_check
      _
    $region43: #{tpu_custom_call.1} parent=1 // pred_check_branch
      %3644 = sbr.rel (0) target = $region45
    $region44: #{tpu_custom_call.1} parent=1 // pred_region
      %3645 = dma.done [#allocation3], 896
    $region45: #{tpu_custom_call.1} parent=1 // pred_fallthru
      _
    %3646 = vsyncpa [#allocation3], 1

</llo_original>
